<compile_context>
chip_gen: v6e
topology: v6e:2x2x1
jax: 0.10.0
libtpu: 0.0.40
codegen_flags: <defaults>
</compile_context>

<pallas_src>
import jax
import jax.numpy as jnp
from jax.experimental import pallas as pl
from jax.experimental.pallas import tpu as pltpu

LAYER_DIMS = (512, 384, 256, 256, 64)


def _round_up(x, m):
    return (x + m - 1) // m * m


# ----------------------------------------------------------------------------
# Kernel: full MLP forward for one batch tile (TM, F_pad) -> (TM, output_dim)
# bf16 operands feed the MXU; accumulation and bias-add stay f32.
# ----------------------------------------------------------------------------
def dqn_mlp_kernel(x_ref,
                   w1_ref, b1_ref,
                   w2_ref, b2_ref,
                   w3_ref, b3_ref,
                   w4_ref, b4_ref,
                   w5_ref, b5_ref,
                   w6_ref, b6_ref,
                   out_ref):
    def linear(h, w_ref, b_ref):
        return jnp.dot(h, w_ref[...],
                       preferred_element_type=jnp.float32) + b_ref[...]

    def relu_bf16(y):
        return jnp.maximum(y, 0.0).astype(jnp.bfloat16)

    h = x_ref[...].astype(jnp.bfloat16)
    h = relu_bf16(linear(h, w1_ref, b1_ref))   # F_pad -> 512
    h = relu_bf16(linear(h, w2_ref, b2_ref))   # 512   -> 384
    h = relu_bf16(linear(h, w3_ref, b3_ref))   # 384   -> 256
    h = relu_bf16(linear(h, w4_ref, b4_ref))   # 256   -> 256
    h = relu_bf16(linear(h, w5_ref, b5_ref))   # 256   -> 64
    out_ref[...] = linear(h, w6_ref, b6_ref)   # 64    -> out_dim (no ReLU)


# ----------------------------------------------------------------------------
# pallas_call wrapper: batch-tiled grid, VMEM-resident weights.
# ----------------------------------------------------------------------------
def dqn_forward(combined, params, *, tm=256):
    """combined: (B, F_pad) float32; params: list of (W bf16 (in,out), b f32 (1,out))."""
    B, F = combined.shape
    out_dim = params[-1][0].shape[1]
    assert F == params[0][0].shape[0], (F, params[0][0].shape)

    # Batch tile: at least 8 rows (f32 sublane tile), at most `tm` (full MXU pass).
    tm_eff = min(tm, _round_up(B, 8))
    b_pad = _round_up(B, tm_eff)
    if b_pad != B:
        combined = jnp.pad(combined, ((0, b_pad - B), (0, 0)))

    flat_args = [combined]
    for w, b in params:
        flat_args.extend((w, b))

    # x / out tiled over the batch grid; weights & biases use a constant
    # index_map so they are fetched once and stay resident across grid steps.
    in_specs = [pl.BlockSpec((tm_eff, F), lambda i: (i, 0))]
    for w, b in params:
        in_specs.append(pl.BlockSpec(w.shape, lambda i: (0, 0)))
        in_specs.append(pl.BlockSpec(b.shape, lambda i: (0, 0)))
    out_specs = pl.BlockSpec((tm_eff, out_dim), lambda i: (i, 0))

    flops = 2 * b_pad * sum(w.shape[0] * w.shape[1] for w, _ in params)
    bytes_accessed = (combined.size * combined.dtype.itemsize
                      + sum(w.size * w.dtype.itemsize + b.size * b.dtype.itemsize
                            for w, b in params)
                      + b_pad * out_dim * 4)

    out = pl.pallas_call(
        dqn_mlp_kernel,
        out_shape=jax.ShapeDtypeStruct((b_pad, out_dim), jnp.float32),
        grid=(b_pad // tm_eff,),
        in_specs=in_specs,
        out_specs=out_specs,
        compiler_params=pltpu.CompilerParams(
            dimension_semantics=("parallel",)),
        cost_estimate=pl.CostEstimate(flops=flops, transcendentals=0,
                                      bytes_accessed=bytes_accessed),
    )(*flat_args)
    return out[:B]


# ----------------------------------------------------------------------------
# Parameter init (matches nn.Linear default init; weights stored transposed
# as (in, out), layer-1 input dim zero-padded to a multiple of 128, bf16).
# ----------------------------------------------------------------------------
def init_params(key, total_input, output_dim, *, weight_dtype=jnp.bfloat16):
    dims = [total_input] + list(LAYER_DIMS) + [output_dim]
    in_pad = _round_up(total_input, 128)
    params = []
    for i in range(len(dims) - 1):
        key, kw, kb = jax.random.split(key, 3)
        bound = 1.0 / (dims[i] ** 0.5)
        w = jax.random.uniform(kw, (dims[i], dims[i + 1]), jnp.float32,
                               minval=-bound, maxval=bound)
        b = jax.random.uniform(kb, (1, dims[i + 1]), jnp.float32,
                               minval=-bound, maxval=bound)
        if i == 0 and in_pad != dims[0]:
            w = jnp.pad(w, ((0, in_pad - dims[0]), (0, 0)))  # zero rows: no-op
        params.append((w.astype(weight_dtype), b))
    return params


def dqn_network(x_map, x_tanks, x_bullets, params, *, tm=256):
    B = x_map.shape[0]
    # Same flattening order as torch .view(B, -1) + torch.cat(..., dim=1).
    combined = jnp.concatenate([x_map.reshape(B, -1),
                                x_tanks.reshape(B, -1),
                                x_bullets.reshape(B, -1)], axis=1)
    # Zero-pad features to layer-1's lane-aligned padded input dim.
    f_pad = params[0][0].shape[0]
    if f_pad != combined.shape[1]:
        combined = jnp.pad(combined, ((0, 0), (0, f_pad - combined.shape[1])))
    # TODO(synk): in a real RL loop, batch many env states per call and/or keep
    # weights VMEM-resident across calls (P10 cross-call prefetch) instead of
    # re-streaming ~1.9 MB of bf16 weights every forward.
    return dqn_forward(combined, params, tm=tm)


if __name__ == "__main__":
    key = jax.random.PRNGKey(0)

    # Small shapes consistent with the module's input dict.
    B = 2
    map_shape = (4, 16, 16)     # (C, H, W)
    tanks_shape = (2, 8)        # (num_tanks, features)
    bullets_shape = (8, 4)      # (num_bullets, features)
    output_dim = 8

    total_input = (4 * 16 * 16) + (2 * 8) + (8 * 4)   # 1072

    k1, k2, k3, k4 = jax.random.split(key, 4)
    x_map = jax.random.normal(k1, (B,) + map_shape, jnp.float32)
    x_tanks = jax.random.normal(k2, (B,) + tanks_shape, jnp.float32)
    x_bullets = jax.random.normal(k3, (B,) + bullets_shape, jnp.float32)

    params = init_params(k4, total_input, output_dim)

    out = jax.block_until_ready(dqn_network(x_map, x_tanks, x_bullets, params))
    assert out.shape == (B, output_dim), out.shape
    assert out.dtype == jnp.float32

    # Reference in plain JAX with the same bf16-weight / f32-accumulate path.
    combined = jnp.concatenate([x_map.reshape(B, -1),
                                x_tanks.reshape(B, -1),
                                x_bullets.reshape(B, -1)], axis=1)
    f_pad = params[0][0].shape[0]
    h = jnp.pad(combined, ((0, 0), (0, f_pad - combined.shape[1]))).astype(jnp.bfloat16)
    ref = None
    for i, (w, b) in enumerate(params):
        y = jnp.dot(h, w, preferred_element_type=jnp.float32) + b
        if i < len(params) - 1:
            h = jnp.maximum(y, 0.0).astype(jnp.bfloat16)
        else:
            ref = y
    assert jnp.allclose(out, ref, atol=2e-2, rtol=2e-2), \
        float(jnp.max(jnp.abs(out - ref)))

    print("KERNEL_OK")
</pallas_src>

<mosaic_0001>
module attributes {stable_mosaic.version = 11 : i64} {
  func.func @dqn_mlp_kernel(%arg0: i32, %arg1: memref<8x1152xf32, #tpu.memory_space<vmem>>, %arg2: memref<1152x512xbf16, #tpu.memory_space<vmem>>, %arg3: memref<1x512xf32, #tpu.memory_space<vmem>>, %arg4: memref<512x384xbf16, #tpu.memory_space<vmem>>, %arg5: memref<1x384xf32, #tpu.memory_space<vmem>>, %arg6: memref<384x256xbf16, #tpu.memory_space<vmem>>, %arg7: memref<1x256xf32, #tpu.memory_space<vmem>>, %arg8: memref<256x256xbf16, #tpu.memory_space<vmem>>, %arg9: memref<1x256xf32, #tpu.memory_space<vmem>>, %arg10: memref<256x64xbf16, #tpu.memory_space<vmem>>, %arg11: memref<1x64xf32, #tpu.memory_space<vmem>>, %arg12: memref<64x8xbf16, #tpu.memory_space<vmem>>, %arg13: memref<1x8xf32, #tpu.memory_space<vmem>>, %arg14: memref<8x8xf32, #tpu.memory_space<vmem>>) attributes {dimension_semantics = [#tpu.dimension_semantics<parallel>], iteration_bounds = array<i64: 1>, scalar_prefetch = 0 : i64, scratch_operands = 0 : i64, tpu.core_type = #tpu.core_type<tc>, window_params = [{transform_indices = @transform_0, window_bounds = array<i64: 8, 1152>}, {pipeline_mode = #tpu.pipeline_mode<synchronous>, transform_indices = @transform_1, window_bounds = array<i64: 1152, 512>}, {pipeline_mode = #tpu.pipeline_mode<synchronous>, transform_indices = @transform_2, window_bounds = array<i64: 1, 512>}, {pipeline_mode = #tpu.pipeline_mode<synchronous>, transform_indices = @transform_3, window_bounds = array<i64: 512, 384>}, {pipeline_mode = #tpu.pipeline_mode<synchronous>, transform_indices = @transform_4, window_bounds = array<i64: 1, 384>}, {pipeline_mode = #tpu.pipeline_mode<synchronous>, transform_indices = @transform_5, window_bounds = array<i64: 384, 256>}, {pipeline_mode = #tpu.pipeline_mode<synchronous>, transform_indices = @transform_6, window_bounds = array<i64: 1, 256>}, {pipeline_mode = #tpu.pipeline_mode<synchronous>, transform_indices = @transform_7, window_bounds = array<i64: 256, 256>}, {pipeline_mode = #tpu.pipeline_mode<synchronous>, transform_indices = @transform_8, window_bounds = array<i64: 1, 256>}, {pipeline_mode = #tpu.pipeline_mode<synchronous>, transform_indices = @transform_9, window_bounds = array<i64: 256, 64>}, {pipeline_mode = #tpu.pipeline_mode<synchronous>, transform_indices = @transform_10, window_bounds = array<i64: 1, 64>}, {pipeline_mode = #tpu.pipeline_mode<synchronous>, transform_indices = @transform_11, window_bounds = array<i64: 64, 8>}, {pipeline_mode = #tpu.pipeline_mode<synchronous>, transform_indices = @transform_12, window_bounds = array<i64: 1, 8>}, {transform_indices = @transform_13, window_bounds = array<i64: 8, 8>}]} {
    %c0 = arith.constant 0 : index
    %c0_0 = arith.constant 0 : index
    %0 = vector.load %arg1[%c0, %c0_0] : memref<8x1152xf32, #tpu.memory_space<vmem>>, vector<8x1152xf32>
    %1 = arith.truncf %0 : vector<8x1152xf32> to vector<8x1152xbf16>
    %c0_1 = arith.constant 0 : index
    %c0_2 = arith.constant 0 : index
    %2 = vector.load %arg2[%c0_1, %c0_2] : memref<1152x512xbf16, #tpu.memory_space<vmem>>, vector<1152x512xbf16>
    %cst = arith.constant dense<0.000000e+00> : vector<8x512xf32>
    %3 = tpu.matmul %1, %2, %cst {dimension_numbers = #tpu.dot_dimension_numbers<[1], [0], [0], [1], [0, 0, 1, 1], [], []>} : vector<8x1152xbf16>, vector<1152x512xbf16>, vector<8x512xf32> -> vector<8x512xf32>
    %c0_3 = arith.constant 0 : index
    %c0_4 = arith.constant 0 : index
    %4 = vector.load %arg3[%c0_3, %c0_4] : memref<1x512xf32, #tpu.memory_space<vmem>>, vector<1x512xf32>
    %5 = vector.broadcast %4 : vector<1x512xf32> to vector<8x512xf32>
    %6 = arith.addf %3, %5 : vector<8x512xf32>
    %cst_5 = arith.constant 0.000000e+00 : f32
    %7 = vector.broadcast %cst_5 : f32 to vector<8x512xf32>
    %8 = arith.maximumf %6, %7 : vector<8x512xf32>
    %9 = arith.truncf %8 : vector<8x512xf32> to vector<8x512xbf16>
    %c0_6 = arith.constant 0 : index
    %c0_7 = arith.constant 0 : index
    %10 = vector.load %arg4[%c0_6, %c0_7] : memref<512x384xbf16, #tpu.memory_space<vmem>>, vector<512x384xbf16>
    %cst_8 = arith.constant dense<0.000000e+00> : vector<8x384xf32>
    %11 = tpu.matmul %9, %10, %cst_8 {dimension_numbers = #tpu.dot_dimension_numbers<[1], [0], [0], [1], [0, 0, 1, 1], [], []>} : vector<8x512xbf16>, vector<512x384xbf16>, vector<8x384xf32> -> vector<8x384xf32>
    %c0_9 = arith.constant 0 : index
    %c0_10 = arith.constant 0 : index
    %12 = vector.load %arg5[%c0_9, %c0_10] : memref<1x384xf32, #tpu.memory_space<vmem>>, vector<1x384xf32>
    %13 = vector.broadcast %12 : vector<1x384xf32> to vector<8x384xf32>
    %14 = arith.addf %11, %13 : vector<8x384xf32>
    %cst_11 = arith.constant 0.000000e+00 : f32
    %15 = vector.broadcast %cst_11 : f32 to vector<8x384xf32>
    %16 = arith.maximumf %14, %15 : vector<8x384xf32>
    %17 = arith.truncf %16 : vector<8x384xf32> to vector<8x384xbf16>
    %c0_12 = arith.constant 0 : index
    %c0_13 = arith.constant 0 : index
    %18 = vector.load %arg6[%c0_12, %c0_13] : memref<384x256xbf16, #tpu.memory_space<vmem>>, vector<384x256xbf16>
    %cst_14 = arith.constant dense<0.000000e+00> : vector<8x256xf32>
    %19 = tpu.matmul %17, %18, %cst_14 {dimension_numbers = #tpu.dot_dimension_numbers<[1], [0], [0], [1], [0, 0, 1, 1], [], []>} : vector<8x384xbf16>, vector<384x256xbf16>, vector<8x256xf32> -> vector<8x256xf32>
    %c0_15 = arith.constant 0 : index
    %c0_16 = arith.constant 0 : index
    %20 = vector.load %arg7[%c0_15, %c0_16] : memref<1x256xf32, #tpu.memory_space<vmem>>, vector<1x256xf32>
    %21 = vector.broadcast %20 : vector<1x256xf32> to vector<8x256xf32>
    %22 = arith.addf %19, %21 : vector<8x256xf32>
    %cst_17 = arith.constant 0.000000e+00 : f32
    %23 = vector.broadcast %cst_17 : f32 to vector<8x256xf32>
    %24 = arith.maximumf %22, %23 : vector<8x256xf32>
    %25 = arith.truncf %24 : vector<8x256xf32> to vector<8x256xbf16>
    %c0_18 = arith.constant 0 : index
    %c0_19 = arith.constant 0 : index
    %26 = vector.load %arg8[%c0_18, %c0_19] : memref<256x256xbf16, #tpu.memory_space<vmem>>, vector<256x256xbf16>
    %cst_20 = arith.constant dense<0.000000e+00> : vector<8x256xf32>
    %27 = tpu.matmul %25, %26, %cst_20 {dimension_numbers = #tpu.dot_dimension_numbers<[1], [0], [0], [1], [0, 0, 1, 1], [], []>} : vector<8x256xbf16>, vector<256x256xbf16>, vector<8x256xf32> -> vector<8x256xf32>
    %c0_21 = arith.constant 0 : index
    %c0_22 = arith.constant 0 : index
    %28 = vector.load %arg9[%c0_21, %c0_22] : memref<1x256xf32, #tpu.memory_space<vmem>>, vector<1x256xf32>
    %29 = vector.broadcast %28 : vector<1x256xf32> to vector<8x256xf32>
    %30 = arith.addf %27, %29 : vector<8x256xf32>
    %cst_23 = arith.constant 0.000000e+00 : f32
    %31 = vector.broadcast %cst_23 : f32 to vector<8x256xf32>
    %32 = arith.maximumf %30, %31 : vector<8x256xf32>
    %33 = arith.truncf %32 : vector<8x256xf32> to vector<8x256xbf16>
    %c0_24 = arith.constant 0 : index
    %c0_25 = arith.constant 0 : index
    %34 = vector.load %arg10[%c0_24, %c0_25] : memref<256x64xbf16, #tpu.memory_space<vmem>>, vector<256x64xbf16>
    %cst_26 = arith.constant dense<0.000000e+00> : vector<8x64xf32>
    %35 = tpu.matmul %33, %34, %cst_26 {dimension_numbers = #tpu.dot_dimension_numbers<[1], [0], [0], [1], [0, 0, 1, 1], [], []>} : vector<8x256xbf16>, vector<256x64xbf16>, vector<8x64xf32> -> vector<8x64xf32>
    %c0_27 = arith.constant 0 : index
    %c0_28 = arith.constant 0 : index
    %36 = vector.load %arg11[%c0_27, %c0_28] : memref<1x64xf32, #tpu.memory_space<vmem>>, vector<1x64xf32>
    %37 = vector.broadcast %36 : vector<1x64xf32> to vector<8x64xf32>
    %38 = arith.addf %35, %37 : vector<8x64xf32>
    %cst_29 = arith.constant 0.000000e+00 : f32
    %39 = vector.broadcast %cst_29 : f32 to vector<8x64xf32>
    %40 = arith.maximumf %38, %39 : vector<8x64xf32>
    %41 = arith.truncf %40 : vector<8x64xf32> to vector<8x64xbf16>
    %c0_30 = arith.constant 0 : index
    %c0_31 = arith.constant 0 : index
    %42 = vector.load %arg12[%c0_30, %c0_31] : memref<64x8xbf16, #tpu.memory_space<vmem>>, vector<64x8xbf16>
    %cst_32 = arith.constant dense<0.000000e+00> : vector<8x8xf32>
    %43 = tpu.matmul %41, %42, %cst_32 {dimension_numbers = #tpu.dot_dimension_numbers<[1], [0], [0], [1], [0, 0, 1, 1], [], []>} : vector<8x64xbf16>, vector<64x8xbf16>, vector<8x8xf32> -> vector<8x8xf32>
    %c0_33 = arith.constant 0 : index
    %c0_34 = arith.constant 0 : index
    %44 = vector.load %arg13[%c0_33, %c0_34] : memref<1x8xf32, #tpu.memory_space<vmem>>, vector<1x8xf32>
    %45 = vector.broadcast %44 : vector<1x8xf32> to vector<8x8xf32>
    %46 = arith.addf %43, %45 : vector<8x8xf32>
    %c0_35 = arith.constant 0 : index
    %c0_36 = arith.constant 0 : index
    %47 = vector.load %arg14[%c0_35, %c0_36] : memref<8x8xf32, #tpu.memory_space<vmem>>, vector<8x8xf32>
    tpu.vector_store %arg14[%c0_35, %c0_36], %46 {strides = array<i32>} : memref<8x8xf32, #tpu.memory_space<vmem>>, vector<8x8xf32>,
    return
  }
  func.func @transform_0(%arg0: i32) -> (i32, i32) {
    %c0_i32 = arith.constant 0 : i32
    %c0_i32_0 = arith.constant 0 : i32
    return %arg0, %c0_i32 : i32, i32
  }
  func.func @transform_1(%arg0: i32) -> (i32, i32) {
    %c0_i32 = arith.constant 0 : i32
    %c0_i32_0 = arith.constant 0 : i32
    %c0_i32_1 = arith.constant 0 : i32
    return %c0_i32, %c0_i32_0 : i32, i32
  }
  func.func @transform_2(%arg0: i32) -> (i32, i32) {
    %c0_i32 = arith.constant 0 : i32
    %c0_i32_0 = arith.constant 0 : i32
    %c0_i32_1 = arith.constant 0 : i32
    return %c0_i32, %c0_i32_0 : i32, i32
  }
  func.func @transform_3(%arg0: i32) -> (i32, i32) {
    %c0_i32 = arith.constant 0 : i32
    %c0_i32_0 = arith.constant 0 : i32
    %c0_i32_1 = arith.constant 0 : i32
    return %c0_i32, %c0_i32_0 : i32, i32
  }
  func.func @transform_4(%arg0: i32) -> (i32, i32) {
    %c0_i32 = arith.constant 0 : i32
    %c0_i32_0 = arith.constant 0 : i32
    %c0_i32_1 = arith.constant 0 : i32
    return %c0_i32, %c0_i32_0 : i32, i32
  }
  func.func @transform_5(%arg0: i32) -> (i32, i32) {
    %c0_i32 = arith.constant 0 : i32
    %c0_i32_0 = arith.constant 0 : i32
    %c0_i32_1 = arith.constant 0 : i32
    return %c0_i32, %c0_i32_0 : i32, i32
  }
  func.func @transform_6(%arg0: i32) -> (i32, i32) {
    %c0_i32 = arith.constant 0 : i32
    %c0_i32_0 = arith.constant 0 : i32
    %c0_i32_1 = arith.constant 0 : i32
    return %c0_i32, %c0_i32_0 : i32, i32
  }
  func.func @transform_7(%arg0: i32) -> (i32, i32) {
    %c0_i32 = arith.constant 0 : i32
    %c0_i32_0 = arith.constant 0 : i32
    %c0_i32_1 = arith.constant 0 : i32
    return %c0_i32, %c0_i32_0 : i32, i32
  }
  func.func @transform_8(%arg0: i32) -> (i32, i32) {
    %c0_i32 = arith.constant 0 : i32
    %c0_i32_0 = arith.constant 0 : i32
    %c0_i32_1 = arith.constant 0 : i32
    return %c0_i32, %c0_i32_0 : i32, i32
  }
  func.func @transform_9(%arg0: i32) -> (i32, i32) {
    %c0_i32 = arith.constant 0 : i32
    %c0_i32_0 = arith.constant 0 : i32
    %c0_i32_1 = arith.constant 0 : i32
    return %c0_i32, %c0_i32_0 : i32, i32
  }
  func.func @transform_10(%arg0: i32) -> (i32, i32) {
    %c0_i32 = arith.constant 0 : i32
    %c0_i32_0 = arith.constant 0 : i32
    %c0_i32_1 = arith.constant 0 : i32
    return %c0_i32, %c0_i32_0 : i32, i32
  }
  func.func @transform_11(%arg0: i32) -> (i32, i32) {
    %c0_i32 = arith.constant 0 : i32
    %c0_i32_0 = arith.constant 0 : i32
    %c0_i32_1 = arith.constant 0 : i32
    return %c0_i32, %c0_i32_0 : i32, i32
  }
  func.func @transform_12(%arg0: i32) -> (i32, i32) {
    %c0_i32 = arith.constant 0 : i32
    %c0_i32_0 = arith.constant 0 : i32
    %c0_i32_1 = arith.constant 0 : i32
    return %c0_i32, %c0_i32_0 : i32, i32
  }
  func.func @transform_13(%arg0: i32) -> (i32, i32) {
    %c0_i32 = arith.constant 0 : i32
    %c0_i32_0 = arith.constant 0 : i32
    return %arg0, %c0_i32 : i32, i32
  }
}

</mosaic_0001>

<llo_original>
// kernel: tpu_custom_call.1
$region0: #{tpu_custom_call.1}
  #allocation0 [shape = 'u32[]', space=smem, size = 0x4, offset = 0x4, fixed_abs, tag = 'smem constant byte address 0x4 - core index']
  #allocation1 [shape = 'u32[144,128]{1,0:T(1,128)}', space=vmem, size = 0x12000, scoped, tag = 'internal scratch']
  %s0 = inlined_call_operand.hbm [shape: f32[8,1152], index: 0, kind: input, shape index: {}]
  %s1 = inlined_call_operand.hbm [shape: bf16[1152,512], index: 1, kind: input, shape index: {}]
  %s2 = inlined_call_operand.hbm [shape: f32[1,512], index: 2, kind: input, shape index: {}]
  %s3 = inlined_call_operand.hbm [shape: bf16[512,384], index: 3, kind: input, shape index: {}]
  %s4 = inlined_call_operand.hbm [shape: f32[1,384], index: 4, kind: input, shape index: {}]
  %s5 = inlined_call_operand.hbm [shape: bf16[384,256], index: 5, kind: input, shape index: {}]
  %s6 = inlined_call_operand.hbm [shape: f32[1,256], index: 6, kind: input, shape index: {}]
  %s7 = inlined_call_operand.hbm [shape: bf16[256,256], index: 7, kind: input, shape index: {}]
  %s8 = inlined_call_operand.hbm [shape: f32[1,256], index: 8, kind: input, shape index: {}]
  %s9 = inlined_call_operand.vmem [shape: bf16[256,64], index: 9, kind: input, shape index: {}]
  %s10 = inlined_call_operand.hbm [shape: f32[1,64], index: 10, kind: input, shape index: {}]
  %s11 = inlined_call_operand.vmem [shape: bf16[64,8], index: 11, kind: input, shape index: {}]
  %s12 = inlined_call_operand.hbm [shape: f32[1,8], index: 12, kind: input, shape index: {}]
  %s13 = inlined_call_operand.hbm [shape: f32[8,8], index: 13, kind: output, shape index: {}]
  %s14 = sld [smem:[#allocation0]]
  $region106: #{tpu_custom_call.1} parent=0
    _
  %s16 = ssub.s32 1, %s14
  %s17 = scalar_select 0, %s16, %s14
  $region1: #{tpu_custom_call.1} parent=0
    #allocation2 [shape = 'u8[36864]{0}', space=vmem, size = 0x9000, scoped, tag = 'input window, operand 0, single buffered']
    #allocation3 [shape = 's32[1]{0}', space=sflag, size = 0x4, scoped, tag = 'scoped memory for tpu_custom_call.1']
    #allocation4 [shape = 's32[1]{0}', space=sflag, size = 0x4, scoped, tag = 'scoped memory for tpu_custom_call.1']
    #allocation5 [shape = 'u8[1179648]{0}', space=vmem, size = 0x120000, scoped, tag = 'input window, operand 1, single buffered']
    #allocation6 [shape = 's32[1]{0}', space=sflag, size = 0x4, scoped, tag = 'scoped memory for tpu_custom_call.1']
    #allocation7 [shape = 'u8[2048]{0}', space=vmem, size = 0x800, scoped, tag = 'input window, operand 2, single buffered']
    #allocation8 [shape = 'u8[393216]{0}', space=vmem, size = 0x60000, scoped, tag = 'input window, operand 3, single buffered']
    #allocation9 [shape = 's32[1]{0}', space=sflag, size = 0x4, scoped, tag = 'scoped memory for tpu_custom_call.1']
    #allocation10 [shape = 'u8[1536]{0}', space=vmem, size = 0x800, scoped, tag = 'input window, operand 4, single buffered']
    #allocation11 [shape = 'u8[196608]{0}', space=vmem, size = 0x30000, scoped, tag = 'input window, operand 5, single buffered']
    #allocation12 [shape = 's32[1]{0}', space=sflag, size = 0x4, scoped, tag = 'scoped memory for tpu_custom_call.1']
    #allocation13 [shape = 'u8[1024]{0}', space=vmem, size = 0x400, scoped, tag = 'input window, operand 6, single buffered']
    #allocation14 [shape = 'u8[131072]{0}', space=vmem, size = 0x20000, scoped, tag = 'input window, operand 7, single buffered']
    #allocation15 [shape = 's32[1]{0}', space=sflag, size = 0x4, scoped, tag = 'scoped memory for tpu_custom_call.1']
    #allocation16 [shape = 'u8[1024]{0}', space=vmem, size = 0x400, scoped, tag = 'input window, operand 8, single buffered']
    #allocation17 [shape = 'u8[512]{0}', space=vmem, size = 0x400, scoped, tag = 'input window, operand 10, single buffered']
    #allocation18 [shape = 's32[1]{0}', space=sflag, size = 0x4, scoped, tag = 'scoped memory for tpu_custom_call.1']
    #allocation19 [shape = 'u8[512]{0}', space=vmem, size = 0x400, scoped, tag = 'input window, operand 12, single buffered']
    #allocation20 [shape = 'u8[4096]{0}', space=vmem, size = 0x1000, scoped, tag = 'output window, operand 0, single buffered']
    %18 = vsyncpa [#allocation3], 0
    %19 = vsyncpa [#allocation6], 0
    %20 = vsyncpa [#allocation9], 0
    %21 = vsyncpa [#allocation12], 0
    %22 = vsyncpa [#allocation15], 0
    %23 = vsyncpa [#allocation18], 0
    %24 = vsyncpa [#allocation4], 0
    // Predicated region
    $region2: #{tpu_custom_call.1} parent=1 // pred_check
      _
    $region3: #{tpu_custom_call.1} parent=1 // pred_check_branch
      %26 = sbr.rel (0) target = $region5
    $region4: #{tpu_custom_call.1} parent=1 // pred_region
      %s28 = ssub.s32 1152, 1152
      %29 = vsyncadd [#allocation3], %s28
      %s31 = sshll.u32 [#allocation2], 4
      %s32 = int_to_ptr.vmem [resolvable:$true] %s31
      %34 = dma.hbm_to_vmem [thread:$0]  %s0, 1152, %s32, [#allocation3]
    $region5: #{tpu_custom_call.1} parent=1 // pred_fallthru
      _
    // Predicated region
    $region6: #{tpu_custom_call.1} parent=1 // pred_check
      _
    $region7: #{tpu_custom_call.1} parent=1 // pred_check_branch
      %36 = sbr.rel (0) target = $region9
    $region8: #{tpu_custom_call.1} parent=1 // pred_region
      %s38 = ssub.s32 36864, 36864
      %39 = vsyncadd [#allocation6], %s38
      %s40 = sshll.u32 [#allocation5], 4
      %s41 = int_to_ptr.vmem [resolvable:$true] %s40
      %46 = dma.hbm_to_vmem [thread:$0]  %s1, 36864, %s41, [#allocation6], 256, 256, 16
    $region9: #{tpu_custom_call.1} parent=1 // pred_fallthru
      _
    // Predicated region
    $region10: #{tpu_custom_call.1} parent=1 // pred_check
      _
    $region11: #{tpu_custom_call.1} parent=1 // pred_check_branch
      %48 = sbr.rel (0) target = $region13
    $region12: #{tpu_custom_call.1} parent=1 // pred_region
      %s50 = ssub.s32 64, 64
      %51 = vsyncadd [#allocation6], %s50
      %s53 = sshll.u32 [#allocation7], 4
      %s54 = int_to_ptr.vmem [resolvable:$true] %s53
      %56 = dma.hbm_to_vmem [thread:$0]  %s2, 64, %s54, [#allocation6]
    $region13: #{tpu_custom_call.1} parent=1 // pred_fallthru
      _
    // Predicated region
    $region14: #{tpu_custom_call.1} parent=1 // pred_check
      _
    $region15: #{tpu_custom_call.1} parent=1 // pred_check_branch
      %58 = sbr.rel (0) target = $region17
    $region16: #{tpu_custom_call.1} parent=1 // pred_region
      %s60 = ssub.s32 12288, 12288
      %61 = vsyncadd [#allocation9], %s60
      %s62 = sshll.u32 [#allocation8], 4
      %s63 = int_to_ptr.vmem [resolvable:$true] %s62
      %68 = dma.hbm_to_vmem [thread:$0]  %s3, 12288, %s63, [#allocation9], 192, 192, 12
    $region17: #{tpu_custom_call.1} parent=1 // pred_fallthru
      _
    // Predicated region
    $region18: #{tpu_custom_call.1} parent=1 // pred_check
      _
    $region19: #{tpu_custom_call.1} parent=1 // pred_check_branch
      %70 = sbr.rel (0) target = $region21
    $region20: #{tpu_custom_call.1} parent=1 // pred_region
      %s72 = ssub.s32 48, 48
      %73 = vsyncadd [#allocation9], %s72
      %s75 = sshll.u32 [#allocation10], 4
      %s76 = int_to_ptr.vmem [resolvable:$true] %s75
      %78 = dma.hbm_to_vmem [thread:$0]  %s4, 48, %s76, [#allocation9]
    $region21: #{tpu_custom_call.1} parent=1 // pred_fallthru
      _
    // Predicated region
    $region22: #{tpu_custom_call.1} parent=1 // pred_check
      _
    $region23: #{tpu_custom_call.1} parent=1 // pred_check_branch
      %80 = sbr.rel (0) target = $region25
    $region24: #{tpu_custom_call.1} parent=1 // pred_region
      %s82 = ssub.s32 6144, 6144
      %83 = vsyncadd [#allocation12], %s82
      %s84 = sshll.u32 [#allocation11], 4
      %s85 = int_to_ptr.vmem [resolvable:$true] %s84
      %90 = dma.hbm_to_vmem [thread:$0]  %s5, 6144, %s85, [#allocation12], 128, 128, 8
    $region25: #{tpu_custom_call.1} parent=1 // pred_fallthru
      _
    // Predicated region
    $region26: #{tpu_custom_call.1} parent=1 // pred_check
      _
    $region27: #{tpu_custom_call.1} parent=1 // pred_check_branch
      %92 = sbr.rel (0) target = $region29
    $region28: #{tpu_custom_call.1} parent=1 // pred_region
      %s94 = ssub.s32 32, 32
      %95 = vsyncadd [#allocation12], %s94
      %s97 = sshll.u32 [#allocation13], 4
      %s98 = int_to_ptr.vmem [resolvable:$true] %s97
      %100 = dma.hbm_to_vmem [thread:$0]  %s6, 32, %s98, [#allocation12]
    $region29: #{tpu_custom_call.1} parent=1 // pred_fallthru
      _
    // Predicated region
    $region30: #{tpu_custom_call.1} parent=1 // pred_check
      _
    $region31: #{tpu_custom_call.1} parent=1 // pred_check_branch
      %102 = sbr.rel (0) target = $region33
    $region32: #{tpu_custom_call.1} parent=1 // pred_region
      %s104 = ssub.s32 4096, 4096
      %105 = vsyncadd [#allocation15], %s104
      %s106 = sshll.u32 [#allocation14], 4
      %s107 = int_to_ptr.vmem [resolvable:$true] %s106
      %112 = dma.hbm_to_vmem [thread:$0]  %s7, 4096, %s107, [#allocation15], 128, 128, 8
    $region33: #{tpu_custom_call.1} parent=1 // pred_fallthru
      _
    // Predicated region
    $region34: #{tpu_custom_call.1} parent=1 // pred_check
      _
    $region35: #{tpu_custom_call.1} parent=1 // pred_check_branch
      %114 = sbr.rel (0) target = $region37
    $region36: #{tpu_custom_call.1} parent=1 // pred_region
      %s116 = ssub.s32 32, 32
      %117 = vsyncadd [#allocation15], %s116
      %s119 = sshll.u32 [#allocation16], 4
      %s120 = int_to_ptr.vmem [resolvable:$true] %s119
      %122 = dma.hbm_to_vmem [thread:$0]  %s8, 32, %s120, [#allocation15]
    $region37: #{tpu_custom_call.1} parent=1 // pred_fallthru
      _
    // Predicated region
    $region38: #{tpu_custom_call.1} parent=1 // pred_check
      _
    $region39: #{tpu_custom_call.1} parent=1 // pred_check_branch
      %124 = sbr.rel (0) target = $region41
    $region40: #{tpu_custom_call.1} parent=1 // pred_region
      _
    $region41: #{tpu_custom_call.1} parent=1 // pred_fallthru
      _
    // Predicated region
    $region42: #{tpu_custom_call.1} parent=1 // pred_check
      _
    $region43: #{tpu_custom_call.1} parent=1 // pred_check_branch
      %126 = sbr.rel (0) target = $region45
    $region44: #{tpu_custom_call.1} parent=1 // pred_region
      %s128 = ssub.s32 16, 16
      %129 = vsyncadd [#allocation18], %s128
      %s131 = sshll.u32 [#allocation17], 4
      %s132 = int_to_ptr.vmem [resolvable:$true] %s131
      %134 = dma.hbm_to_vmem [thread:$0]  %s10, 16, %s132, [#allocation18]
    $region45: #{tpu_custom_call.1} parent=1 // pred_fallthru
      _
    // Predicated region
    $region46: #{tpu_custom_call.1} parent=1 // pred_check
      _
    $region47: #{tpu_custom_call.1} parent=1 // pred_check_branch
      %136 = sbr.rel (0) target = $region49
    $region48: #{tpu_custom_call.1} parent=1 // pred_region
      _
    $region49: #{tpu_custom_call.1} parent=1 // pred_fallthru
      _
    // Predicated region
    $region50: #{tpu_custom_call.1} parent=1 // pred_check
      _
    $region51: #{tpu_custom_call.1} parent=1 // pred_check_branch
      %138 = sbr.rel (0) target = $region53
    $region52: #{tpu_custom_call.1} parent=1 // pred_region
      %s140 = ssub.s32 16, 16
      %141 = vsyncadd [#allocation18], %s140
      %s143 = sshll.u32 [#allocation19], 4
      %s144 = int_to_ptr.vmem [resolvable:$true] %s143
      %146 = dma.hbm_to_vmem [thread:$0]  %s12, 16, %s144, [#allocation18]
    $region53: #{tpu_custom_call.1} parent=1 // pred_fallthru
      _
    // Predicated region
    $region54: #{tpu_custom_call.1} parent=1 // pred_check
      _
    $region55: #{tpu_custom_call.1} parent=1 // pred_check_branch
      %148 = sbr.rel (0) target = $region57
    $region56: #{tpu_custom_call.1} parent=1 // pred_region
      %149 = dma.done [#allocation3], 1152
    $region57: #{tpu_custom_call.1} parent=1 // pred_fallthru
      _
    // Predicated region
    $region58: #{tpu_custom_call.1} parent=1 // pred_check
      _
    $region59: #{tpu_custom_call.1} parent=1 // pred_check_branch
      %151 = sbr.rel (0) target = $region61
    $region60: #{tpu_custom_call.1} parent=1 // pred_region
      %152 = dma.done [#allocation6], 36864
    $region61: #{tpu_custom_call.1} parent=1 // pred_fallthru
      _
    // Predicated region
    $region62: #{tpu_custom_call.1} parent=1 // pred_check
      _
    $region63: #{tpu_custom_call.1} parent=1 // pred_check_branch
      %154 = sbr.rel (0) target = $region65
    $region64: #{tpu_custom_call.1} parent=1 // pred_region
      %155 = dma.done [#allocation6], 64
    $region65: #{tpu_custom_call.1} parent=1 // pred_fallthru
      _
    // Predicated region
    $region66: #{tpu_custom_call.1} parent=1 // pred_check
      _
    $region67: #{tpu_custom_call.1} parent=1 // pred_check_branch
      %157 = sbr.rel (0) target = $region69
    $region68: #{tpu_custom_call.1} parent=1 // pred_region
      %158 = dma.done [#allocation9], 12288
    $region69: #{tpu_custom_call.1} parent=1 // pred_fallthru
      _
    // Predicated region
    $region70: #{tpu_custom_call.1} parent=1 // pred_check
      _
    $region71: #{tpu_custom_call.1} parent=1 // pred_check_branch
      %160 = sbr.rel (0) target = $region73
    $region72: #{tpu_custom_call.1} parent=1 // pred_region
      %161 = dma.done [#allocation9], 48
    $region73: #{tpu_custom_call.1} parent=1 // pred_fallthru
      _
    // Predicated region
    $region74: #{tpu_custom_call.1} parent=1 // pred_check
      _
    $region75: #{tpu_custom_call.1} parent=1 // pred_check_branch
      %163 = sbr.rel (0) target = $region77
    $region76: #{tpu_custom_call.1} parent=1 // pred_region
      %164 = dma.done [#allocation12], 6144
    $region77: #{tpu_custom_call.1} parent=1 // pred_fallthru
      _
    // Predicated region
    $region78: #{tpu_custom_call.1} parent=1 // pred_check
      _
    $region79: #{tpu_custom_call.1} parent=1 // pred_check_branch
      %166 = sbr.rel (0) target = $region81
    $region80: #{tpu_custom_call.1} parent=1 // pred_region
      %167 = dma.done [#allocation12], 32
    $region81: #{tpu_custom_call.1} parent=1 // pred_fallthru
      _
    // Predicated region
    $region82: #{tpu_custom_call.1} parent=1 // pred_check
      _
    $region83: #{tpu_custom_call.1} parent=1 // pred_check_branch
      %169 = sbr.rel (0) target = $region85
    $region84: #{tpu_custom_call.1} parent=1 // pred_region
      %170 = dma.done [#allocation15], 4096
    $region85: #{tpu_custom_call.1} parent=1 // pred_fallthru
      _
    // Predicated region
    $region86: #{tpu_custom_call.1} parent=1 // pred_check
      _
    $region87: #{tpu_custom_call.1} parent=1 // pred_check_branch
      %172 = sbr.rel (0) target = $region89
    $region88: #{tpu_custom_call.1} parent=1 // pred_region
      %173 = dma.done [#allocation15], 32
    $region89: #{tpu_custom_call.1} parent=1 // pred_fallthru
      _
    // Predicated region
    $region90: #{tpu_custom_call.1} parent=1 // pred_check
      _
    $region91: #{tpu_custom_call.1} parent=1 // pred_check_branch
      %175 = sbr.rel (0) target = $region93
    $region92: #{tpu_custom_call.1} parent=1 // pred_region
      %176 = dma.done [#allocation18], 16
    $region93: #{tpu_custom_call.1} parent=1 // pred_fallthru
      _
    // Predicated region
    $region94: #{tpu_custom_call.1} parent=1 // pred_check
      _
    $region95: #{tpu_custom_call.1} parent=1 // pred_check_branch
      %178 = sbr.rel (0) target = $region97
    $region96: #{tpu_custom_call.1} parent=1 // pred_region
      %179 = dma.done [#allocation18], 16
    $region97: #{tpu_custom_call.1} parent=1 // pred_fallthru
      _
    %v181 = vld [vmem:[#allocation2] sm:$0xff]
    %v182 = vld [vmem:[#allocation2 + $0x8] sm:$0xff]
    %v183 = vld [vmem:[#allocation2 + $0x10] sm:$0xff]
    %v184 = vld [vmem:[#allocation2 + $0x18] sm:$0xff]
    %v185 = vld [vmem:[#allocation2 + $0x20] sm:$0xff]
    %v186 = vld [vmem:[#allocation2 + $0x28] sm:$0xff]
    %v187 = vld [vmem:[#allocation2 + $0x30] sm:$0xff]
    %v188 = vld [vmem:[#allocation2 + $0x38] sm:$0xff]
    %v189 = vld [vmem:[#allocation2 + $0x40] sm:$0xff]
    %v190 = vpack.c.bf16 %v181, %v181
    %v191 = vpack.c.bf16 %v182, %v182
    %v192 = vpack.c.bf16 %v183, %v183
    %v193 = vpack.c.bf16 %v184, %v184
    %v194 = vpack.c.bf16 %v185, %v185
    %v195 = vpack.c.bf16 %v186, %v186
    %v196 = vpack.c.bf16 %v187, %v187
    %v197 = vpack.c.bf16 %v188, %v188
    %v198 = vpack.c.bf16 %v189, %v189
    %v199 = vld [vmem:[#allocation5] sm:$0xff]
    %v200 = vld [vmem:[#allocation5 + $0x8] sm:$0xff]
    %v201 = vld [vmem:[#allocation5 + $0x10] sm:$0xff]
    %v202 = vld [vmem:[#allocation5 + $0x18] sm:$0xff]
    %v203 = vld [vmem:[#allocation5 + $0x20] sm:$0xff]
    %v204 = vld [vmem:[#allocation5 + $0x28] sm:$0xff]
    %v205 = vld [vmem:[#allocation5 + $0x30] sm:$0xff]
    %v206 = vld [vmem:[#allocation5 + $0x38] sm:$0xff]
    %v207 = vld [vmem:[#allocation5 + $0x40] sm:$0xff]
    %v208 = vld [vmem:[#allocation5 + $0x48] sm:$0xff]
    %v209 = vld [vmem:[#allocation5 + $0x50] sm:$0xff]
    %v210 = vld [vmem:[#allocation5 + $0x58] sm:$0xff]
    %v211 = vld [vmem:[#allocation5 + $0x60] sm:$0xff]
    %v212 = vld [vmem:[#allocation5 + $0x68] sm:$0xff]
    %v213 = vld [vmem:[#allocation5 + $0x70] sm:$0xff]
    %v214 = vld [vmem:[#allocation5 + $0x78] sm:$0xff]
    %v215 = vld [vmem:[#allocation5 + $0x80] sm:$0xff]
    %v216 = vld [vmem:[#allocation5 + $0x88] sm:$0xff]
    %v217 = vld [vmem:[#allocation5 + $0x90] sm:$0xff]
    %v218 = vld [vmem:[#allocation5 + $0x98] sm:$0xff]
    %v219 = vld [vmem:[#allocation5 + $0xa0] sm:$0xff]
    %v220 = vld [vmem:[#allocation5 + $0xa8] sm:$0xff]
    %v221 = vld [vmem:[#allocation5 + $0xb0] sm:$0xff]
    %v222 = vld [vmem:[#allocation5 + $0xb8] sm:$0xff]
    %v223 = vld [vmem:[#allocation5 + $0xc0] sm:$0xff]
    %v224 = vld [vmem:[#allocation5 + $0xc8] sm:$0xff]
    %v225 = vld [vmem:[#allocation5 + $0xd0] sm:$0xff]
    %v226 = vld [vmem:[#allocation5 + $0xd8] sm:$0xff]
    %v227 = vld [vmem:[#allocation5 + $0xe0] sm:$0xff]
    %v228 = vld [vmem:[#allocation5 + $0xe8] sm:$0xff]
    %v229 = vld [vmem:[#allocation5 + $0xf0] sm:$0xff]
    %v230 = vld [vmem:[#allocation5 + $0xf8] sm:$0xff]
    %v231 = vld [vmem:[#allocation5 + $0x100] sm:$0xff]
    %v232 = vld [vmem:[#allocation5 + $0x108] sm:$0xff]
    %v233 = vld [vmem:[#allocation5 + $0x110] sm:$0xff]
    %v234 = vld [vmem:[#allocation5 + $0x118] sm:$0xff]
    %v235 = vld [vmem:[#allocation5 + $0x120] sm:$0xff]
    %v236 = vld [vmem:[#allocation5 + $0x128] sm:$0xff]
    %v237 = vld [vmem:[#allocation5 + $0x130] sm:$0xff]
    %v238 = vld [vmem:[#allocation5 + $0x138] sm:$0xff]
    %v239 = vld [vmem:[#allocation5 + $0x140] sm:$0xff]
    %v240 = vld [vmem:[#allocation5 + $0x148] sm:$0xff]
    %v241 = vld [vmem:[#allocation5 + $0x150] sm:$0xff]
    %v242 = vld [vmem:[#allocation5 + $0x158] sm:$0xff]
    %v243 = vld [vmem:[#allocation5 + $0x160] sm:$0xff]
    %v244 = vld [vmem:[#allocation5 + $0x168] sm:$0xff]
    %v245 = vld [vmem:[#allocation5 + $0x170] sm:$0xff]
    %v246 = vld [vmem:[#allocation5 + $0x178] sm:$0xff]
    %v247 = vld [vmem:[#allocation5 + $0x180] sm:$0xff]
    %v248 = vld [vmem:[#allocation5 + $0x188] sm:$0xff]
    %v249 = vld [vmem:[#allocation5 + $0x190] sm:$0xff]
    %v250 = vld [vmem:[#allocation5 + $0x198] sm:$0xff]
    %v251 = vld [vmem:[#allocation5 + $0x1a0] sm:$0xff]
    %v252 = vld [vmem:[#allocation5 + $0x1a8] sm:$0xff]
    %v253 = vld [vmem:[#allocation5 + $0x1b0] sm:$0xff]
    %v254 = vld [vmem:[#allocation5 + $0x1b8] sm:$0xff]
    %v255 = vld [vmem:[#allocation5 + $0x1c0] sm:$0xff]
    %v256 = vld [vmem:[#allocation5 + $0x1c8] sm:$0xff]
    %v257 = vld [vmem:[#allocation5 + $0x1d0] sm:$0xff]
    %v258 = vld [vmem:[#allocation5 + $0x1d8] sm:$0xff]
    %v259 = vld [vmem:[#allocation5 + $0x1e0] sm:$0xff]
    %v260 = vld [vmem:[#allocation5 + $0x1e8] sm:$0xff]
    %v261 = vld [vmem:[#allocation5 + $0x1f0] sm:$0xff]
    %v262 = vld [vmem:[#allocation5 + $0x1f8] sm:$0xff]
    %v263 = vld [vmem:[#allocation5 + $0x200] sm:$0xff]
    %v264 = vld [vmem:[#allocation5 + $0x208] sm:$0xff]
    %v265 = vld [vmem:[#allocation5 + $0x210] sm:$0xff]
    %v266 = vld [vmem:[#allocation5 + $0x218] sm:$0xff]
    %v267 = vld [vmem:[#allocation5 + $0x220] sm:$0xff]
    %v268 = vld [vmem:[#allocation5 + $0x228] sm:$0xff]
    %v269 = vld [vmem:[#allocation5 + $0x230] sm:$0xff]
    %v270 = vld [vmem:[#allocation5 + $0x238] sm:$0xff]
    %v271 = vld [vmem:[#allocation5 + $0x240] sm:$0xff]
    %v272 = vld [vmem:[#allocation5 + $0x248] sm:$0xff]
    %v273 = vld [vmem:[#allocation5 + $0x250] sm:$0xff]
    %v274 = vld [vmem:[#allocation5 + $0x258] sm:$0xff]
    %v275 = vld [vmem:[#allocation5 + $0x260] sm:$0xff]
    %v276 = vld [vmem:[#allocation5 + $0x268] sm:$0xff]
    %v277 = vld [vmem:[#allocation5 + $0x270] sm:$0xff]
    %v278 = vld [vmem:[#allocation5 + $0x278] sm:$0xff]
    %v279 = vld [vmem:[#allocation5 + $0x280] sm:$0xff]
    %v280 = vld [vmem:[#allocation5 + $0x288] sm:$0xff]
    %v281 = vld [vmem:[#allocation5 + $0x290] sm:$0xff]
    %v282 = vld [vmem:[#allocation5 + $0x298] sm:$0xff]
    %v283 = vld [vmem:[#allocation5 + $0x2a0] sm:$0xff]
    %v284 = vld [vmem:[#allocation5 + $0x2a8] sm:$0xff]
    %v285 = vld [vmem:[#allocation5 + $0x2b0] sm:$0xff]
    %v286 = vld [vmem:[#allocation5 + $0x2b8] sm:$0xff]
    %v287 = vld [vmem:[#allocation5 + $0x2c0] sm:$0xff]
    %v288 = vld [vmem:[#allocation5 + $0x2c8] sm:$0xff]
    %v289 = vld [vmem:[#allocation5 + $0x2d0] sm:$0xff]
    %v290 = vld [vmem:[#allocation5 + $0x2d8] sm:$0xff]
    %v291 = vld [vmem:[#allocation5 + $0x2e0] sm:$0xff]
    %v292 = vld [vmem:[#allocation5 + $0x2e8] sm:$0xff]
    %v293 = vld [vmem:[#allocation5 + $0x2f0] sm:$0xff]
    %v294 = vld [vmem:[#allocation5 + $0x2f8] sm:$0xff]
    %v295 = vld [vmem:[#allocation5 + $0x300] sm:$0xff]
    %v296 = vld [vmem:[#allocation5 + $0x308] sm:$0xff]
    %v297 = vld [vmem:[#allocation5 + $0x310] sm:$0xff]
    %v298 = vld [vmem:[#allocation5 + $0x318] sm:$0xff]
    %v299 = vld [vmem:[#allocation5 + $0x320] sm:$0xff]
    %v300 = vld [vmem:[#allocation5 + $0x328] sm:$0xff]
    %v301 = vld [vmem:[#allocation5 + $0x330] sm:$0xff]
    %v302 = vld [vmem:[#allocation5 + $0x338] sm:$0xff]
    %v303 = vld [vmem:[#allocation5 + $0x340] sm:$0xff]
    %v304 = vld [vmem:[#allocation5 + $0x348] sm:$0xff]
    %v305 = vld [vmem:[#allocation5 + $0x350] sm:$0xff]
    %v306 = vld [vmem:[#allocation5 + $0x358] sm:$0xff]
    %v307 = vld [vmem:[#allocation5 + $0x360] sm:$0xff]
    %v308 = vld [vmem:[#allocation5 + $0x368] sm:$0xff]
    %v309 = vld [vmem:[#allocation5 + $0x370] sm:$0xff]
    %v310 = vld [vmem:[#allocation5 + $0x378] sm:$0xff]
    %v311 = vld [vmem:[#allocation5 + $0x380] sm:$0xff]
    %v312 = vld [vmem:[#allocation5 + $0x388] sm:$0xff]
    %v313 = vld [vmem:[#allocation5 + $0x390] sm:$0xff]
    %v314 = vld [vmem:[#allocation5 + $0x398] sm:$0xff]
    %v315 = vld [vmem:[#allocation5 + $0x3a0] sm:$0xff]
    %v316 = vld [vmem:[#allocation5 + $0x3a8] sm:$0xff]
    %v317 = vld [vmem:[#allocation5 + $0x3b0] sm:$0xff]
    %v318 = vld [vmem:[#allocation5 + $0x3b8] sm:$0xff]
    %v319 = vld [vmem:[#allocation5 + $0x3c0] sm:$0xff]
    %v320 = vld [vmem:[#allocation5 + $0x3c8] sm:$0xff]
    %v321 = vld [vmem:[#allocation5 + $0x3d0] sm:$0xff]
    %v322 = vld [vmem:[#allocation5 + $0x3d8] sm:$0xff]
    %v323 = vld [vmem:[#allocation5 + $0x3e0] sm:$0xff]
    %v324 = vld [vmem:[#allocation5 + $0x3e8] sm:$0xff]
    %v325 = vld [vmem:[#allocation5 + $0x3f0] sm:$0xff]
    %v326 = vld [vmem:[#allocation5 + $0x3f8] sm:$0xff]
    %v327 = vld [vmem:[#allocation5 + $0x400] sm:$0xff]
    %v328 = vld [vmem:[#allocation5 + $0x408] sm:$0xff]
    %v329 = vld [vmem:[#allocation5 + $0x410] sm:$0xff]
    %v330 = vld [vmem:[#allocation5 + $0x418] sm:$0xff]
    %v331 = vld [vmem:[#allocation5 + $0x420] sm:$0xff]
    %v332 = vld [vmem:[#allocation5 + $0x428] sm:$0xff]
    %v333 = vld [vmem:[#allocation5 + $0x430] sm:$0xff]
    %v334 = vld [vmem:[#allocation5 + $0x438] sm:$0xff]
    %v335 = vld [vmem:[#allocation5 + $0x440] sm:$0xff]
    %v336 = vld [vmem:[#allocation5 + $0x448] sm:$0xff]
    %v337 = vld [vmem:[#allocation5 + $0x450] sm:$0xff]
    %v338 = vld [vmem:[#allocation5 + $0x458] sm:$0xff]
    %v339 = vld [vmem:[#allocation5 + $0x460] sm:$0xff]
    %v340 = vld [vmem:[#allocation5 + $0x468] sm:$0xff]
    %v341 = vld [vmem:[#allocation5 + $0x470] sm:$0xff]
    %v342 = vld [vmem:[#allocation5 + $0x478] sm:$0xff]
    %v343 = vld [vmem:[#allocation5 + $0x480] sm:$0xff]
    %v344 = vld [vmem:[#allocation5 + $0x488] sm:$0xff]
    %v345 = vld [vmem:[#allocation5 + $0x490] sm:$0xff]
    %v346 = vld [vmem:[#allocation5 + $0x498] sm:$0xff]
    %v347 = vld [vmem:[#allocation5 + $0x4a0] sm:$0xff]
    %v348 = vld [vmem:[#allocation5 + $0x4a8] sm:$0xff]
    %v349 = vld [vmem:[#allocation5 + $0x4b0] sm:$0xff]
    %v350 = vld [vmem:[#allocation5 + $0x4b8] sm:$0xff]
    %v351 = vld [vmem:[#allocation5 + $0x4c0] sm:$0xff]
    %v352 = vld [vmem:[#allocation5 + $0x4c8] sm:$0xff]
    %v353 = vld [vmem:[#allocation5 + $0x4d0] sm:$0xff]
    %v354 = vld [vmem:[#allocation5 + $0x4d8] sm:$0xff]
    %v355 = vld [vmem:[#allocation5 + $0x4e0] sm:$0xff]
    %v356 = vld [vmem:[#allocation5 + $0x4e8] sm:$0xff]
    %v357 = vld [vmem:[#allocation5 + $0x4f0] sm:$0xff]
    %v358 = vld [vmem:[#allocation5 + $0x4f8] sm:$0xff]
    %v359 = vld [vmem:[#allocation5 + $0x500] sm:$0xff]
    %v360 = vld [vmem:[#allocation5 + $0x508] sm:$0xff]
    %v361 = vld [vmem:[#allocation5 + $0x510] sm:$0xff]
    %v362 = vld [vmem:[#allocation5 + $0x518] sm:$0xff]
    %v363 = vld [vmem:[#allocation5 + $0x520] sm:$0xff]
    %v364 = vld [vmem:[#allocation5 + $0x528] sm:$0xff]
    %v365 = vld [vmem:[#allocation5 + $0x530] sm:$0xff]
    %v366 = vld [vmem:[#allocation5 + $0x538] sm:$0xff]
    %v367 = vld [vmem:[#allocation5 + $0x540] sm:$0xff]
    %v368 = vld [vmem:[#allocation5 + $0x548] sm:$0xff]
    %v369 = vld [vmem:[#allocation5 + $0x550] sm:$0xff]
    %v370 = vld [vmem:[#allocation5 + $0x558] sm:$0xff]
    %v371 = vld [vmem:[#allocation5 + $0x560] sm:$0xff]
    %v372 = vld [vmem:[#allocation5 + $0x568] sm:$0xff]
    %v373 = vld [vmem:[#allocation5 + $0x570] sm:$0xff]
    %v374 = vld [vmem:[#allocation5 + $0x578] sm:$0xff]
    %v375 = vld [vmem:[#allocation5 + $0x580] sm:$0xff]
    %v376 = vld [vmem:[#allocation5 + $0x588] sm:$0xff]
    %v377 = vld [vmem:[#allocation5 + $0x590] sm:$0xff]
    %v378 = vld [vmem:[#allocation5 + $0x598] sm:$0xff]
    %v379 = vld [vmem:[#allocation5 + $0x5a0] sm:$0xff]
    %v380 = vld [vmem:[#allocation5 + $0x5a8] sm:$0xff]
    %v381 = vld [vmem:[#allocation5 + $0x5b0] sm:$0xff]
    %v382 = vld [vmem:[#allocation5 + $0x5b8] sm:$0xff]
    %v383 = vld [vmem:[#allocation5 + $0x5c0] sm:$0xff]
    %v384 = vld [vmem:[#allocation5 + $0x5c8] sm:$0xff]
    %v385 = vld [vmem:[#allocation5 + $0x5d0] sm:$0xff]
    %v386 = vld [vmem:[#allocation5 + $0x5d8] sm:$0xff]
    %v387 = vld [vmem:[#allocation5 + $0x5e0] sm:$0xff]
    %v388 = vld [vmem:[#allocation5 + $0x5e8] sm:$0xff]
    %v389 = vld [vmem:[#allocation5 + $0x5f0] sm:$0xff]
    %v390 = vld [vmem:[#allocation5 + $0x5f8] sm:$0xff]
    %v391 = vld [vmem:[#allocation5 + $0x600] sm:$0xff]
    %v392 = vld [vmem:[#allocation5 + $0x608] sm:$0xff]
    %v393 = vld [vmem:[#allocation5 + $0x610] sm:$0xff]
    %v394 = vld [vmem:[#allocation5 + $0x618] sm:$0xff]
    %v395 = vld [vmem:[#allocation5 + $0x620] sm:$0xff]
    %v396 = vld [vmem:[#allocation5 + $0x628] sm:$0xff]
    %v397 = vld [vmem:[#allocation5 + $0x630] sm:$0xff]
    %v398 = vld [vmem:[#allocation5 + $0x638] sm:$0xff]
    %v399 = vld [vmem:[#allocation5 + $0x640] sm:$0xff]
    %v400 = vld [vmem:[#allocation5 + $0x648] sm:$0xff]
    %v401 = vld [vmem:[#allocation5 + $0x650] sm:$0xff]
    %v402 = vld [vmem:[#allocation5 + $0x658] sm:$0xff]
    %v403 = vld [vmem:[#allocation5 + $0x660] sm:$0xff]
    %v404 = vld [vmem:[#allocation5 + $0x668] sm:$0xff]
    %v405 = vld [vmem:[#allocation5 + $0x670] sm:$0xff]
    %v406 = vld [vmem:[#allocation5 + $0x678] sm:$0xff]
    %v407 = vld [vmem:[#allocation5 + $0x680] sm:$0xff]
    %v408 = vld [vmem:[#allocation5 + $0x688] sm:$0xff]
    %v409 = vld [vmem:[#allocation5 + $0x690] sm:$0xff]
    %v410 = vld [vmem:[#allocation5 + $0x698] sm:$0xff]
    %v411 = vld [vmem:[#allocation5 + $0x6a0] sm:$0xff]
    %v412 = vld [vmem:[#allocation5 + $0x6a8] sm:$0xff]
    %v413 = vld [vmem:[#allocation5 + $0x6b0] sm:$0xff]
    %v414 = vld [vmem:[#allocation5 + $0x6b8] sm:$0xff]
    %v415 = vld [vmem:[#allocation5 + $0x6c0] sm:$0xff]
    %v416 = vld [vmem:[#allocation5 + $0x6c8] sm:$0xff]
    %v417 = vld [vmem:[#allocation5 + $0x6d0] sm:$0xff]
    %v418 = vld [vmem:[#allocation5 + $0x6d8] sm:$0xff]
    %v419 = vld [vmem:[#allocation5 + $0x6e0] sm:$0xff]
    %v420 = vld [vmem:[#allocation5 + $0x6e8] sm:$0xff]
    %v421 = vld [vmem:[#allocation5 + $0x6f0] sm:$0xff]
    %v422 = vld [vmem:[#allocation5 + $0x6f8] sm:$0xff]
    %v423 = vld [vmem:[#allocation5 + $0x700] sm:$0xff]
    %v424 = vld [vmem:[#allocation5 + $0x708] sm:$0xff]
    %v425 = vld [vmem:[#allocation5 + $0x710] sm:$0xff]
    %v426 = vld [vmem:[#allocation5 + $0x718] sm:$0xff]
    %v427 = vld [vmem:[#allocation5 + $0x720] sm:$0xff]
    %v428 = vld [vmem:[#allocation5 + $0x728] sm:$0xff]
    %v429 = vld [vmem:[#allocation5 + $0x730] sm:$0xff]
    %v430 = vld [vmem:[#allocation5 + $0x738] sm:$0xff]
    %v431 = vld [vmem:[#allocation5 + $0x740] sm:$0xff]
    %v432 = vld [vmem:[#allocation5 + $0x748] sm:$0xff]
    %v433 = vld [vmem:[#allocation5 + $0x750] sm:$0xff]
    %v434 = vld [vmem:[#allocation5 + $0x758] sm:$0xff]
    %v435 = vld [vmem:[#allocation5 + $0x760] sm:$0xff]
    %v436 = vld [vmem:[#allocation5 + $0x768] sm:$0xff]
    %v437 = vld [vmem:[#allocation5 + $0x770] sm:$0xff]
    %v438 = vld [vmem:[#allocation5 + $0x778] sm:$0xff]
    %v439 = vld [vmem:[#allocation5 + $0x780] sm:$0xff]
    %v440 = vld [vmem:[#allocation5 + $0x788] sm:$0xff]
    %v441 = vld [vmem:[#allocation5 + $0x790] sm:$0xff]
    %v442 = vld [vmem:[#allocation5 + $0x798] sm:$0xff]
    %v443 = vld [vmem:[#allocation5 + $0x7a0] sm:$0xff]
    %v444 = vld [vmem:[#allocation5 + $0x7a8] sm:$0xff]
    %v445 = vld [vmem:[#allocation5 + $0x7b0] sm:$0xff]
    %v446 = vld [vmem:[#allocation5 + $0x7b8] sm:$0xff]
    %v447 = vld [vmem:[#allocation5 + $0x7c0] sm:$0xff]
    %v448 = vld [vmem:[#allocation5 + $0x7c8] sm:$0xff]
    %v449 = vld [vmem:[#allocation5 + $0x7d0] sm:$0xff]
    %v450 = vld [vmem:[#allocation5 + $0x7d8] sm:$0xff]
    %v451 = vld [vmem:[#allocation5 + $0x7e0] sm:$0xff]
    %v452 = vld [vmem:[#allocation5 + $0x7e8] sm:$0xff]
    %v453 = vld [vmem:[#allocation5 + $0x7f0] sm:$0xff]
    %v454 = vld [vmem:[#allocation5 + $0x7f8] sm:$0xff]
    %v455 = vld [vmem:[#allocation5 + $0x800] sm:$0xff]
    %v456 = vld [vmem:[#allocation5 + $0x808] sm:$0xff]
    %v457 = vld [vmem:[#allocation5 + $0x810] sm:$0xff]
    %v458 = vld [vmem:[#allocation5 + $0x818] sm:$0xff]
    %v459 = vld [vmem:[#allocation5 + $0x820] sm:$0xff]
    %v460 = vld [vmem:[#allocation5 + $0x828] sm:$0xff]
    %v461 = vld [vmem:[#allocation5 + $0x830] sm:$0xff]
    %v462 = vld [vmem:[#allocation5 + $0x838] sm:$0xff]
    %v463 = vld [vmem:[#allocation5 + $0x840] sm:$0xff]
    %v464 = vld [vmem:[#allocation5 + $0x848] sm:$0xff]
    %v465 = vld [vmem:[#allocation5 + $0x850] sm:$0xff]
    %v466 = vld [vmem:[#allocation5 + $0x858] sm:$0xff]
    %v467 = vld [vmem:[#allocation5 + $0x860] sm:$0xff]
    %v468 = vld [vmem:[#allocation5 + $0x868] sm:$0xff]
    %v469 = vld [vmem:[#allocation5 + $0x870] sm:$0xff]
    %v470 = vld [vmem:[#allocation5 + $0x878] sm:$0xff]
    %v471 = vld [vmem:[#allocation5 + $0x880] sm:$0xff]
    %v472 = vld [vmem:[#allocation5 + $0x888] sm:$0xff]
    %v473 = vld [vmem:[#allocation5 + $0x890] sm:$0xff]
    %v474 = vld [vmem:[#allocation5 + $0x898] sm:$0xff]
    %v475 = vld [vmem:[#allocation5 + $0x8a0] sm:$0xff]
    %v476 = vld [vmem:[#allocation5 + $0x8a8] sm:$0xff]
    %v477 = vld [vmem:[#allocation5 + $0x8b0] sm:$0xff]
    %v478 = vld [vmem:[#allocation5 + $0x8b8] sm:$0xff]
    %v479 = vld [vmem:[#allocation5 + $0x8c0] sm:$0xff]
    %v480 = vld [vmem:[#allocation5 + $0x8c8] sm:$0xff]
    %v481 = vld [vmem:[#allocation5 + $0x8d0] sm:$0xff]
    %v482 = vld [vmem:[#allocation5 + $0x8d8] sm:$0xff]
    %v483 = vld [vmem:[#allocation5 + $0x8e0] sm:$0xff]
    %v484 = vld [vmem:[#allocation5 + $0x8e8] sm:$0xff]
    %v485 = vld [vmem:[#allocation5 + $0x8f0] sm:$0xff]
    %v486 = vld [vmem:[#allocation5 + $0x8f8] sm:$0xff]
    %v487 = vld [vmem:[#allocation7] sm:$0xf]
    %v489 = vlaneseq
    %v490 = vshrl.u32 %v489, 7
    %v491 = vsub.s32 0, %v490
    %v492 = vrot.slane %v487, %v491
    %v493 = vlaneseq
    %v494 = vshrl.u32 %v493, 7
    %v495 = vsub.s32 1, %v494
    %v496 = vrot.slane %v487, %v495
    %v497 = vlaneseq
    %v498 = vshrl.u32 %v497, 7
    %v499 = vsub.s32 2, %v498
    %v500 = vrot.slane %v487, %v499
    %v501 = vlaneseq
    %v502 = vshrl.u32 %v501, 7
    %v503 = vsub.s32 3, %v502
    %v504 = vrot.slane %v487, %v503
    %v797 = vunpack.c.l.b16 %v199
    %v798 = vunpack.c.h.b16 %v199
    %v799 = vunpack.c.l.b16 %v200
    %v800 = vunpack.c.h.b16 %v200
    %v801 = vunpack.c.l.b16 %v201
    %v802 = vunpack.c.h.b16 %v201
    %v803 = vunpack.c.l.b16 %v202
    %v804 = vunpack.c.h.b16 %v202
    %v805 = vunpack.c.l.b16 %v203
    %v806 = vunpack.c.h.b16 %v203
    %v807 = vunpack.c.l.b16 %v204
    %v808 = vunpack.c.h.b16 %v204
    %v809 = vunpack.c.l.b16 %v205
    %v810 = vunpack.c.h.b16 %v205
    %v811 = vunpack.c.l.b16 %v206
    %v812 = vunpack.c.h.b16 %v206
    %v813 = vunpack.c.l.b16 %v207
    %v814 = vunpack.c.h.b16 %v207
    %v815 = vunpack.c.l.b16 %v208
    %v816 = vunpack.c.h.b16 %v208
    %v817 = vunpack.c.l.b16 %v209
    %v818 = vunpack.c.h.b16 %v209
    %v819 = vunpack.c.l.b16 %v210
    %v820 = vunpack.c.h.b16 %v210
    %v821 = vunpack.c.l.b16 %v211
    %v822 = vunpack.c.h.b16 %v211
    %v823 = vunpack.c.l.b16 %v212
    %v824 = vunpack.c.h.b16 %v212
    %v825 = vunpack.c.l.b16 %v213
    %v826 = vunpack.c.h.b16 %v213
    %v827 = vunpack.c.l.b16 %v214
    %v828 = vunpack.c.h.b16 %v214
    %v829 = vunpack.c.l.b16 %v215
    %v830 = vunpack.c.h.b16 %v215
    %v831 = vunpack.c.l.b16 %v216
    %v832 = vunpack.c.h.b16 %v216
    %v833 = vunpack.c.l.b16 %v217
    %v834 = vunpack.c.h.b16 %v217
    %v835 = vunpack.c.l.b16 %v218
    %v836 = vunpack.c.h.b16 %v218
    %v837 = vunpack.c.l.b16 %v219
    %v838 = vunpack.c.h.b16 %v219
    %v839 = vunpack.c.l.b16 %v220
    %v840 = vunpack.c.h.b16 %v220
    %v841 = vunpack.c.l.b16 %v221
    %v842 = vunpack.c.h.b16 %v221
    %v843 = vunpack.c.l.b16 %v222
    %v844 = vunpack.c.h.b16 %v222
    %v845 = vunpack.c.l.b16 %v223
    %v846 = vunpack.c.h.b16 %v223
    %v847 = vunpack.c.l.b16 %v224
    %v848 = vunpack.c.h.b16 %v224
    %v849 = vunpack.c.l.b16 %v225
    %v850 = vunpack.c.h.b16 %v225
    %v851 = vunpack.c.l.b16 %v226
    %v852 = vunpack.c.h.b16 %v226
    %v853 = vunpack.c.l.b16 %v227
    %v854 = vunpack.c.h.b16 %v227
    %v855 = vunpack.c.l.b16 %v228
    %v856 = vunpack.c.h.b16 %v228
    %v857 = vunpack.c.l.b16 %v229
    %v858 = vunpack.c.h.b16 %v229
    %v859 = vunpack.c.l.b16 %v230
    %v860 = vunpack.c.h.b16 %v230
    %v861 = vunpack.c.l.b16 %v231
    %v862 = vunpack.c.h.b16 %v231
    %v863 = vunpack.c.l.b16 %v232
    %v864 = vunpack.c.h.b16 %v232
    %v865 = vunpack.c.l.b16 %v233
    %v866 = vunpack.c.h.b16 %v233
    %v867 = vunpack.c.l.b16 %v234
    %v868 = vunpack.c.h.b16 %v234
    %v869 = vunpack.c.l.b16 %v235
    %v870 = vunpack.c.h.b16 %v235
    %v871 = vunpack.c.l.b16 %v236
    %v872 = vunpack.c.h.b16 %v236
    %v873 = vunpack.c.l.b16 %v237
    %v874 = vunpack.c.h.b16 %v237
    %v875 = vunpack.c.l.b16 %v238
    %v876 = vunpack.c.h.b16 %v238
    %v877 = vunpack.c.l.b16 %v239
    %v878 = vunpack.c.h.b16 %v239
    %v879 = vunpack.c.l.b16 %v240
    %v880 = vunpack.c.h.b16 %v240
    %v881 = vunpack.c.l.b16 %v241
    %v882 = vunpack.c.h.b16 %v241
    %v883 = vunpack.c.l.b16 %v242
    %v884 = vunpack.c.h.b16 %v242
    %v885 = vunpack.c.l.b16 %v243
    %v886 = vunpack.c.h.b16 %v243
    %v887 = vunpack.c.l.b16 %v244
    %v888 = vunpack.c.h.b16 %v244
    %v889 = vunpack.c.l.b16 %v245
    %v890 = vunpack.c.h.b16 %v245
    %v891 = vunpack.c.l.b16 %v246
    %v892 = vunpack.c.h.b16 %v246
    %v893 = vunpack.c.l.b16 %v247
    %v894 = vunpack.c.h.b16 %v247
    %v895 = vunpack.c.l.b16 %v248
    %v896 = vunpack.c.h.b16 %v248
    %v897 = vunpack.c.l.b16 %v249
    %v898 = vunpack.c.h.b16 %v249
    %v899 = vunpack.c.l.b16 %v250
    %v900 = vunpack.c.h.b16 %v250
    %v901 = vunpack.c.l.b16 %v251
    %v902 = vunpack.c.h.b16 %v251
    %v903 = vunpack.c.l.b16 %v252
    %v904 = vunpack.c.h.b16 %v252
    %v905 = vunpack.c.l.b16 %v253
    %v906 = vunpack.c.h.b16 %v253
    %v907 = vunpack.c.l.b16 %v254
    %v908 = vunpack.c.h.b16 %v254
    %v909 = vunpack.c.l.b16 %v255
    %v910 = vunpack.c.h.b16 %v255
    %v911 = vunpack.c.l.b16 %v256
    %v912 = vunpack.c.h.b16 %v256
    %v913 = vunpack.c.l.b16 %v257
    %v914 = vunpack.c.h.b16 %v257
    %v915 = vunpack.c.l.b16 %v258
    %v916 = vunpack.c.h.b16 %v258
    %v917 = vunpack.c.l.b16 %v259
    %v918 = vunpack.c.h.b16 %v259
    %v919 = vunpack.c.l.b16 %v260
    %v920 = vunpack.c.h.b16 %v260
    %v921 = vunpack.c.l.b16 %v261
    %v922 = vunpack.c.h.b16 %v261
    %v923 = vunpack.c.l.b16 %v262
    %v924 = vunpack.c.h.b16 %v262
    %v925 = vunpack.c.l.b16 %v263
    %v926 = vunpack.c.h.b16 %v263
    %v927 = vunpack.c.l.b16 %v264
    %v928 = vunpack.c.h.b16 %v264
    %v929 = vunpack.c.l.b16 %v265
    %v930 = vunpack.c.h.b16 %v265
    %v931 = vunpack.c.l.b16 %v266
    %v932 = vunpack.c.h.b16 %v266
    %v933 = vunpack.c.l.b16 %v267
    %v934 = vunpack.c.h.b16 %v267
    %v935 = vunpack.c.l.b16 %v268
    %v936 = vunpack.c.h.b16 %v268
    %v937 = vunpack.c.l.b16 %v269
    %v938 = vunpack.c.h.b16 %v269
    %v939 = vunpack.c.l.b16 %v270
    %v940 = vunpack.c.h.b16 %v270
    %v941 = vunpack.c.l.b16 %v271
    %v942 = vunpack.c.h.b16 %v271
    %v943 = vunpack.c.l.b16 %v272
    %v944 = vunpack.c.h.b16 %v272
    %v945 = vunpack.c.l.b16 %v273
    %v946 = vunpack.c.h.b16 %v273
    %v947 = vunpack.c.l.b16 %v274
    %v948 = vunpack.c.h.b16 %v274
    %v949 = vunpack.c.l.b16 %v275
    %v950 = vunpack.c.h.b16 %v275
    %v951 = vunpack.c.l.b16 %v276
    %v952 = vunpack.c.h.b16 %v276
    %v953 = vunpack.c.l.b16 %v277
    %v954 = vunpack.c.h.b16 %v277
    %v955 = vunpack.c.l.b16 %v278
    %v956 = vunpack.c.h.b16 %v278
    %v957 = vunpack.c.l.b16 %v279
    %v958 = vunpack.c.h.b16 %v279
    %v959 = vunpack.c.l.b16 %v280
    %v960 = vunpack.c.h.b16 %v280
    %v961 = vunpack.c.l.b16 %v281
    %v962 = vunpack.c.h.b16 %v281
    %v963 = vunpack.c.l.b16 %v282
    %v964 = vunpack.c.h.b16 %v282
    %v965 = vunpack.c.l.b16 %v283
    %v966 = vunpack.c.h.b16 %v283
    %v967 = vunpack.c.l.b16 %v284
    %v968 = vunpack.c.h.b16 %v284
    %v969 = vunpack.c.l.b16 %v285
    %v970 = vunpack.c.h.b16 %v285
    %v971 = vunpack.c.l.b16 %v286
    %v972 = vunpack.c.h.b16 %v286
    %v973 = vunpack.c.l.b16 %v287
    %v974 = vunpack.c.h.b16 %v287
    %v975 = vunpack.c.l.b16 %v288
    %v976 = vunpack.c.h.b16 %v288
    %v977 = vunpack.c.l.b16 %v289
    %v978 = vunpack.c.h.b16 %v289
    %v979 = vunpack.c.l.b16 %v290
    %v980 = vunpack.c.h.b16 %v290
    %v981 = vunpack.c.l.b16 %v291
    %v982 = vunpack.c.h.b16 %v291
    %v983 = vunpack.c.l.b16 %v292
    %v984 = vunpack.c.h.b16 %v292
    %v985 = vunpack.c.l.b16 %v293
    %v986 = vunpack.c.h.b16 %v293
    %v987 = vunpack.c.l.b16 %v294
    %v988 = vunpack.c.h.b16 %v294
    %v989 = vunpack.c.l.b16 %v295
    %v990 = vunpack.c.h.b16 %v295
    %v991 = vunpack.c.l.b16 %v296
    %v992 = vunpack.c.h.b16 %v296
    %v993 = vunpack.c.l.b16 %v297
    %v994 = vunpack.c.h.b16 %v297
    %v995 = vunpack.c.l.b16 %v298
    %v996 = vunpack.c.h.b16 %v298
    %v997 = vunpack.c.l.b16 %v299
    %v998 = vunpack.c.h.b16 %v299
    %v999 = vunpack.c.l.b16 %v300
    %v1000 = vunpack.c.h.b16 %v300
    %v1001 = vunpack.c.l.b16 %v301
    %v1002 = vunpack.c.h.b16 %v301
    %v1003 = vunpack.c.l.b16 %v302
    %v1004 = vunpack.c.h.b16 %v302
    %v1005 = vunpack.c.l.b16 %v303
    %v1006 = vunpack.c.h.b16 %v303
    %v1007 = vunpack.c.l.b16 %v304
    %v1008 = vunpack.c.h.b16 %v304
    %v1009 = vunpack.c.l.b16 %v305
    %v1010 = vunpack.c.h.b16 %v305
    %v1011 = vunpack.c.l.b16 %v306
    %v1012 = vunpack.c.h.b16 %v306
    %v1013 = vunpack.c.l.b16 %v307
    %v1014 = vunpack.c.h.b16 %v307
    %v1015 = vunpack.c.l.b16 %v308
    %v1016 = vunpack.c.h.b16 %v308
    %v1017 = vunpack.c.l.b16 %v309
    %v1018 = vunpack.c.h.b16 %v309
    %v1019 = vunpack.c.l.b16 %v310
    %v1020 = vunpack.c.h.b16 %v310
    %v1021 = vunpack.c.l.b16 %v311
    %v1022 = vunpack.c.h.b16 %v311
    %v1023 = vunpack.c.l.b16 %v312
    %v1024 = vunpack.c.h.b16 %v312
    %v1025 = vunpack.c.l.b16 %v313
    %v1026 = vunpack.c.h.b16 %v313
    %v1027 = vunpack.c.l.b16 %v314
    %v1028 = vunpack.c.h.b16 %v314
    %v1029 = vunpack.c.l.b16 %v315
    %v1030 = vunpack.c.h.b16 %v315
    %v1031 = vunpack.c.l.b16 %v316
    %v1032 = vunpack.c.h.b16 %v316
    %v1033 = vunpack.c.l.b16 %v317
    %v1034 = vunpack.c.h.b16 %v317
    %v1035 = vunpack.c.l.b16 %v318
    %v1036 = vunpack.c.h.b16 %v318
    %v1037 = vunpack.c.l.b16 %v319
    %v1038 = vunpack.c.h.b16 %v319
    %v1039 = vunpack.c.l.b16 %v320
    %v1040 = vunpack.c.h.b16 %v320
    %v1041 = vunpack.c.l.b16 %v321
    %v1042 = vunpack.c.h.b16 %v321
    %v1043 = vunpack.c.l.b16 %v322
    %v1044 = vunpack.c.h.b16 %v322
    %v1045 = vunpack.c.l.b16 %v323
    %v1046 = vunpack.c.h.b16 %v323
    %v1047 = vunpack.c.l.b16 %v324
    %v1048 = vunpack.c.h.b16 %v324
    %v1049 = vunpack.c.l.b16 %v325
    %v1050 = vunpack.c.h.b16 %v325
    %v1051 = vunpack.c.l.b16 %v326
    %v1052 = vunpack.c.h.b16 %v326
    %v1053 = vunpack.c.l.b16 %v327
    %v1054 = vunpack.c.h.b16 %v327
    %v1055 = vunpack.c.l.b16 %v328
    %v1056 = vunpack.c.h.b16 %v328
    %v1057 = vunpack.c.l.b16 %v329
    %v1058 = vunpack.c.h.b16 %v329
    %v1059 = vunpack.c.l.b16 %v330
    %v1060 = vunpack.c.h.b16 %v330
    %v1061 = vunpack.c.l.b16 %v331
    %v1062 = vunpack.c.h.b16 %v331
    %v1063 = vunpack.c.l.b16 %v332
    %v1064 = vunpack.c.h.b16 %v332
    %v1065 = vunpack.c.l.b16 %v333
    %v1066 = vunpack.c.h.b16 %v333
    %v1067 = vunpack.c.l.b16 %v334
    %v1068 = vunpack.c.h.b16 %v334
    %v1069 = vunpack.c.l.b16 %v335
    %v1070 = vunpack.c.h.b16 %v335
    %v1071 = vunpack.c.l.b16 %v336
    %v1072 = vunpack.c.h.b16 %v336
    %v1073 = vunpack.c.l.b16 %v337
    %v1074 = vunpack.c.h.b16 %v337
    %v1075 = vunpack.c.l.b16 %v338
    %v1076 = vunpack.c.h.b16 %v338
    %v1077 = vunpack.c.l.b16 %v339
    %v1078 = vunpack.c.h.b16 %v339
    %v1079 = vunpack.c.l.b16 %v340
    %v1080 = vunpack.c.h.b16 %v340
    %v1081 = vunpack.c.l.b16 %v341
    %v1082 = vunpack.c.h.b16 %v341
    %v1083 = vunpack.c.l.b16 %v342
    %v1084 = vunpack.c.h.b16 %v342
    %v1085 = vunpack.c.l.b16 %v343
    %v1086 = vunpack.c.h.b16 %v343
    %v1087 = vunpack.c.l.b16 %v344
    %v1088 = vunpack.c.h.b16 %v344
    %v1089 = vunpack.c.l.b16 %v345
    %v1090 = vunpack.c.h.b16 %v345
    %v1091 = vunpack.c.l.b16 %v346
    %v1092 = vunpack.c.h.b16 %v346
    %v1093 = vunpack.c.l.b16 %v347
    %v1094 = vunpack.c.h.b16 %v347
    %v1095 = vunpack.c.l.b16 %v348
    %v1096 = vunpack.c.h.b16 %v348
    %v1097 = vunpack.c.l.b16 %v349
    %v1098 = vunpack.c.h.b16 %v349
    %v1099 = vunpack.c.l.b16 %v350
    %v1100 = vunpack.c.h.b16 %v350
    %v1101 = vunpack.c.l.b16 %v351
    %v1102 = vunpack.c.h.b16 %v351
    %v1103 = vunpack.c.l.b16 %v352
    %v1104 = vunpack.c.h.b16 %v352
    %v1105 = vunpack.c.l.b16 %v353
    %v1106 = vunpack.c.h.b16 %v353
    %v1107 = vunpack.c.l.b16 %v354
    %v1108 = vunpack.c.h.b16 %v354
    %v1109 = vunpack.c.l.b16 %v355
    %v1110 = vunpack.c.h.b16 %v355
    %v1111 = vunpack.c.l.b16 %v356
    %v1112 = vunpack.c.h.b16 %v356
    %v1113 = vunpack.c.l.b16 %v357
    %v1114 = vunpack.c.h.b16 %v357
    %v1115 = vunpack.c.l.b16 %v358
    %v1116 = vunpack.c.h.b16 %v358
    %v1117 = vunpack.c.l.b16 %v359
    %v1118 = vunpack.c.h.b16 %v359
    %v1119 = vunpack.c.l.b16 %v360
    %v1120 = vunpack.c.h.b16 %v360
    %v1121 = vunpack.c.l.b16 %v361
    %v1122 = vunpack.c.h.b16 %v361
    %v1123 = vunpack.c.l.b16 %v362
    %v1124 = vunpack.c.h.b16 %v362
    %v1125 = vunpack.c.l.b16 %v363
    %v1126 = vunpack.c.h.b16 %v363
    %v1127 = vunpack.c.l.b16 %v364
    %v1128 = vunpack.c.h.b16 %v364
    %v1129 = vunpack.c.l.b16 %v365
    %v1130 = vunpack.c.h.b16 %v365
    %v1131 = vunpack.c.l.b16 %v366
    %v1132 = vunpack.c.h.b16 %v366
    %v1133 = vunpack.c.l.b16 %v367
    %v1134 = vunpack.c.h.b16 %v367
    %v1135 = vunpack.c.l.b16 %v368
    %v1136 = vunpack.c.h.b16 %v368
    %v1137 = vunpack.c.l.b16 %v369
    %v1138 = vunpack.c.h.b16 %v369
    %v1139 = vunpack.c.l.b16 %v370
    %v1140 = vunpack.c.h.b16 %v370
    %v1141 = vunpack.c.l.b16 %v371
    %v1142 = vunpack.c.h.b16 %v371
    %v1143 = vunpack.c.l.b16 %v372
    %v1144 = vunpack.c.h.b16 %v372
    %v1145 = vunpack.c.l.b16 %v373
    %v1146 = vunpack.c.h.b16 %v373
    %v1147 = vunpack.c.l.b16 %v374
    %v1148 = vunpack.c.h.b16 %v374
    %v1149 = vunpack.c.l.b16 %v375
    %v1150 = vunpack.c.h.b16 %v375
    %v1151 = vunpack.c.l.b16 %v376
    %v1152 = vunpack.c.h.b16 %v376
    %v1153 = vunpack.c.l.b16 %v377
    %v1154 = vunpack.c.h.b16 %v377
    %v1155 = vunpack.c.l.b16 %v378
    %v1156 = vunpack.c.h.b16 %v378
    %v1157 = vunpack.c.l.b16 %v379
    %v1158 = vunpack.c.h.b16 %v379
    %v1159 = vunpack.c.l.b16 %v380
    %v1160 = vunpack.c.h.b16 %v380
    %v1161 = vunpack.c.l.b16 %v381
    %v1162 = vunpack.c.h.b16 %v381
    %v1163 = vunpack.c.l.b16 %v382
    %v1164 = vunpack.c.h.b16 %v382
    %v1165 = vunpack.c.l.b16 %v383
    %v1166 = vunpack.c.h.b16 %v383
    %v1167 = vunpack.c.l.b16 %v384
    %v1168 = vunpack.c.h.b16 %v384
    %v1169 = vunpack.c.l.b16 %v385
    %v1170 = vunpack.c.h.b16 %v385
    %v1171 = vunpack.c.l.b16 %v386
    %v1172 = vunpack.c.h.b16 %v386
    %v1173 = vunpack.c.l.b16 %v387
    %v1174 = vunpack.c.h.b16 %v387
    %v1175 = vunpack.c.l.b16 %v388
    %v1176 = vunpack.c.h.b16 %v388
    %v1177 = vunpack.c.l.b16 %v389
    %v1178 = vunpack.c.h.b16 %v389
    %v1179 = vunpack.c.l.b16 %v390
    %v1180 = vunpack.c.h.b16 %v390
    %v1181 = vunpack.c.l.b16 %v391
    %v1182 = vunpack.c.h.b16 %v391
    %v1183 = vunpack.c.l.b16 %v392
    %v1184 = vunpack.c.h.b16 %v392
    %v1185 = vunpack.c.l.b16 %v393
    %v1186 = vunpack.c.h.b16 %v393
    %v1187 = vunpack.c.l.b16 %v394
    %v1188 = vunpack.c.h.b16 %v394
    %v1189 = vunpack.c.l.b16 %v395
    %v1190 = vunpack.c.h.b16 %v395
    %v1191 = vunpack.c.l.b16 %v396
    %v1192 = vunpack.c.h.b16 %v396
    %v1193 = vunpack.c.l.b16 %v397
    %v1194 = vunpack.c.h.b16 %v397
    %v1195 = vunpack.c.l.b16 %v398
    %v1196 = vunpack.c.h.b16 %v398
    %v1197 = vunpack.c.l.b16 %v399
    %v1198 = vunpack.c.h.b16 %v399
    %v1199 = vunpack.c.l.b16 %v400
    %v1200 = vunpack.c.h.b16 %v400
    %v1201 = vunpack.c.l.b16 %v401
    %v1202 = vunpack.c.h.b16 %v401
    %v1203 = vunpack.c.l.b16 %v402
    %v1204 = vunpack.c.h.b16 %v402
    %v1205 = vunpack.c.l.b16 %v403
    %v1206 = vunpack.c.h.b16 %v403
    %v1207 = vunpack.c.l.b16 %v404
    %v1208 = vunpack.c.h.b16 %v404
    %v1209 = vunpack.c.l.b16 %v405
    %v1210 = vunpack.c.h.b16 %v405
    %v1211 = vunpack.c.l.b16 %v406
    %v1212 = vunpack.c.h.b16 %v406
    %v1213 = vunpack.c.l.b16 %v407
    %v1214 = vunpack.c.h.b16 %v407
    %v1215 = vunpack.c.l.b16 %v408
    %v1216 = vunpack.c.h.b16 %v408
    %v1217 = vunpack.c.l.b16 %v409
    %v1218 = vunpack.c.h.b16 %v409
    %v1219 = vunpack.c.l.b16 %v410
    %v1220 = vunpack.c.h.b16 %v410
    %v1221 = vunpack.c.l.b16 %v411
    %v1222 = vunpack.c.h.b16 %v411
    %v1223 = vunpack.c.l.b16 %v412
    %v1224 = vunpack.c.h.b16 %v412
    %v1225 = vunpack.c.l.b16 %v413
    %v1226 = vunpack.c.h.b16 %v413
    %v1227 = vunpack.c.l.b16 %v414
    %v1228 = vunpack.c.h.b16 %v414
    %v1229 = vunpack.c.l.b16 %v415
    %v1230 = vunpack.c.h.b16 %v415
    %v1231 = vunpack.c.l.b16 %v416
    %v1232 = vunpack.c.h.b16 %v416
    %v1233 = vunpack.c.l.b16 %v417
    %v1234 = vunpack.c.h.b16 %v417
    %v1235 = vunpack.c.l.b16 %v418
    %v1236 = vunpack.c.h.b16 %v418
    %v1237 = vunpack.c.l.b16 %v419
    %v1238 = vunpack.c.h.b16 %v419
    %v1239 = vunpack.c.l.b16 %v420
    %v1240 = vunpack.c.h.b16 %v420
    %v1241 = vunpack.c.l.b16 %v421
    %v1242 = vunpack.c.h.b16 %v421
    %v1243 = vunpack.c.l.b16 %v422
    %v1244 = vunpack.c.h.b16 %v422
    %v1245 = vunpack.c.l.b16 %v423
    %v1246 = vunpack.c.h.b16 %v423
    %v1247 = vunpack.c.l.b16 %v424
    %v1248 = vunpack.c.h.b16 %v424
    %v1249 = vunpack.c.l.b16 %v425
    %v1250 = vunpack.c.h.b16 %v425
    %v1251 = vunpack.c.l.b16 %v426
    %v1252 = vunpack.c.h.b16 %v426
    %v1253 = vunpack.c.l.b16 %v427
    %v1254 = vunpack.c.h.b16 %v427
    %v1255 = vunpack.c.l.b16 %v428
    %v1256 = vunpack.c.h.b16 %v428
    %v1257 = vunpack.c.l.b16 %v429
    %v1258 = vunpack.c.h.b16 %v429
    %v1259 = vunpack.c.l.b16 %v430
    %v1260 = vunpack.c.h.b16 %v430
    %v1261 = vunpack.c.l.b16 %v431
    %v1262 = vunpack.c.h.b16 %v431
    %v1263 = vunpack.c.l.b16 %v432
    %v1264 = vunpack.c.h.b16 %v432
    %v1265 = vunpack.c.l.b16 %v433
    %v1266 = vunpack.c.h.b16 %v433
    %v1267 = vunpack.c.l.b16 %v434
    %v1268 = vunpack.c.h.b16 %v434
    %v1269 = vunpack.c.l.b16 %v435
    %v1270 = vunpack.c.h.b16 %v435
    %v1271 = vunpack.c.l.b16 %v436
    %v1272 = vunpack.c.h.b16 %v436
    %v1273 = vunpack.c.l.b16 %v437
    %v1274 = vunpack.c.h.b16 %v437
    %v1275 = vunpack.c.l.b16 %v438
    %v1276 = vunpack.c.h.b16 %v438
    %v1277 = vunpack.c.l.b16 %v439
    %v1278 = vunpack.c.h.b16 %v439
    %v1279 = vunpack.c.l.b16 %v440
    %v1280 = vunpack.c.h.b16 %v440
    %v1281 = vunpack.c.l.b16 %v441
    %v1282 = vunpack.c.h.b16 %v441
    %v1283 = vunpack.c.l.b16 %v442
    %v1284 = vunpack.c.h.b16 %v442
    %v1285 = vunpack.c.l.b16 %v443
    %v1286 = vunpack.c.h.b16 %v443
    %v1287 = vunpack.c.l.b16 %v444
    %v1288 = vunpack.c.h.b16 %v444
    %v1289 = vunpack.c.l.b16 %v445
    %v1290 = vunpack.c.h.b16 %v445
    %v1291 = vunpack.c.l.b16 %v446
    %v1292 = vunpack.c.h.b16 %v446
    %v1293 = vunpack.c.l.b16 %v447
    %v1294 = vunpack.c.h.b16 %v447
    %v1295 = vunpack.c.l.b16 %v448
    %v1296 = vunpack.c.h.b16 %v448
    %v1297 = vunpack.c.l.b16 %v449
    %v1298 = vunpack.c.h.b16 %v449
    %v1299 = vunpack.c.l.b16 %v450
    %v1300 = vunpack.c.h.b16 %v450
    %v1301 = vunpack.c.l.b16 %v451
    %v1302 = vunpack.c.h.b16 %v451
    %v1303 = vunpack.c.l.b16 %v452
    %v1304 = vunpack.c.h.b16 %v452
    %v1305 = vunpack.c.l.b16 %v453
    %v1306 = vunpack.c.h.b16 %v453
    %v1307 = vunpack.c.l.b16 %v454
    %v1308 = vunpack.c.h.b16 %v454
    %v1309 = vunpack.c.l.b16 %v455
    %v1310 = vunpack.c.h.b16 %v455
    %v1311 = vunpack.c.l.b16 %v456
    %v1312 = vunpack.c.h.b16 %v456
    %v1313 = vunpack.c.l.b16 %v457
    %v1314 = vunpack.c.h.b16 %v457
    %v1315 = vunpack.c.l.b16 %v458
    %v1316 = vunpack.c.h.b16 %v458
    %v1317 = vunpack.c.l.b16 %v459
    %v1318 = vunpack.c.h.b16 %v459
    %v1319 = vunpack.c.l.b16 %v460
    %v1320 = vunpack.c.h.b16 %v460
    %v1321 = vunpack.c.l.b16 %v461
    %v1322 = vunpack.c.h.b16 %v461
    %v1323 = vunpack.c.l.b16 %v462
    %v1324 = vunpack.c.h.b16 %v462
    %v1325 = vunpack.c.l.b16 %v463
    %v1326 = vunpack.c.h.b16 %v463
    %v1327 = vunpack.c.l.b16 %v464
    %v1328 = vunpack.c.h.b16 %v464
    %v1329 = vunpack.c.l.b16 %v465
    %v1330 = vunpack.c.h.b16 %v465
    %v1331 = vunpack.c.l.b16 %v466
    %v1332 = vunpack.c.h.b16 %v466
    %v1333 = vunpack.c.l.b16 %v467
    %v1334 = vunpack.c.h.b16 %v467
    %v1335 = vunpack.c.l.b16 %v468
    %v1336 = vunpack.c.h.b16 %v468
    %v1337 = vunpack.c.l.b16 %v469
    %v1338 = vunpack.c.h.b16 %v469
    %v1339 = vunpack.c.l.b16 %v470
    %v1340 = vunpack.c.h.b16 %v470
    %v1341 = vunpack.c.l.b16 %v471
    %v1342 = vunpack.c.h.b16 %v471
    %v1343 = vunpack.c.l.b16 %v472
    %v1344 = vunpack.c.h.b16 %v472
    %v1345 = vunpack.c.l.b16 %v473
    %v1346 = vunpack.c.h.b16 %v473
    %v1347 = vunpack.c.l.b16 %v474
    %v1348 = vunpack.c.h.b16 %v474
    %v1349 = vunpack.c.l.b16 %v475
    %v1350 = vunpack.c.h.b16 %v475
    %v1351 = vunpack.c.l.b16 %v476
    %v1352 = vunpack.c.h.b16 %v476
    %v1353 = vunpack.c.l.b16 %v477
    %v1354 = vunpack.c.h.b16 %v477
    %v1355 = vunpack.c.l.b16 %v478
    %v1356 = vunpack.c.h.b16 %v478
    %v1357 = vunpack.c.l.b16 %v479
    %v1358 = vunpack.c.h.b16 %v479
    %v1359 = vunpack.c.l.b16 %v480
    %v1360 = vunpack.c.h.b16 %v480
    %v1361 = vunpack.c.l.b16 %v481
    %v1362 = vunpack.c.h.b16 %v481
    %v1363 = vunpack.c.l.b16 %v482
    %v1364 = vunpack.c.h.b16 %v482
    %v1365 = vunpack.c.l.b16 %v483
    %v1366 = vunpack.c.h.b16 %v483
    %v1367 = vunpack.c.l.b16 %v484
    %v1368 = vunpack.c.h.b16 %v484
    %v1369 = vunpack.c.l.b16 %v485
    %v1370 = vunpack.c.h.b16 %v485
    %v1371 = vunpack.c.l.b16 %v486
    %v1372 = vunpack.c.h.b16 %v486
    %v1373 = vpack.c.b16 %v801, %v797
    %v1374 = vpack.c.b16 %v802, %v798
    %v1375 = vpack.c.b16 %v803, %v799
    %v1376 = vpack.c.b16 %v804, %v800
    %v1377 = vpack.c.b16 %v809, %v805
    %v1378 = vpack.c.b16 %v810, %v806
    %v1379 = vpack.c.b16 %v811, %v807
    %v1380 = vpack.c.b16 %v812, %v808
    %v1381 = vpack.c.b16 %v817, %v813
    %v1382 = vpack.c.b16 %v818, %v814
    %v1383 = vpack.c.b16 %v819, %v815
    %v1384 = vpack.c.b16 %v820, %v816
    %v1385 = vpack.c.b16 %v825, %v821
    %v1386 = vpack.c.b16 %v826, %v822
    %v1387 = vpack.c.b16 %v827, %v823
    %v1388 = vpack.c.b16 %v828, %v824
    %v1389 = vpack.c.b16 %v833, %v829
    %v1390 = vpack.c.b16 %v834, %v830
    %v1391 = vpack.c.b16 %v835, %v831
    %v1392 = vpack.c.b16 %v836, %v832
    %v1393 = vpack.c.b16 %v841, %v837
    %v1394 = vpack.c.b16 %v842, %v838
    %v1395 = vpack.c.b16 %v843, %v839
    %v1396 = vpack.c.b16 %v844, %v840
    %v1397 = vpack.c.b16 %v849, %v845
    %v1398 = vpack.c.b16 %v850, %v846
    %v1399 = vpack.c.b16 %v851, %v847
    %v1400 = vpack.c.b16 %v852, %v848
    %v1401 = vpack.c.b16 %v857, %v853
    %v1402 = vpack.c.b16 %v858, %v854
    %v1403 = vpack.c.b16 %v859, %v855
    %v1404 = vpack.c.b16 %v860, %v856
    %v1405 = vpack.c.b16 %v865, %v861
    %v1406 = vpack.c.b16 %v866, %v862
    %v1407 = vpack.c.b16 %v867, %v863
    %v1408 = vpack.c.b16 %v868, %v864
    %v1409 = vpack.c.b16 %v873, %v869
    %v1410 = vpack.c.b16 %v874, %v870
    %v1411 = vpack.c.b16 %v875, %v871
    %v1412 = vpack.c.b16 %v876, %v872
    %v1413 = vpack.c.b16 %v881, %v877
    %v1414 = vpack.c.b16 %v882, %v878
    %v1415 = vpack.c.b16 %v883, %v879
    %v1416 = vpack.c.b16 %v884, %v880
    %v1417 = vpack.c.b16 %v889, %v885
    %v1418 = vpack.c.b16 %v890, %v886
    %v1419 = vpack.c.b16 %v891, %v887
    %v1420 = vpack.c.b16 %v892, %v888
    %v1421 = vpack.c.b16 %v897, %v893
    %v1422 = vpack.c.b16 %v898, %v894
    %v1423 = vpack.c.b16 %v899, %v895
    %v1424 = vpack.c.b16 %v900, %v896
    %v1425 = vpack.c.b16 %v905, %v901
    %v1426 = vpack.c.b16 %v906, %v902
    %v1427 = vpack.c.b16 %v907, %v903
    %v1428 = vpack.c.b16 %v908, %v904
    %v1429 = vpack.c.b16 %v913, %v909
    %v1430 = vpack.c.b16 %v914, %v910
    %v1431 = vpack.c.b16 %v915, %v911
    %v1432 = vpack.c.b16 %v916, %v912
    %v1433 = vpack.c.b16 %v921, %v917
    %v1434 = vpack.c.b16 %v922, %v918
    %v1435 = vpack.c.b16 %v923, %v919
    %v1436 = vpack.c.b16 %v924, %v920
    %v1437 = vpack.c.b16 %v929, %v925
    %v1438 = vpack.c.b16 %v930, %v926
    %v1439 = vpack.c.b16 %v931, %v927
    %v1440 = vpack.c.b16 %v932, %v928
    %v1441 = vpack.c.b16 %v937, %v933
    %v1442 = vpack.c.b16 %v938, %v934
    %v1443 = vpack.c.b16 %v939, %v935
    %v1444 = vpack.c.b16 %v940, %v936
    %v1445 = vpack.c.b16 %v945, %v941
    %v1446 = vpack.c.b16 %v946, %v942
    %v1447 = vpack.c.b16 %v947, %v943
    %v1448 = vpack.c.b16 %v948, %v944
    %v1449 = vpack.c.b16 %v953, %v949
    %v1450 = vpack.c.b16 %v954, %v950
    %v1451 = vpack.c.b16 %v955, %v951
    %v1452 = vpack.c.b16 %v956, %v952
    %v1453 = vpack.c.b16 %v961, %v957
    %v1454 = vpack.c.b16 %v962, %v958
    %v1455 = vpack.c.b16 %v963, %v959
    %v1456 = vpack.c.b16 %v964, %v960
    %v1457 = vpack.c.b16 %v969, %v965
    %v1458 = vpack.c.b16 %v970, %v966
    %v1459 = vpack.c.b16 %v971, %v967
    %v1460 = vpack.c.b16 %v972, %v968
    %v1461 = vpack.c.b16 %v977, %v973
    %v1462 = vpack.c.b16 %v978, %v974
    %v1463 = vpack.c.b16 %v979, %v975
    %v1464 = vpack.c.b16 %v980, %v976
    %v1465 = vpack.c.b16 %v985, %v981
    %v1466 = vpack.c.b16 %v986, %v982
    %v1467 = vpack.c.b16 %v987, %v983
    %v1468 = vpack.c.b16 %v988, %v984
    %v1469 = vpack.c.b16 %v993, %v989
    %v1470 = vpack.c.b16 %v994, %v990
    %v1471 = vpack.c.b16 %v995, %v991
    %v1472 = vpack.c.b16 %v996, %v992
    %v1473 = vpack.c.b16 %v1001, %v997
    %v1474 = vpack.c.b16 %v1002, %v998
    %v1475 = vpack.c.b16 %v1003, %v999
    %v1476 = vpack.c.b16 %v1004, %v1000
    %v1477 = vpack.c.b16 %v1009, %v1005
    %v1478 = vpack.c.b16 %v1010, %v1006
    %v1479 = vpack.c.b16 %v1011, %v1007
    %v1480 = vpack.c.b16 %v1012, %v1008
    %v1481 = vpack.c.b16 %v1017, %v1013
    %v1482 = vpack.c.b16 %v1018, %v1014
    %v1483 = vpack.c.b16 %v1019, %v1015
    %v1484 = vpack.c.b16 %v1020, %v1016
    %v1485 = vpack.c.b16 %v1025, %v1021
    %v1486 = vpack.c.b16 %v1026, %v1022
    %v1487 = vpack.c.b16 %v1027, %v1023
    %v1488 = vpack.c.b16 %v1028, %v1024
    %v1489 = vpack.c.b16 %v1033, %v1029
    %v1490 = vpack.c.b16 %v1034, %v1030
    %v1491 = vpack.c.b16 %v1035, %v1031
    %v1492 = vpack.c.b16 %v1036, %v1032
    %v1493 = vpack.c.b16 %v1041, %v1037
    %v1494 = vpack.c.b16 %v1042, %v1038
    %v1495 = vpack.c.b16 %v1043, %v1039
    %v1496 = vpack.c.b16 %v1044, %v1040
    %v1497 = vpack.c.b16 %v1049, %v1045
    %v1498 = vpack.c.b16 %v1050, %v1046
    %v1499 = vpack.c.b16 %v1051, %v1047
    %v1500 = vpack.c.b16 %v1052, %v1048
    %v1501 = vpack.c.b16 %v1057, %v1053
    %v1502 = vpack.c.b16 %v1058, %v1054
    %v1503 = vpack.c.b16 %v1059, %v1055
    %v1504 = vpack.c.b16 %v1060, %v1056
    %v1505 = vpack.c.b16 %v1065, %v1061
    %v1506 = vpack.c.b16 %v1066, %v1062
    %v1507 = vpack.c.b16 %v1067, %v1063
    %v1508 = vpack.c.b16 %v1068, %v1064
    %v1509 = vpack.c.b16 %v1073, %v1069
    %v1510 = vpack.c.b16 %v1074, %v1070
    %v1511 = vpack.c.b16 %v1075, %v1071
    %v1512 = vpack.c.b16 %v1076, %v1072
    %v1513 = vpack.c.b16 %v1081, %v1077
    %v1514 = vpack.c.b16 %v1082, %v1078
    %v1515 = vpack.c.b16 %v1083, %v1079
    %v1516 = vpack.c.b16 %v1084, %v1080
    %v1517 = vpack.c.b16 %v1089, %v1085
    %v1518 = vpack.c.b16 %v1090, %v1086
    %v1519 = vpack.c.b16 %v1091, %v1087
    %v1520 = vpack.c.b16 %v1092, %v1088
    %v1521 = vpack.c.b16 %v1097, %v1093
    %v1522 = vpack.c.b16 %v1098, %v1094
    %v1523 = vpack.c.b16 %v1099, %v1095
    %v1524 = vpack.c.b16 %v1100, %v1096
    %v1525 = vpack.c.b16 %v1105, %v1101
    %v1526 = vpack.c.b16 %v1106, %v1102
    %v1527 = vpack.c.b16 %v1107, %v1103
    %v1528 = vpack.c.b16 %v1108, %v1104
    %v1529 = vpack.c.b16 %v1113, %v1109
    %v1530 = vpack.c.b16 %v1114, %v1110
    %v1531 = vpack.c.b16 %v1115, %v1111
    %v1532 = vpack.c.b16 %v1116, %v1112
    %v1533 = vpack.c.b16 %v1121, %v1117
    %v1534 = vpack.c.b16 %v1122, %v1118
    %v1535 = vpack.c.b16 %v1123, %v1119
    %v1536 = vpack.c.b16 %v1124, %v1120
    %v1537 = vpack.c.b16 %v1129, %v1125
    %v1538 = vpack.c.b16 %v1130, %v1126
    %v1539 = vpack.c.b16 %v1131, %v1127
    %v1540 = vpack.c.b16 %v1132, %v1128
    %v1541 = vpack.c.b16 %v1137, %v1133
    %v1542 = vpack.c.b16 %v1138, %v1134
    %v1543 = vpack.c.b16 %v1139, %v1135
    %v1544 = vpack.c.b16 %v1140, %v1136
    %v1545 = vpack.c.b16 %v1145, %v1141
    %v1546 = vpack.c.b16 %v1146, %v1142
    %v1547 = vpack.c.b16 %v1147, %v1143
    %v1548 = vpack.c.b16 %v1148, %v1144
    %v1549 = vpack.c.b16 %v1153, %v1149
    %v1550 = vpack.c.b16 %v1154, %v1150
    %v1551 = vpack.c.b16 %v1155, %v1151
    %v1552 = vpack.c.b16 %v1156, %v1152
    %v1553 = vpack.c.b16 %v1161, %v1157
    %v1554 = vpack.c.b16 %v1162, %v1158
    %v1555 = vpack.c.b16 %v1163, %v1159
    %v1556 = vpack.c.b16 %v1164, %v1160
    %v1557 = vpack.c.b16 %v1169, %v1165
    %v1558 = vpack.c.b16 %v1170, %v1166
    %v1559 = vpack.c.b16 %v1171, %v1167
    %v1560 = vpack.c.b16 %v1172, %v1168
    %v1561 = vpack.c.b16 %v1177, %v1173
    %v1562 = vpack.c.b16 %v1178, %v1174
    %v1563 = vpack.c.b16 %v1179, %v1175
    %v1564 = vpack.c.b16 %v1180, %v1176
    %v1565 = vpack.c.b16 %v1185, %v1181
    %v1566 = vpack.c.b16 %v1186, %v1182
    %v1567 = vpack.c.b16 %v1187, %v1183
    %v1568 = vpack.c.b16 %v1188, %v1184
    %v1569 = vpack.c.b16 %v1193, %v1189
    %v1570 = vpack.c.b16 %v1194, %v1190
    %v1571 = vpack.c.b16 %v1195, %v1191
    %v1572 = vpack.c.b16 %v1196, %v1192
    %v1573 = vpack.c.b16 %v1201, %v1197
    %v1574 = vpack.c.b16 %v1202, %v1198
    %v1575 = vpack.c.b16 %v1203, %v1199
    %v1576 = vpack.c.b16 %v1204, %v1200
    %v1577 = vpack.c.b16 %v1209, %v1205
    %v1578 = vpack.c.b16 %v1210, %v1206
    %v1579 = vpack.c.b16 %v1211, %v1207
    %v1580 = vpack.c.b16 %v1212, %v1208
    %v1581 = vpack.c.b16 %v1217, %v1213
    %v1582 = vpack.c.b16 %v1218, %v1214
    %v1583 = vpack.c.b16 %v1219, %v1215
    %v1584 = vpack.c.b16 %v1220, %v1216
    %v1585 = vpack.c.b16 %v1225, %v1221
    %v1586 = vpack.c.b16 %v1226, %v1222
    %v1587 = vpack.c.b16 %v1227, %v1223
    %v1588 = vpack.c.b16 %v1228, %v1224
    %v1589 = vpack.c.b16 %v1233, %v1229
    %v1590 = vpack.c.b16 %v1234, %v1230
    %v1591 = vpack.c.b16 %v1235, %v1231
    %v1592 = vpack.c.b16 %v1236, %v1232
    %v1593 = vpack.c.b16 %v1241, %v1237
    %v1594 = vpack.c.b16 %v1242, %v1238
    %v1595 = vpack.c.b16 %v1243, %v1239
    %v1596 = vpack.c.b16 %v1244, %v1240
    %v1597 = vpack.c.b16 %v1249, %v1245
    %v1598 = vpack.c.b16 %v1250, %v1246
    %v1599 = vpack.c.b16 %v1251, %v1247
    %v1600 = vpack.c.b16 %v1252, %v1248
    %v1601 = vpack.c.b16 %v1257, %v1253
    %v1602 = vpack.c.b16 %v1258, %v1254
    %v1603 = vpack.c.b16 %v1259, %v1255
    %v1604 = vpack.c.b16 %v1260, %v1256
    %v1605 = vpack.c.b16 %v1265, %v1261
    %v1606 = vpack.c.b16 %v1266, %v1262
    %v1607 = vpack.c.b16 %v1267, %v1263
    %v1608 = vpack.c.b16 %v1268, %v1264
    %v1609 = vpack.c.b16 %v1273, %v1269
    %v1610 = vpack.c.b16 %v1274, %v1270
    %v1611 = vpack.c.b16 %v1275, %v1271
    %v1612 = vpack.c.b16 %v1276, %v1272
    %v1613 = vpack.c.b16 %v1281, %v1277
    %v1614 = vpack.c.b16 %v1282, %v1278
    %v1615 = vpack.c.b16 %v1283, %v1279
    %v1616 = vpack.c.b16 %v1284, %v1280
    %v1617 = vpack.c.b16 %v1289, %v1285
    %v1618 = vpack.c.b16 %v1290, %v1286
    %v1619 = vpack.c.b16 %v1291, %v1287
    %v1620 = vpack.c.b16 %v1292, %v1288
    %v1621 = vpack.c.b16 %v1297, %v1293
    %v1622 = vpack.c.b16 %v1298, %v1294
    %v1623 = vpack.c.b16 %v1299, %v1295
    %v1624 = vpack.c.b16 %v1300, %v1296
    %v1625 = vpack.c.b16 %v1305, %v1301
    %v1626 = vpack.c.b16 %v1306, %v1302
    %v1627 = vpack.c.b16 %v1307, %v1303
    %v1628 = vpack.c.b16 %v1308, %v1304
    %v1629 = vpack.c.b16 %v1313, %v1309
    %v1630 = vpack.c.b16 %v1314, %v1310
    %v1631 = vpack.c.b16 %v1315, %v1311
    %v1632 = vpack.c.b16 %v1316, %v1312
    %v1633 = vpack.c.b16 %v1321, %v1317
    %v1634 = vpack.c.b16 %v1322, %v1318
    %v1635 = vpack.c.b16 %v1323, %v1319
    %v1636 = vpack.c.b16 %v1324, %v1320
    %v1637 = vpack.c.b16 %v1329, %v1325
    %v1638 = vpack.c.b16 %v1330, %v1326
    %v1639 = vpack.c.b16 %v1331, %v1327
    %v1640 = vpack.c.b16 %v1332, %v1328
    %v1641 = vpack.c.b16 %v1337, %v1333
    %v1642 = vpack.c.b16 %v1338, %v1334
    %v1643 = vpack.c.b16 %v1339, %v1335
    %v1644 = vpack.c.b16 %v1340, %v1336
    %v1645 = vpack.c.b16 %v1345, %v1341
    %v1646 = vpack.c.b16 %v1346, %v1342
    %v1647 = vpack.c.b16 %v1347, %v1343
    %v1648 = vpack.c.b16 %v1348, %v1344
    %v1649 = vpack.c.b16 %v1353, %v1349
    %v1650 = vpack.c.b16 %v1354, %v1350
    %v1651 = vpack.c.b16 %v1355, %v1351
    %v1652 = vpack.c.b16 %v1356, %v1352
    %v1653 = vpack.c.b16 %v1361, %v1357
    %v1654 = vpack.c.b16 %v1362, %v1358
    %v1655 = vpack.c.b16 %v1363, %v1359
    %v1656 = vpack.c.b16 %v1364, %v1360
    %v1657 = vpack.c.b16 %v1369, %v1365
    %v1658 = vpack.c.b16 %v1370, %v1366
    %v1659 = vpack.c.b16 %v1371, %v1367
    %v1660 = vpack.c.b16 %v1372, %v1368
    %1949 = vmatprep.subr.bf16.mxu0 %v1402
    %1950 = vmatpush1.bf16.msra.mxu0 %v1401
    %1951 = vmatprep.subr.bf16.mxu0 %v1398
    %1952 = vmatpush1.bf16.msra.mxu0 %v1397
    %1953 = vmatprep.subr.bf16.mxu0 %v1394
    %1954 = vmatpush1.bf16.msra.mxu0 %v1393
    %1955 = vmatprep.subr.bf16.mxu0 %v1390
    %1956 = vmatpush1.bf16.msra.mxu0 %v1389
    %1957 = vmatprep.subr.bf16.mxu0 %v1386
    %1958 = vmatpush1.bf16.msra.mxu0 %v1385
    %1959 = vmatprep.subr.bf16.mxu0 %v1382
    %1960 = vmatpush1.bf16.msra.mxu0 %v1381
    %1961 = vmatprep.subr.bf16.mxu0 %v1378
    %1962 = vmatpush1.bf16.msra.mxu0 %v1377
    %1963 = vmatprep.subr.bf16.mxu0 %v1374
    %1964 = vmatpush1.bf16.msra.mxu0 %v1373
    %1965 = vmatprep.subr.bf16.mxu0 %v1434
    %1966 = vmatpush2.bf16.msra.mxu0 %v1433
    %1967 = vmatprep.subr.bf16.mxu0 %v1430
    %1968 = vmatpush2.bf16.msra.mxu0 %v1429
    %1969 = vmatprep.subr.bf16.mxu0 %v1426
    %1970 = vmatpush2.bf16.msra.mxu0 %v1425
    %1971 = vmatprep.subr.bf16.mxu0 %v1422
    %1972 = vmatpush2.bf16.msra.mxu0 %v1421
    %1973 = vmatprep.subr.bf16.mxu0 %v1418
    %1974 = vmatpush2.bf16.msra.mxu0 %v1417
    %1975 = vmatprep.subr.bf16.mxu0 %v1414
    %1976 = vmatpush2.bf16.msra.mxu0 %v1413
    %1977 = vmatprep.subr.bf16.mxu0 %v1410
    %1978 = vmatpush2.bf16.msra.mxu0 %v1409
    %1979 = vmatprep.subr.bf16.mxu0 %v1406
    %1980 = vmatpush2.bf16.msra.mxu0 %v1405
    %1981 = vmatprep.mubr.bf16.mxu0 %v191
    %1982 = vmatmul.mubr.bf16.gmra.mxu0 %v190
    %v1983 = vpop.f32.mrf.mxu0
    %v1984 = vadd.f32 %v492, %v1983
    %v1985 = vpop.f32.mrf.mxu0
    %v1986 = vadd.f32 %v496, %v1985
    %v1987 = vpop.f32.mrf.mxu0
    %v1988 = vpop.f32.mrf.mxu0
    %1989 = vdwg.mxu0
    %1990 = vmatprep.subr.bf16.mxu0 %v1466
    %1991 = vmatpush1.bf16.msra.mxu0 %v1465
    %1992 = vmatprep.subr.bf16.mxu0 %v1462
    %1993 = vmatpush1.bf16.msra.mxu0 %v1461
    %1994 = vmatprep.subr.bf16.mxu0 %v1458
    %1995 = vmatpush1.bf16.msra.mxu0 %v1457
    %1996 = vmatprep.subr.bf16.mxu0 %v1454
    %1997 = vmatpush1.bf16.msra.mxu0 %v1453
    %1998 = vmatprep.subr.bf16.mxu0 %v1450
    %1999 = vmatpush1.bf16.msra.mxu0 %v1449
    %2000 = vmatprep.subr.bf16.mxu0 %v1446
    %2001 = vmatpush1.bf16.msra.mxu0 %v1445
    %2002 = vmatprep.subr.bf16.mxu0 %v1442
    %2003 = vmatpush1.bf16.msra.mxu0 %v1441
    %2004 = vmatprep.subr.bf16.mxu0 %v1438
    %2005 = vmatpush1.bf16.msra.mxu0 %v1437
    %2006 = vmatprep.subr.bf16.mxu0 %v1498
    %2007 = vmatpush2.bf16.msra.mxu0 %v1497
    %2008 = vmatprep.subr.bf16.mxu0 %v1494
    %2009 = vmatpush2.bf16.msra.mxu0 %v1493
    %2010 = vmatprep.subr.bf16.mxu0 %v1490
    %2011 = vmatpush2.bf16.msra.mxu0 %v1489
    %2012 = vmatprep.subr.bf16.mxu0 %v1486
    %2013 = vmatpush2.bf16.msra.mxu0 %v1485
    %2014 = vmatprep.subr.bf16.mxu0 %v1482
    %2015 = vmatpush2.bf16.msra.mxu0 %v1481
    %2016 = vmatprep.subr.bf16.mxu0 %v1478
    %2017 = vmatpush2.bf16.msra.mxu0 %v1477
    %2018 = vmatprep.subr.bf16.mxu0 %v1474
    %2019 = vmatpush2.bf16.msra.mxu0 %v1473
    %2020 = vmatprep.subr.bf16.mxu0 %v1470
    %2021 = vmatpush2.bf16.msra.mxu0 %v1469
    %2022 = vmatprep.mubr.bf16.mxu0 %v193
    %2023 = vmatmul.mubr.bf16.gmra.mxu0 %v192
    %v2024 = vpop.f32.mrf.mxu0
    %v2025 = vadd.f32 %v1984, %v2024
    %v2026 = vpop.f32.mrf.mxu0
    %v2027 = vadd.f32 %v1986, %v2026
    %v2028 = vpop.f32.mrf.mxu0
    %v2029 = vpop.f32.mrf.mxu0
    %2030 = vdwg.mxu0
    %2031 = vmatprep.subr.bf16.mxu0 %v1530
    %2032 = vmatpush1.bf16.msra.mxu0 %v1529
    %2033 = vmatprep.subr.bf16.mxu0 %v1526
    %2034 = vmatpush1.bf16.msra.mxu0 %v1525
    %2035 = vmatprep.subr.bf16.mxu0 %v1522
    %2036 = vmatpush1.bf16.msra.mxu0 %v1521
    %2037 = vmatprep.subr.bf16.mxu0 %v1518
    %2038 = vmatpush1.bf16.msra.mxu0 %v1517
    %2039 = vmatprep.subr.bf16.mxu0 %v1514
    %2040 = vmatpush1.bf16.msra.mxu0 %v1513
    %2041 = vmatprep.subr.bf16.mxu0 %v1510
    %2042 = vmatpush1.bf16.msra.mxu0 %v1509
    %2043 = vmatprep.subr.bf16.mxu0 %v1506
    %2044 = vmatpush1.bf16.msra.mxu0 %v1505
    %2045 = vmatprep.subr.bf16.mxu0 %v1502
    %2046 = vmatpush1.bf16.msra.mxu0 %v1501
    %2047 = vmatprep.subr.bf16.mxu0 %v1562
    %2048 = vmatpush2.bf16.msra.mxu0 %v1561
    %2049 = vmatprep.subr.bf16.mxu0 %v1558
    %2050 = vmatpush2.bf16.msra.mxu0 %v1557
    %2051 = vmatprep.subr.bf16.mxu0 %v1554
    %2052 = vmatpush2.bf16.msra.mxu0 %v1553
    %2053 = vmatprep.subr.bf16.mxu0 %v1550
    %2054 = vmatpush2.bf16.msra.mxu0 %v1549
    %2055 = vmatprep.subr.bf16.mxu0 %v1546
    %2056 = vmatpush2.bf16.msra.mxu0 %v1545
    %2057 = vmatprep.subr.bf16.mxu0 %v1542
    %2058 = vmatpush2.bf16.msra.mxu0 %v1541
    %2059 = vmatprep.subr.bf16.mxu0 %v1538
    %2060 = vmatpush2.bf16.msra.mxu0 %v1537
    %2061 = vmatprep.subr.bf16.mxu0 %v1534
    %2062 = vmatpush2.bf16.msra.mxu0 %v1533
    %2063 = vmatprep.mubr.bf16.mxu0 %v195
    %2064 = vmatmul.mubr.bf16.gmra.mxu0 %v194
    %v2065 = vpop.f32.mrf.mxu0
    %v2066 = vadd.f32 %v2025, %v2065
    %v2067 = vpop.f32.mrf.mxu0
    %v2068 = vadd.f32 %v2027, %v2067
    %v2069 = vpop.f32.mrf.mxu0
    %v2070 = vpop.f32.mrf.mxu0
    %2071 = vdwg.mxu0
    %2072 = vmatprep.subr.bf16.mxu0 %v1594
    %2073 = vmatpush1.bf16.msra.mxu0 %v1593
    %2074 = vmatprep.subr.bf16.mxu0 %v1590
    %2075 = vmatpush1.bf16.msra.mxu0 %v1589
    %2076 = vmatprep.subr.bf16.mxu0 %v1586
    %2077 = vmatpush1.bf16.msra.mxu0 %v1585
    %2078 = vmatprep.subr.bf16.mxu0 %v1582
    %2079 = vmatpush1.bf16.msra.mxu0 %v1581
    %2080 = vmatprep.subr.bf16.mxu0 %v1578
    %2081 = vmatpush1.bf16.msra.mxu0 %v1577
    %2082 = vmatprep.subr.bf16.mxu0 %v1574
    %2083 = vmatpush1.bf16.msra.mxu0 %v1573
    %2084 = vmatprep.subr.bf16.mxu0 %v1570
    %2085 = vmatpush1.bf16.msra.mxu0 %v1569
    %2086 = vmatprep.subr.bf16.mxu0 %v1566
    %2087 = vmatpush1.bf16.msra.mxu0 %v1565
    %2088 = vmatprep.subr.bf16.mxu0 %v1626
    %2089 = vmatpush2.bf16.msra.mxu0 %v1625
    %2090 = vmatprep.subr.bf16.mxu0 %v1622
    %2091 = vmatpush2.bf16.msra.mxu0 %v1621
    %2092 = vmatprep.subr.bf16.mxu0 %v1618
    %2093 = vmatpush2.bf16.msra.mxu0 %v1617
    %2094 = vmatprep.subr.bf16.mxu0 %v1614
    %2095 = vmatpush2.bf16.msra.mxu0 %v1613
    %2096 = vmatprep.subr.bf16.mxu0 %v1610
    %2097 = vmatpush2.bf16.msra.mxu0 %v1609
    %2098 = vmatprep.subr.bf16.mxu0 %v1606
    %2099 = vmatpush2.bf16.msra.mxu0 %v1605
    %2100 = vmatprep.subr.bf16.mxu0 %v1602
    %2101 = vmatpush2.bf16.msra.mxu0 %v1601
    %2102 = vmatprep.subr.bf16.mxu0 %v1598
    %2103 = vmatpush2.bf16.msra.mxu0 %v1597
    %2104 = vmatprep.mubr.bf16.mxu0 %v197
    %2105 = vmatmul.mubr.bf16.gmra.mxu0 %v196
    %v2106 = vpop.f32.mrf.mxu0
    %v2107 = vadd.f32 %v2066, %v2106
    %v2108 = vpop.f32.mrf.mxu0
    %v2109 = vadd.f32 %v2068, %v2108
    %v2110 = vpop.f32.mrf.mxu0
    %v2111 = vpop.f32.mrf.mxu0
    %2112 = vdwg.mxu0
    %2113 = vmatprep.subr.bf16.mxu0 %v1658
    %2114 = vmatpush1.bf16.msra.mxu0 %v1657
    %2115 = vmatprep.subr.bf16.mxu0 %v1654
    %2116 = vmatpush1.bf16.msra.mxu0 %v1653
    %2117 = vmatprep.subr.bf16.mxu0 %v1650
    %2118 = vmatpush1.bf16.msra.mxu0 %v1649
    %2119 = vmatprep.subr.bf16.mxu0 %v1646
    %2120 = vmatpush1.bf16.msra.mxu0 %v1645
    %2121 = vmatprep.subr.bf16.mxu0 %v1642
    %2122 = vmatpush1.bf16.msra.mxu0 %v1641
    %2123 = vmatprep.subr.bf16.mxu0 %v1638
    %2124 = vmatpush1.bf16.msra.mxu0 %v1637
    %2125 = vmatprep.subr.bf16.mxu0 %v1634
    %2126 = vmatpush1.bf16.msra.mxu0 %v1633
    %2127 = vmatprep.subr.bf16.mxu0 %v1630
    %2128 = vmatpush1.bf16.msra.mxu0 %v1629
    %2129 = vmatprep.subr.bf16.mxu0 0
    %2130 = vmatpush2.bf16.msra.mxu0 0
    %2131 = vmatprep.subr.bf16.mxu0 0
    %2132 = vmatpush2.bf16.msra.mxu0 0
    %2133 = vmatprep.subr.bf16.mxu0 0
    %2134 = vmatpush2.bf16.msra.mxu0 0
    %2135 = vmatprep.subr.bf16.mxu0 0
    %2136 = vmatpush2.bf16.msra.mxu0 0
    %2137 = vmatprep.subr.bf16.mxu0 0
    %2138 = vmatpush2.bf16.msra.mxu0 0
    %2139 = vmatprep.subr.bf16.mxu0 0
    %2140 = vmatpush2.bf16.msra.mxu0 0
    %2141 = vmatprep.subr.bf16.mxu0 0
    %2142 = vmatpush2.bf16.msra.mxu0 0
    %2143 = vmatprep.subr.bf16.mxu0 0
    %2144 = vmatpush2.bf16.msra.mxu0 0
    %2145 = vmatprep.mubr.bf16.mxu0 0
    %2146 = vmatmul.mubr.bf16.gmra.mxu0 %v198
    %v2147 = vpop.f32.mrf.mxu0
    %v2148 = vadd.f32 %v2107, %v2147
    %v2149 = vpop.f32.mrf.mxu0
    %v2150 = vadd.f32 %v2109, %v2149
    %v2151 = vpop.f32.mrf.mxu0
    %v2152 = vpop.f32.mrf.mxu0
    %2153 = vdwg.mxu0
    %2154 = vmatprep.subr.bf16.mxu0 %v1404
    %2155 = vmatpush1.bf16.msra.mxu0 %v1403
    %2156 = vmatprep.subr.bf16.mxu0 %v1400
    %2157 = vmatpush1.bf16.msra.mxu0 %v1399
    %2158 = vmatprep.subr.bf16.mxu0 %v1396
    %2159 = vmatpush1.bf16.msra.mxu0 %v1395
    %2160 = vmatprep.subr.bf16.mxu0 %v1392
    %2161 = vmatpush1.bf16.msra.mxu0 %v1391
    %2162 = vmatprep.subr.bf16.mxu0 %v1388
    %2163 = vmatpush1.bf16.msra.mxu0 %v1387
    %2164 = vmatprep.subr.bf16.mxu0 %v1384
    %2165 = vmatpush1.bf16.msra.mxu0 %v1383
    %2166 = vmatprep.subr.bf16.mxu0 %v1380
    %2167 = vmatpush1.bf16.msra.mxu0 %v1379
    %2168 = vmatprep.subr.bf16.mxu0 %v1376
    %2169 = vmatpush1.bf16.msra.mxu0 %v1375
    %2170 = vmatprep.subr.bf16.mxu0 %v1436
    %2171 = vmatpush2.bf16.msra.mxu0 %v1435
    %2172 = vmatprep.subr.bf16.mxu0 %v1432
    %2173 = vmatpush2.bf16.msra.mxu0 %v1431
    %2174 = vmatprep.subr.bf16.mxu0 %v1428
    %2175 = vmatpush2.bf16.msra.mxu0 %v1427
    %2176 = vmatprep.subr.bf16.mxu0 %v1424
    %2177 = vmatpush2.bf16.msra.mxu0 %v1423
    %2178 = vmatprep.subr.bf16.mxu0 %v1420
    %2179 = vmatpush2.bf16.msra.mxu0 %v1419
    %2180 = vmatprep.subr.bf16.mxu0 %v1416
    %2181 = vmatpush2.bf16.msra.mxu0 %v1415
    %2182 = vmatprep.subr.bf16.mxu0 %v1412
    %2183 = vmatpush2.bf16.msra.mxu0 %v1411
    %2184 = vmatprep.subr.bf16.mxu0 %v1408
    %2185 = vmatpush2.bf16.msra.mxu0 %v1407
    %2186 = vmatprep.mubr.bf16.mxu0 %v191
    %2187 = vmatmul.mubr.bf16.gmra.mxu0 %v190
    %v2188 = vpop.f32.mrf.mxu0
    %v2189 = vadd.f32 %v500, %v2188
    %v2190 = vpop.f32.mrf.mxu0
    %v2191 = vadd.f32 %v504, %v2190
    %v2192 = vpop.f32.mrf.mxu0
    %v2193 = vpop.f32.mrf.mxu0
    %2194 = vdwg.mxu0
    %2195 = vmatprep.subr.bf16.mxu0 %v1468
    %2196 = vmatpush1.bf16.msra.mxu0 %v1467
    %2197 = vmatprep.subr.bf16.mxu0 %v1464
    %2198 = vmatpush1.bf16.msra.mxu0 %v1463
    %2199 = vmatprep.subr.bf16.mxu0 %v1460
    %2200 = vmatpush1.bf16.msra.mxu0 %v1459
    %2201 = vmatprep.subr.bf16.mxu0 %v1456
    %2202 = vmatpush1.bf16.msra.mxu0 %v1455
    %2203 = vmatprep.subr.bf16.mxu0 %v1452
    %2204 = vmatpush1.bf16.msra.mxu0 %v1451
    %2205 = vmatprep.subr.bf16.mxu0 %v1448
    %2206 = vmatpush1.bf16.msra.mxu0 %v1447
    %2207 = vmatprep.subr.bf16.mxu0 %v1444
    %2208 = vmatpush1.bf16.msra.mxu0 %v1443
    %2209 = vmatprep.subr.bf16.mxu0 %v1440
    %2210 = vmatpush1.bf16.msra.mxu0 %v1439
    %2211 = vmatprep.subr.bf16.mxu0 %v1500
    %2212 = vmatpush2.bf16.msra.mxu0 %v1499
    %2213 = vmatprep.subr.bf16.mxu0 %v1496
    %2214 = vmatpush2.bf16.msra.mxu0 %v1495
    %2215 = vmatprep.subr.bf16.mxu0 %v1492
    %2216 = vmatpush2.bf16.msra.mxu0 %v1491
    %2217 = vmatprep.subr.bf16.mxu0 %v1488
    %2218 = vmatpush2.bf16.msra.mxu0 %v1487
    %2219 = vmatprep.subr.bf16.mxu0 %v1484
    %2220 = vmatpush2.bf16.msra.mxu0 %v1483
    %2221 = vmatprep.subr.bf16.mxu0 %v1480
    %2222 = vmatpush2.bf16.msra.mxu0 %v1479
    %2223 = vmatprep.subr.bf16.mxu0 %v1476
    %2224 = vmatpush2.bf16.msra.mxu0 %v1475
    %2225 = vmatprep.subr.bf16.mxu0 %v1472
    %2226 = vmatpush2.bf16.msra.mxu0 %v1471
    %2227 = vmatprep.mubr.bf16.mxu0 %v193
    %2228 = vmatmul.mubr.bf16.gmra.mxu0 %v192
    %v2229 = vpop.f32.mrf.mxu0
    %v2230 = vadd.f32 %v2189, %v2229
    %v2231 = vpop.f32.mrf.mxu0
    %v2232 = vadd.f32 %v2191, %v2231
    %v2233 = vpop.f32.mrf.mxu0
    %v2234 = vpop.f32.mrf.mxu0
    %2235 = vdwg.mxu0
    %2236 = vmatprep.subr.bf16.mxu0 %v1532
    %2237 = vmatpush1.bf16.msra.mxu0 %v1531
    %2238 = vmatprep.subr.bf16.mxu0 %v1528
    %2239 = vmatpush1.bf16.msra.mxu0 %v1527
    %2240 = vmatprep.subr.bf16.mxu0 %v1524
    %2241 = vmatpush1.bf16.msra.mxu0 %v1523
    %2242 = vmatprep.subr.bf16.mxu0 %v1520
    %2243 = vmatpush1.bf16.msra.mxu0 %v1519
    %2244 = vmatprep.subr.bf16.mxu0 %v1516
    %2245 = vmatpush1.bf16.msra.mxu0 %v1515
    %2246 = vmatprep.subr.bf16.mxu0 %v1512
    %2247 = vmatpush1.bf16.msra.mxu0 %v1511
    %2248 = vmatprep.subr.bf16.mxu0 %v1508
    %2249 = vmatpush1.bf16.msra.mxu0 %v1507
    %2250 = vmatprep.subr.bf16.mxu0 %v1504
    %2251 = vmatpush1.bf16.msra.mxu0 %v1503
    %2252 = vmatprep.subr.bf16.mxu0 %v1564
    %2253 = vmatpush2.bf16.msra.mxu0 %v1563
    %2254 = vmatprep.subr.bf16.mxu0 %v1560
    %2255 = vmatpush2.bf16.msra.mxu0 %v1559
    %2256 = vmatprep.subr.bf16.mxu0 %v1556
    %2257 = vmatpush2.bf16.msra.mxu0 %v1555
    %2258 = vmatprep.subr.bf16.mxu0 %v1552
    %2259 = vmatpush2.bf16.msra.mxu0 %v1551
    %2260 = vmatprep.subr.bf16.mxu0 %v1548
    %2261 = vmatpush2.bf16.msra.mxu0 %v1547
    %2262 = vmatprep.subr.bf16.mxu0 %v1544
    %2263 = vmatpush2.bf16.msra.mxu0 %v1543
    %2264 = vmatprep.subr.bf16.mxu0 %v1540
    %2265 = vmatpush2.bf16.msra.mxu0 %v1539
    %2266 = vmatprep.subr.bf16.mxu0 %v1536
    %2267 = vmatpush2.bf16.msra.mxu0 %v1535
    %2268 = vmatprep.mubr.bf16.mxu0 %v195
    %2269 = vmatmul.mubr.bf16.gmra.mxu0 %v194
    %v2270 = vpop.f32.mrf.mxu0
    %v2271 = vadd.f32 %v2230, %v2270
    %v2272 = vpop.f32.mrf.mxu0
    %v2273 = vadd.f32 %v2232, %v2272
    %v2274 = vpop.f32.mrf.mxu0
    %v2275 = vpop.f32.mrf.mxu0
    %2276 = vdwg.mxu0
    %2277 = vmatprep.subr.bf16.mxu0 %v1596
    %2278 = vmatpush1.bf16.msra.mxu0 %v1595
    %2279 = vmatprep.subr.bf16.mxu0 %v1592
    %2280 = vmatpush1.bf16.msra.mxu0 %v1591
    %2281 = vmatprep.subr.bf16.mxu0 %v1588
    %2282 = vmatpush1.bf16.msra.mxu0 %v1587
    %2283 = vmatprep.subr.bf16.mxu0 %v1584
    %2284 = vmatpush1.bf16.msra.mxu0 %v1583
    %2285 = vmatprep.subr.bf16.mxu0 %v1580
    %2286 = vmatpush1.bf16.msra.mxu0 %v1579
    %2287 = vmatprep.subr.bf16.mxu0 %v1576
    %2288 = vmatpush1.bf16.msra.mxu0 %v1575
    %2289 = vmatprep.subr.bf16.mxu0 %v1572
    %2290 = vmatpush1.bf16.msra.mxu0 %v1571
    %2291 = vmatprep.subr.bf16.mxu0 %v1568
    %2292 = vmatpush1.bf16.msra.mxu0 %v1567
    %2293 = vmatprep.subr.bf16.mxu0 %v1628
    %2294 = vmatpush2.bf16.msra.mxu0 %v1627
    %2295 = vmatprep.subr.bf16.mxu0 %v1624
    %2296 = vmatpush2.bf16.msra.mxu0 %v1623
    %2297 = vmatprep.subr.bf16.mxu0 %v1620
    %2298 = vmatpush2.bf16.msra.mxu0 %v1619
    %2299 = vmatprep.subr.bf16.mxu0 %v1616
    %2300 = vmatpush2.bf16.msra.mxu0 %v1615
    %2301 = vmatprep.subr.bf16.mxu0 %v1612
    %2302 = vmatpush2.bf16.msra.mxu0 %v1611
    %2303 = vmatprep.subr.bf16.mxu0 %v1608
    %2304 = vmatpush2.bf16.msra.mxu0 %v1607
    %2305 = vmatprep.subr.bf16.mxu0 %v1604
    %2306 = vmatpush2.bf16.msra.mxu0 %v1603
    %2307 = vmatprep.subr.bf16.mxu0 %v1600
    %2308 = vmatpush2.bf16.msra.mxu0 %v1599
    %2309 = vmatprep.mubr.bf16.mxu0 %v197
    %2310 = vmatmul.mubr.bf16.gmra.mxu0 %v196
    %v2311 = vpop.f32.mrf.mxu0
    %v2312 = vadd.f32 %v2271, %v2311
    %v2313 = vpop.f32.mrf.mxu0
    %v2314 = vadd.f32 %v2273, %v2313
    %v2315 = vpop.f32.mrf.mxu0
    %v2316 = vpop.f32.mrf.mxu0
    %2317 = vdwg.mxu0
    %2318 = vmatprep.subr.bf16.mxu0 %v1660
    %2319 = vmatpush1.bf16.msra.mxu0 %v1659
    %2320 = vmatprep.subr.bf16.mxu0 %v1656
    %2321 = vmatpush1.bf16.msra.mxu0 %v1655
    %2322 = vmatprep.subr.bf16.mxu0 %v1652
    %2323 = vmatpush1.bf16.msra.mxu0 %v1651
    %2324 = vmatprep.subr.bf16.mxu0 %v1648
    %2325 = vmatpush1.bf16.msra.mxu0 %v1647
    %2326 = vmatprep.subr.bf16.mxu0 %v1644
    %2327 = vmatpush1.bf16.msra.mxu0 %v1643
    %2328 = vmatprep.subr.bf16.mxu0 %v1640
    %2329 = vmatpush1.bf16.msra.mxu0 %v1639
    %2330 = vmatprep.subr.bf16.mxu0 %v1636
    %2331 = vmatpush1.bf16.msra.mxu0 %v1635
    %2332 = vmatprep.subr.bf16.mxu0 %v1632
    %2333 = vmatpush1.bf16.msra.mxu0 %v1631
    %2334 = vmatprep.subr.bf16.mxu0 0
    %2335 = vmatpush2.bf16.msra.mxu0 0
    %2336 = vmatprep.subr.bf16.mxu0 0
    %2337 = vmatpush2.bf16.msra.mxu0 0
    %2338 = vmatprep.subr.bf16.mxu0 0
    %2339 = vmatpush2.bf16.msra.mxu0 0
    %2340 = vmatprep.subr.bf16.mxu0 0
    %2341 = vmatpush2.bf16.msra.mxu0 0
    %2342 = vmatprep.subr.bf16.mxu0 0
    %2343 = vmatpush2.bf16.msra.mxu0 0
    %2344 = vmatprep.subr.bf16.mxu0 0
    %2345 = vmatpush2.bf16.msra.mxu0 0
    %2346 = vmatprep.subr.bf16.mxu0 0
    %2347 = vmatpush2.bf16.msra.mxu0 0
    %2348 = vmatprep.subr.bf16.mxu0 0
    %2349 = vmatpush2.bf16.msra.mxu0 0
    %2350 = vmatprep.mubr.bf16.mxu0 0
    %2351 = vmatmul.mubr.bf16.gmra.mxu0 %v198
    %v2352 = vpop.f32.mrf.mxu0
    %v2353 = vadd.f32 %v2312, %v2352
    %v2354 = vpop.f32.mrf.mxu0
    %v2355 = vadd.f32 %v2314, %v2354
    %v2356 = vpop.f32.mrf.mxu0
    %v2357 = vpop.f32.mrf.mxu0
    %2358 = vdwg.mxu0
    %v2359 = vmax.f32 %v2148, 0.0
    %v2360 = vmax.f32 %v2150, 0.0
    %v2361 = vmax.f32 %v2353, 0.0
    %v2362 = vmax.f32 %v2355, 0.0
    %v2363 = vpack.c.bf16 %v2359, %v2359
    %v2364 = vpack.c.bf16 %v2360, %v2360
    %v2365 = vpack.c.bf16 %v2361, %v2361
    %v2366 = vpack.c.bf16 %v2362, %v2362
    %v2367 = vld [vmem:[#allocation8] sm:$0xff]
    %v2368 = vld [vmem:[#allocation8 + $0x8] sm:$0xf]
    %v2369 = vld [vmem:[#allocation8 + $0xc] sm:$0xff]
    %v2370 = vld [vmem:[#allocation8 + $0x14] sm:$0xf]
    %v2371 = vld [vmem:[#allocation8 + $0x18] sm:$0xff]
    %v2372 = vld [vmem:[#allocation8 + $0x20] sm:$0xf]
    %v2373 = vld [vmem:[#allocation8 + $0x24] sm:$0xff]
    %v2374 = vld [vmem:[#allocation8 + $0x2c] sm:$0xf]
    %v2375 = vld [vmem:[#allocation8 + $0x30] sm:$0xff]
    %v2376 = vld [vmem:[#allocation8 + $0x38] sm:$0xf]
    %v2377 = vld [vmem:[#allocation8 + $0x3c] sm:$0xff]
    %v2378 = vld [vmem:[#allocation8 + $0x44] sm:$0xf]
    %v2379 = vld [vmem:[#allocation8 + $0x48] sm:$0xff]
    %v2380 = vld [vmem:[#allocation8 + $0x50] sm:$0xf]
    %v2381 = vld [vmem:[#allocation8 + $0x54] sm:$0xff]
    %v2382 = vld [vmem:[#allocation8 + $0x5c] sm:$0xf]
    %v2383 = vld [vmem:[#allocation8 + $0x60] sm:$0xff]
    %v2384 = vld [vmem:[#allocation8 + $0x68] sm:$0xf]
    %v2385 = vld [vmem:[#allocation8 + $0x6c] sm:$0xff]
    %v2386 = vld [vmem:[#allocation8 + $0x74] sm:$0xf]
    %v2387 = vld [vmem:[#allocation8 + $0x78] sm:$0xff]
    %v2388 = vld [vmem:[#allocation8 + $0x80] sm:$0xf]
    %v2389 = vld [vmem:[#allocation8 + $0x84] sm:$0xff]
    %v2390 = vld [vmem:[#allocation8 + $0x8c] sm:$0xf]
    %v2391 = vld [vmem:[#allocation8 + $0x90] sm:$0xff]
    %v2392 = vld [vmem:[#allocation8 + $0x98] sm:$0xf]
    %v2393 = vld [vmem:[#allocation8 + $0x9c] sm:$0xff]
    %v2394 = vld [vmem:[#allocation8 + $0xa4] sm:$0xf]
    %v2395 = vld [vmem:[#allocation8 + $0xa8] sm:$0xff]
    %v2396 = vld [vmem:[#allocation8 + $0xb0] sm:$0xf]
    %v2397 = vld [vmem:[#allocation8 + $0xb4] sm:$0xff]
    %v2398 = vld [vmem:[#allocation8 + $0xbc] sm:$0xf]
    %v2399 = vld [vmem:[#allocation8 + $0xc0] sm:$0xff]
    %v2400 = vld [vmem:[#allocation8 + $0xc8] sm:$0xf]
    %v2401 = vld [vmem:[#allocation8 + $0xcc] sm:$0xff]
    %v2402 = vld [vmem:[#allocation8 + $0xd4] sm:$0xf]
    %v2403 = vld [vmem:[#allocation8 + $0xd8] sm:$0xff]
    %v2404 = vld [vmem:[#allocation8 + $0xe0] sm:$0xf]
    %v2405 = vld [vmem:[#allocation8 + $0xe4] sm:$0xff]
    %v2406 = vld [vmem:[#allocation8 + $0xec] sm:$0xf]
    %v2407 = vld [vmem:[#allocation8 + $0xf0] sm:$0xff]
    %v2408 = vld [vmem:[#allocation8 + $0xf8] sm:$0xf]
    %v2409 = vld [vmem:[#allocation8 + $0xfc] sm:$0xff]
    %v2410 = vld [vmem:[#allocation8 + $0x104] sm:$0xf]
    %v2411 = vld [vmem:[#allocation8 + $0x108] sm:$0xff]
    %v2412 = vld [vmem:[#allocation8 + $0x110] sm:$0xf]
    %v2413 = vld [vmem:[#allocation8 + $0x114] sm:$0xff]
    %v2414 = vld [vmem:[#allocation8 + $0x11c] sm:$0xf]
    %v2415 = vld [vmem:[#allocation8 + $0x120] sm:$0xff]
    %v2416 = vld [vmem:[#allocation8 + $0x128] sm:$0xf]
    %v2417 = vld [vmem:[#allocation8 + $0x12c] sm:$0xff]
    %v2418 = vld [vmem:[#allocation8 + $0x134] sm:$0xf]
    %v2419 = vld [vmem:[#allocation8 + $0x138] sm:$0xff]
    %v2420 = vld [vmem:[#allocation8 + $0x140] sm:$0xf]
    %v2421 = vld [vmem:[#allocation8 + $0x144] sm:$0xff]
    %v2422 = vld [vmem:[#allocation8 + $0x14c] sm:$0xf]
    %v2423 = vld [vmem:[#allocation8 + $0x150] sm:$0xff]
    %v2424 = vld [vmem:[#allocation8 + $0x158] sm:$0xf]
    %v2425 = vld [vmem:[#allocation8 + $0x15c] sm:$0xff]
    %v2426 = vld [vmem:[#allocation8 + $0x164] sm:$0xf]
    %v2427 = vld [vmem:[#allocation8 + $0x168] sm:$0xff]
    %v2428 = vld [vmem:[#allocation8 + $0x170] sm:$0xf]
    %v2429 = vld [vmem:[#allocation8 + $0x174] sm:$0xff]
    %v2430 = vld [vmem:[#allocation8 + $0x17c] sm:$0xf]
    %v2431 = vld [vmem:[#allocation8 + $0x180] sm:$0xff]
    %v2432 = vld [vmem:[#allocation8 + $0x188] sm:$0xf]
    %v2433 = vld [vmem:[#allocation8 + $0x18c] sm:$0xff]
    %v2434 = vld [vmem:[#allocation8 + $0x194] sm:$0xf]
    %v2435 = vld [vmem:[#allocation8 + $0x198] sm:$0xff]
    %v2436 = vld [vmem:[#allocation8 + $0x1a0] sm:$0xf]
    %v2437 = vld [vmem:[#allocation8 + $0x1a4] sm:$0xff]
    %v2438 = vld [vmem:[#allocation8 + $0x1ac] sm:$0xf]
    %v2439 = vld [vmem:[#allocation8 + $0x1b0] sm:$0xff]
    %v2440 = vld [vmem:[#allocation8 + $0x1b8] sm:$0xf]
    %v2441 = vld [vmem:[#allocation8 + $0x1bc] sm:$0xff]
    %v2442 = vld [vmem:[#allocation8 + $0x1c4] sm:$0xf]
    %v2443 = vld [vmem:[#allocation8 + $0x1c8] sm:$0xff]
    %v2444 = vld [vmem:[#allocation8 + $0x1d0] sm:$0xf]
    %v2445 = vld [vmem:[#allocation8 + $0x1d4] sm:$0xff]
    %v2446 = vld [vmem:[#allocation8 + $0x1dc] sm:$0xf]
    %v2447 = vld [vmem:[#allocation8 + $0x1e0] sm:$0xff]
    %v2448 = vld [vmem:[#allocation8 + $0x1e8] sm:$0xf]
    %v2449 = vld [vmem:[#allocation8 + $0x1ec] sm:$0xff]
    %v2450 = vld [vmem:[#allocation8 + $0x1f4] sm:$0xf]
    %v2451 = vld [vmem:[#allocation8 + $0x1f8] sm:$0xff]
    %v2452 = vld [vmem:[#allocation8 + $0x200] sm:$0xf]
    %v2453 = vld [vmem:[#allocation8 + $0x204] sm:$0xff]
    %v2454 = vld [vmem:[#allocation8 + $0x20c] sm:$0xf]
    %v2455 = vld [vmem:[#allocation8 + $0x210] sm:$0xff]
    %v2456 = vld [vmem:[#allocation8 + $0x218] sm:$0xf]
    %v2457 = vld [vmem:[#allocation8 + $0x21c] sm:$0xff]
    %v2458 = vld [vmem:[#allocation8 + $0x224] sm:$0xf]
    %v2459 = vld [vmem:[#allocation8 + $0x228] sm:$0xff]
    %v2460 = vld [vmem:[#allocation8 + $0x230] sm:$0xf]
    %v2461 = vld [vmem:[#allocation8 + $0x234] sm:$0xff]
    %v2462 = vld [vmem:[#allocation8 + $0x23c] sm:$0xf]
    %v2463 = vld [vmem:[#allocation8 + $0x240] sm:$0xff]
    %v2464 = vld [vmem:[#allocation8 + $0x248] sm:$0xf]
    %v2465 = vld [vmem:[#allocation8 + $0x24c] sm:$0xff]
    %v2466 = vld [vmem:[#allocation8 + $0x254] sm:$0xf]
    %v2467 = vld [vmem:[#allocation8 + $0x258] sm:$0xff]
    %v2468 = vld [vmem:[#allocation8 + $0x260] sm:$0xf]
    %v2469 = vld [vmem:[#allocation8 + $0x264] sm:$0xff]
    %v2470 = vld [vmem:[#allocation8 + $0x26c] sm:$0xf]
    %v2471 = vld [vmem:[#allocation8 + $0x270] sm:$0xff]
    %v2472 = vld [vmem:[#allocation8 + $0x278] sm:$0xf]
    %v2473 = vld [vmem:[#allocation8 + $0x27c] sm:$0xff]
    %v2474 = vld [vmem:[#allocation8 + $0x284] sm:$0xf]
    %v2475 = vld [vmem:[#allocation8 + $0x288] sm:$0xff]
    %v2476 = vld [vmem:[#allocation8 + $0x290] sm:$0xf]
    %v2477 = vld [vmem:[#allocation8 + $0x294] sm:$0xff]
    %v2478 = vld [vmem:[#allocation8 + $0x29c] sm:$0xf]
    %v2479 = vld [vmem:[#allocation8 + $0x2a0] sm:$0xff]
    %v2480 = vld [vmem:[#allocation8 + $0x2a8] sm:$0xf]
    %v2481 = vld [vmem:[#allocation8 + $0x2ac] sm:$0xff]
    %v2482 = vld [vmem:[#allocation8 + $0x2b4] sm:$0xf]
    %v2483 = vld [vmem:[#allocation8 + $0x2b8] sm:$0xff]
    %v2484 = vld [vmem:[#allocation8 + $0x2c0] sm:$0xf]
    %v2485 = vld [vmem:[#allocation8 + $0x2c4] sm:$0xff]
    %v2486 = vld [vmem:[#allocation8 + $0x2cc] sm:$0xf]
    %v2487 = vld [vmem:[#allocation8 + $0x2d0] sm:$0xff]
    %v2488 = vld [vmem:[#allocation8 + $0x2d8] sm:$0xf]
    %v2489 = vld [vmem:[#allocation8 + $0x2dc] sm:$0xff]
    %v2490 = vld [vmem:[#allocation8 + $0x2e4] sm:$0xf]
    %v2491 = vld [vmem:[#allocation8 + $0x2e8] sm:$0xff]
    %v2492 = vld [vmem:[#allocation8 + $0x2f0] sm:$0xf]
    %v2493 = vld [vmem:[#allocation8 + $0x2f4] sm:$0xff]
    %v2494 = vld [vmem:[#allocation8 + $0x2fc] sm:$0xf]
    %v2495 = vld [vmem:[#allocation10] sm:$0x7]
    %v2497 = vlaneseq
    %v2498 = vshrl.u32 %v2497, 7
    %v2499 = vsub.s32 0, %v2498
    %v2500 = vrot.slane %v2495, %v2499
    %v2501 = vlaneseq
    %v2502 = vshrl.u32 %v2501, 7
    %v2503 = vsub.s32 1, %v2502
    %v2504 = vrot.slane %v2495, %v2503
    %v2505 = vlaneseq
    %v2506 = vshrl.u32 %v2505, 7
    %v2507 = vsub.s32 2, %v2506
    %v2508 = vrot.slane %v2495, %v2507
    %v2640 = vunpack.c.l.b16 %v2367
    %v2641 = vunpack.c.h.b16 %v2367
    %v2642 = vunpack.c.l.b16 %v2368
    %v2643 = vunpack.c.l.b16 %v2369
    %v2644 = vunpack.c.h.b16 %v2369
    %v2645 = vunpack.c.l.b16 %v2370
    %v2646 = vunpack.c.l.b16 %v2371
    %v2647 = vunpack.c.h.b16 %v2371
    %v2648 = vunpack.c.l.b16 %v2372
    %v2649 = vunpack.c.l.b16 %v2373
    %v2650 = vunpack.c.h.b16 %v2373
    %v2651 = vunpack.c.l.b16 %v2374
    %v2652 = vunpack.c.l.b16 %v2375
    %v2653 = vunpack.c.h.b16 %v2375
    %v2654 = vunpack.c.l.b16 %v2376
    %v2655 = vunpack.c.l.b16 %v2377
    %v2656 = vunpack.c.h.b16 %v2377
    %v2657 = vunpack.c.l.b16 %v2378
    %v2658 = vunpack.c.l.b16 %v2379
    %v2659 = vunpack.c.h.b16 %v2379
    %v2660 = vunpack.c.l.b16 %v2380
    %v2661 = vunpack.c.l.b16 %v2381
    %v2662 = vunpack.c.h.b16 %v2381
    %v2663 = vunpack.c.l.b16 %v2382
    %v2664 = vunpack.c.l.b16 %v2383
    %v2665 = vunpack.c.h.b16 %v2383
    %v2666 = vunpack.c.l.b16 %v2384
    %v2667 = vunpack.c.l.b16 %v2385
    %v2668 = vunpack.c.h.b16 %v2385
    %v2669 = vunpack.c.l.b16 %v2386
    %v2670 = vunpack.c.l.b16 %v2387
    %v2671 = vunpack.c.h.b16 %v2387
    %v2672 = vunpack.c.l.b16 %v2388
    %v2673 = vunpack.c.l.b16 %v2389
    %v2674 = vunpack.c.h.b16 %v2389
    %v2675 = vunpack.c.l.b16 %v2390
    %v2676 = vunpack.c.l.b16 %v2391
    %v2677 = vunpack.c.h.b16 %v2391
    %v2678 = vunpack.c.l.b16 %v2392
    %v2679 = vunpack.c.l.b16 %v2393
    %v2680 = vunpack.c.h.b16 %v2393
    %v2681 = vunpack.c.l.b16 %v2394
    %v2682 = vunpack.c.l.b16 %v2395
    %v2683 = vunpack.c.h.b16 %v2395
    %v2684 = vunpack.c.l.b16 %v2396
    %v2685 = vunpack.c.l.b16 %v2397
    %v2686 = vunpack.c.h.b16 %v2397
    %v2687 = vunpack.c.l.b16 %v2398
    %v2688 = vunpack.c.l.b16 %v2399
    %v2689 = vunpack.c.h.b16 %v2399
    %v2690 = vunpack.c.l.b16 %v2400
    %v2691 = vunpack.c.l.b16 %v2401
    %v2692 = vunpack.c.h.b16 %v2401
    %v2693 = vunpack.c.l.b16 %v2402
    %v2694 = vunpack.c.l.b16 %v2403
    %v2695 = vunpack.c.h.b16 %v2403
    %v2696 = vunpack.c.l.b16 %v2404
    %v2697 = vunpack.c.l.b16 %v2405
    %v2698 = vunpack.c.h.b16 %v2405
    %v2699 = vunpack.c.l.b16 %v2406
    %v2700 = vunpack.c.l.b16 %v2407
    %v2701 = vunpack.c.h.b16 %v2407
    %v2702 = vunpack.c.l.b16 %v2408
    %v2703 = vunpack.c.l.b16 %v2409
    %v2704 = vunpack.c.h.b16 %v2409
    %v2705 = vunpack.c.l.b16 %v2410
    %v2706 = vunpack.c.l.b16 %v2411
    %v2707 = vunpack.c.h.b16 %v2411
    %v2708 = vunpack.c.l.b16 %v2412
    %v2709 = vunpack.c.l.b16 %v2413
    %v2710 = vunpack.c.h.b16 %v2413
    %v2711 = vunpack.c.l.b16 %v2414
    %v2712 = vunpack.c.l.b16 %v2415
    %v2713 = vunpack.c.h.b16 %v2415
    %v2714 = vunpack.c.l.b16 %v2416
    %v2715 = vunpack.c.l.b16 %v2417
    %v2716 = vunpack.c.h.b16 %v2417
    %v2717 = vunpack.c.l.b16 %v2418
    %v2718 = vunpack.c.l.b16 %v2419
    %v2719 = vunpack.c.h.b16 %v2419
    %v2720 = vunpack.c.l.b16 %v2420
    %v2721 = vunpack.c.l.b16 %v2421
    %v2722 = vunpack.c.h.b16 %v2421
    %v2723 = vunpack.c.l.b16 %v2422
    %v2724 = vunpack.c.l.b16 %v2423
    %v2725 = vunpack.c.h.b16 %v2423
    %v2726 = vunpack.c.l.b16 %v2424
    %v2727 = vunpack.c.l.b16 %v2425
    %v2728 = vunpack.c.h.b16 %v2425
    %v2729 = vunpack.c.l.b16 %v2426
    %v2730 = vunpack.c.l.b16 %v2427
    %v2731 = vunpack.c.h.b16 %v2427
    %v2732 = vunpack.c.l.b16 %v2428
    %v2733 = vunpack.c.l.b16 %v2429
    %v2734 = vunpack.c.h.b16 %v2429
    %v2735 = vunpack.c.l.b16 %v2430
    %v2736 = vunpack.c.l.b16 %v2431
    %v2737 = vunpack.c.h.b16 %v2431
    %v2738 = vunpack.c.l.b16 %v2432
    %v2739 = vunpack.c.l.b16 %v2433
    %v2740 = vunpack.c.h.b16 %v2433
    %v2741 = vunpack.c.l.b16 %v2434
    %v2742 = vunpack.c.l.b16 %v2435
    %v2743 = vunpack.c.h.b16 %v2435
    %v2744 = vunpack.c.l.b16 %v2436
    %v2745 = vunpack.c.l.b16 %v2437
    %v2746 = vunpack.c.h.b16 %v2437
    %v2747 = vunpack.c.l.b16 %v2438
    %v2748 = vunpack.c.l.b16 %v2439
    %v2749 = vunpack.c.h.b16 %v2439
    %v2750 = vunpack.c.l.b16 %v2440
    %v2751 = vunpack.c.l.b16 %v2441
    %v2752 = vunpack.c.h.b16 %v2441
    %v2753 = vunpack.c.l.b16 %v2442
    %v2754 = vunpack.c.l.b16 %v2443
    %v2755 = vunpack.c.h.b16 %v2443
    %v2756 = vunpack.c.l.b16 %v2444
    %v2757 = vunpack.c.l.b16 %v2445
    %v2758 = vunpack.c.h.b16 %v2445
    %v2759 = vunpack.c.l.b16 %v2446
    %v2760 = vunpack.c.l.b16 %v2447
    %v2761 = vunpack.c.h.b16 %v2447
    %v2762 = vunpack.c.l.b16 %v2448
    %v2763 = vunpack.c.l.b16 %v2449
    %v2764 = vunpack.c.h.b16 %v2449
    %v2765 = vunpack.c.l.b16 %v2450
    %v2766 = vunpack.c.l.b16 %v2451
    %v2767 = vunpack.c.h.b16 %v2451
    %v2768 = vunpack.c.l.b16 %v2452
    %v2769 = vunpack.c.l.b16 %v2453
    %v2770 = vunpack.c.h.b16 %v2453
    %v2771 = vunpack.c.l.b16 %v2454
    %v2772 = vunpack.c.l.b16 %v2455
    %v2773 = vunpack.c.h.b16 %v2455
    %v2774 = vunpack.c.l.b16 %v2456
    %v2775 = vunpack.c.l.b16 %v2457
    %v2776 = vunpack.c.h.b16 %v2457
    %v2777 = vunpack.c.l.b16 %v2458
    %v2778 = vunpack.c.l.b16 %v2459
    %v2779 = vunpack.c.h.b16 %v2459
    %v2780 = vunpack.c.l.b16 %v2460
    %v2781 = vunpack.c.l.b16 %v2461
    %v2782 = vunpack.c.h.b16 %v2461
    %v2783 = vunpack.c.l.b16 %v2462
    %v2784 = vunpack.c.l.b16 %v2463
    %v2785 = vunpack.c.h.b16 %v2463
    %v2786 = vunpack.c.l.b16 %v2464
    %v2787 = vunpack.c.l.b16 %v2465
    %v2788 = vunpack.c.h.b16 %v2465
    %v2789 = vunpack.c.l.b16 %v2466
    %v2790 = vunpack.c.l.b16 %v2467
    %v2791 = vunpack.c.h.b16 %v2467
    %v2792 = vunpack.c.l.b16 %v2468
    %v2793 = vunpack.c.l.b16 %v2469
    %v2794 = vunpack.c.h.b16 %v2469
    %v2795 = vunpack.c.l.b16 %v2470
    %v2796 = vunpack.c.l.b16 %v2471
    %v2797 = vunpack.c.h.b16 %v2471
    %v2798 = vunpack.c.l.b16 %v2472
    %v2799 = vunpack.c.l.b16 %v2473
    %v2800 = vunpack.c.h.b16 %v2473
    %v2801 = vunpack.c.l.b16 %v2474
    %v2802 = vunpack.c.l.b16 %v2475
    %v2803 = vunpack.c.h.b16 %v2475
    %v2804 = vunpack.c.l.b16 %v2476
    %v2805 = vunpack.c.l.b16 %v2477
    %v2806 = vunpack.c.h.b16 %v2477
    %v2807 = vunpack.c.l.b16 %v2478
    %v2808 = vunpack.c.l.b16 %v2479
    %v2809 = vunpack.c.h.b16 %v2479
    %v2810 = vunpack.c.l.b16 %v2480
    %v2811 = vunpack.c.l.b16 %v2481
    %v2812 = vunpack.c.h.b16 %v2481
    %v2813 = vunpack.c.l.b16 %v2482
    %v2814 = vunpack.c.l.b16 %v2483
    %v2815 = vunpack.c.h.b16 %v2483
    %v2816 = vunpack.c.l.b16 %v2484
    %v2817 = vunpack.c.l.b16 %v2485
    %v2818 = vunpack.c.h.b16 %v2485
    %v2819 = vunpack.c.l.b16 %v2486
    %v2820 = vunpack.c.l.b16 %v2487
    %v2821 = vunpack.c.h.b16 %v2487
    %v2822 = vunpack.c.l.b16 %v2488
    %v2823 = vunpack.c.l.b16 %v2489
    %v2824 = vunpack.c.h.b16 %v2489
    %v2825 = vunpack.c.l.b16 %v2490
    %v2826 = vunpack.c.l.b16 %v2491
    %v2827 = vunpack.c.h.b16 %v2491
    %v2828 = vunpack.c.l.b16 %v2492
    %v2829 = vunpack.c.l.b16 %v2493
    %v2830 = vunpack.c.h.b16 %v2493
    %v2831 = vunpack.c.l.b16 %v2494
    %v2832 = vpack.c.b16 %v2643, %v2640
    %v2833 = vpack.c.b16 %v2644, %v2641
    %v2834 = vpack.c.b16 %v2645, %v2642
    %v2835 = vpack.c.b16 %v2649, %v2646
    %v2836 = vpack.c.b16 %v2650, %v2647
    %v2837 = vpack.c.b16 %v2651, %v2648
    %v2838 = vpack.c.b16 %v2655, %v2652
    %v2839 = vpack.c.b16 %v2656, %v2653
    %v2840 = vpack.c.b16 %v2657, %v2654
    %v2841 = vpack.c.b16 %v2661, %v2658
    %v2842 = vpack.c.b16 %v2662, %v2659
    %v2843 = vpack.c.b16 %v2663, %v2660
    %v2844 = vpack.c.b16 %v2667, %v2664
    %v2845 = vpack.c.b16 %v2668, %v2665
    %v2846 = vpack.c.b16 %v2669, %v2666
    %v2847 = vpack.c.b16 %v2673, %v2670
    %v2848 = vpack.c.b16 %v2674, %v2671
    %v2849 = vpack.c.b16 %v2675, %v2672
    %v2850 = vpack.c.b16 %v2679, %v2676
    %v2851 = vpack.c.b16 %v2680, %v2677
    %v2852 = vpack.c.b16 %v2681, %v2678
    %v2853 = vpack.c.b16 %v2685, %v2682
    %v2854 = vpack.c.b16 %v2686, %v2683
    %v2855 = vpack.c.b16 %v2687, %v2684
    %v2856 = vpack.c.b16 %v2691, %v2688
    %v2857 = vpack.c.b16 %v2692, %v2689
    %v2858 = vpack.c.b16 %v2693, %v2690
    %v2859 = vpack.c.b16 %v2697, %v2694
    %v2860 = vpack.c.b16 %v2698, %v2695
    %v2861 = vpack.c.b16 %v2699, %v2696
    %v2862 = vpack.c.b16 %v2703, %v2700
    %v2863 = vpack.c.b16 %v2704, %v2701
    %v2864 = vpack.c.b16 %v2705, %v2702
    %v2865 = vpack.c.b16 %v2709, %v2706
    %v2866 = vpack.c.b16 %v2710, %v2707
    %v2867 = vpack.c.b16 %v2711, %v2708
    %v2868 = vpack.c.b16 %v2715, %v2712
    %v2869 = vpack.c.b16 %v2716, %v2713
    %v2870 = vpack.c.b16 %v2717, %v2714
    %v2871 = vpack.c.b16 %v2721, %v2718
    %v2872 = vpack.c.b16 %v2722, %v2719
    %v2873 = vpack.c.b16 %v2723, %v2720
    %v2874 = vpack.c.b16 %v2727, %v2724
    %v2875 = vpack.c.b16 %v2728, %v2725
    %v2876 = vpack.c.b16 %v2729, %v2726
    %v2877 = vpack.c.b16 %v2733, %v2730
    %v2878 = vpack.c.b16 %v2734, %v2731
    %v2879 = vpack.c.b16 %v2735, %v2732
    %v2880 = vpack.c.b16 %v2739, %v2736
    %v2881 = vpack.c.b16 %v2740, %v2737
    %v2882 = vpack.c.b16 %v2741, %v2738
    %v2883 = vpack.c.b16 %v2745, %v2742
    %v2884 = vpack.c.b16 %v2746, %v2743
    %v2885 = vpack.c.b16 %v2747, %v2744
    %v2886 = vpack.c.b16 %v2751, %v2748
    %v2887 = vpack.c.b16 %v2752, %v2749
    %v2888 = vpack.c.b16 %v2753, %v2750
    %v2889 = vpack.c.b16 %v2757, %v2754
    %v2890 = vpack.c.b16 %v2758, %v2755
    %v2891 = vpack.c.b16 %v2759, %v2756
    %v2892 = vpack.c.b16 %v2763, %v2760
    %v2893 = vpack.c.b16 %v2764, %v2761
    %v2894 = vpack.c.b16 %v2765, %v2762
    %v2895 = vpack.c.b16 %v2769, %v2766
    %v2896 = vpack.c.b16 %v2770, %v2767
    %v2897 = vpack.c.b16 %v2771, %v2768
    %v2898 = vpack.c.b16 %v2775, %v2772
    %v2899 = vpack.c.b16 %v2776, %v2773
    %v2900 = vpack.c.b16 %v2777, %v2774
    %v2901 = vpack.c.b16 %v2781, %v2778
    %v2902 = vpack.c.b16 %v2782, %v2779
    %v2903 = vpack.c.b16 %v2783, %v2780
    %v2904 = vpack.c.b16 %v2787, %v2784
    %v2905 = vpack.c.b16 %v2788, %v2785
    %v2906 = vpack.c.b16 %v2789, %v2786
    %v2907 = vpack.c.b16 %v2793, %v2790
    %v2908 = vpack.c.b16 %v2794, %v2791
    %v2909 = vpack.c.b16 %v2795, %v2792
    %v2910 = vpack.c.b16 %v2799, %v2796
    %v2911 = vpack.c.b16 %v2800, %v2797
    %v2912 = vpack.c.b16 %v2801, %v2798
    %v2913 = vpack.c.b16 %v2805, %v2802
    %v2914 = vpack.c.b16 %v2806, %v2803
    %v2915 = vpack.c.b16 %v2807, %v2804
    %v2916 = vpack.c.b16 %v2811, %v2808
    %v2917 = vpack.c.b16 %v2812, %v2809
    %v2918 = vpack.c.b16 %v2813, %v2810
    %v2919 = vpack.c.b16 %v2817, %v2814
    %v2920 = vpack.c.b16 %v2818, %v2815
    %v2921 = vpack.c.b16 %v2819, %v2816
    %v2922 = vpack.c.b16 %v2823, %v2820
    %v2923 = vpack.c.b16 %v2824, %v2821
    %v2924 = vpack.c.b16 %v2825, %v2822
    %v2925 = vpack.c.b16 %v2829, %v2826
    %v2926 = vpack.c.b16 %v2830, %v2827
    %v2927 = vpack.c.b16 %v2831, %v2828
    %3024 = vmatprep.subr.bf16.mxu0 %v2854
    %3025 = vmatpush1.bf16.msra.mxu0 %v2853
    %3026 = vmatprep.subr.bf16.mxu0 %v2851
    %3027 = vmatpush1.bf16.msra.mxu0 %v2850
    %3028 = vmatprep.subr.bf16.mxu0 %v2848
    %3029 = vmatpush1.bf16.msra.mxu0 %v2847
    %3030 = vmatprep.subr.bf16.mxu0 %v2845
    %3031 = vmatpush1.bf16.msra.mxu0 %v2844
    %3032 = vmatprep.subr.bf16.mxu0 %v2842
    %3033 = vmatpush1.bf16.msra.mxu0 %v2841
    %3034 = vmatprep.subr.bf16.mxu0 %v2839
    %3035 = vmatpush1.bf16.msra.mxu0 %v2838
    %3036 = vmatprep.subr.bf16.mxu0 %v2836
    %3037 = vmatpush1.bf16.msra.mxu0 %v2835
    %3038 = vmatprep.subr.bf16.mxu0 %v2833
    %3039 = vmatpush1.bf16.msra.mxu0 %v2832
    %3040 = vmatprep.subr.bf16.mxu0 %v2878
    %3041 = vmatpush2.bf16.msra.mxu0 %v2877
    %3042 = vmatprep.subr.bf16.mxu0 %v2875
    %3043 = vmatpush2.bf16.msra.mxu0 %v2874
    %3044 = vmatprep.subr.bf16.mxu0 %v2872
    %3045 = vmatpush2.bf16.msra.mxu0 %v2871
    %3046 = vmatprep.subr.bf16.mxu0 %v2869
    %3047 = vmatpush2.bf16.msra.mxu0 %v2868
    %3048 = vmatprep.subr.bf16.mxu0 %v2866
    %3049 = vmatpush2.bf16.msra.mxu0 %v2865
    %3050 = vmatprep.subr.bf16.mxu0 %v2863
    %3051 = vmatpush2.bf16.msra.mxu0 %v2862
    %3052 = vmatprep.subr.bf16.mxu0 %v2860
    %3053 = vmatpush2.bf16.msra.mxu0 %v2859
    %3054 = vmatprep.subr.bf16.mxu0 %v2857
    %3055 = vmatpush2.bf16.msra.mxu0 %v2856
    %3056 = vmatprep.mubr.bf16.mxu0 %v2364
    %3057 = vmatmul.mubr.bf16.gmra.mxu0 %v2363
    %v3058 = vpop.f32.mrf.mxu0
    %v3059 = vadd.f32 %v2500, %v3058
    %v3060 = vpop.f32.mrf.mxu0
    %v3061 = vadd.f32 %v2504, %v3060
    %v3062 = vpop.f32.mrf.mxu0
    %v3063 = vpop.f32.mrf.mxu0
    %3064 = vdwg.mxu0
    %3065 = vmatprep.subr.bf16.mxu0 %v2902
    %3066 = vmatpush1.bf16.msra.mxu0 %v2901
    %3067 = vmatprep.subr.bf16.mxu0 %v2899
    %3068 = vmatpush1.bf16.msra.mxu0 %v2898
    %3069 = vmatprep.subr.bf16.mxu0 %v2896
    %3070 = vmatpush1.bf16.msra.mxu0 %v2895
    %3071 = vmatprep.subr.bf16.mxu0 %v2893
    %3072 = vmatpush1.bf16.msra.mxu0 %v2892
    %3073 = vmatprep.subr.bf16.mxu0 %v2890
    %3074 = vmatpush1.bf16.msra.mxu0 %v2889
    %3075 = vmatprep.subr.bf16.mxu0 %v2887
    %3076 = vmatpush1.bf16.msra.mxu0 %v2886
    %3077 = vmatprep.subr.bf16.mxu0 %v2884
    %3078 = vmatpush1.bf16.msra.mxu0 %v2883
    %3079 = vmatprep.subr.bf16.mxu0 %v2881
    %3080 = vmatpush1.bf16.msra.mxu0 %v2880
    %3081 = vmatprep.subr.bf16.mxu0 %v2926
    %3082 = vmatpush2.bf16.msra.mxu0 %v2925
    %3083 = vmatprep.subr.bf16.mxu0 %v2923
    %3084 = vmatpush2.bf16.msra.mxu0 %v2922
    %3085 = vmatprep.subr.bf16.mxu0 %v2920
    %3086 = vmatpush2.bf16.msra.mxu0 %v2919
    %3087 = vmatprep.subr.bf16.mxu0 %v2917
    %3088 = vmatpush2.bf16.msra.mxu0 %v2916
    %3089 = vmatprep.subr.bf16.mxu0 %v2914
    %3090 = vmatpush2.bf16.msra.mxu0 %v2913
    %3091 = vmatprep.subr.bf16.mxu0 %v2911
    %3092 = vmatpush2.bf16.msra.mxu0 %v2910
    %3093 = vmatprep.subr.bf16.mxu0 %v2908
    %3094 = vmatpush2.bf16.msra.mxu0 %v2907
    %3095 = vmatprep.subr.bf16.mxu0 %v2905
    %3096 = vmatpush2.bf16.msra.mxu0 %v2904
    %3097 = vmatprep.mubr.bf16.mxu0 %v2366
    %3098 = vmatmul.mubr.bf16.gmra.mxu0 %v2365
    %v3099 = vpop.f32.mrf.mxu0
    %v3100 = vadd.f32 %v3059, %v3099
    %v3101 = vpop.f32.mrf.mxu0
    %v3102 = vadd.f32 %v3061, %v3101
    %v3103 = vpop.f32.mrf.mxu0
    %v3104 = vpop.f32.mrf.mxu0
    %3105 = vdwg.mxu0
    %3106 = vmatprep.subr.bf16.mxu0 0
    %3107 = vmatpush1.bf16.msra.mxu0 %v2855
    %3108 = vmatprep.subr.bf16.mxu0 0
    %3109 = vmatpush1.bf16.msra.mxu0 %v2852
    %3110 = vmatprep.subr.bf16.mxu0 0
    %3111 = vmatpush1.bf16.msra.mxu0 %v2849
    %3112 = vmatprep.subr.bf16.mxu0 0
    %3113 = vmatpush1.bf16.msra.mxu0 %v2846
    %3114 = vmatprep.subr.bf16.mxu0 0
    %3115 = vmatpush1.bf16.msra.mxu0 %v2843
    %3116 = vmatprep.subr.bf16.mxu0 0
    %3117 = vmatpush1.bf16.msra.mxu0 %v2840
    %3118 = vmatprep.subr.bf16.mxu0 0
    %3119 = vmatpush1.bf16.msra.mxu0 %v2837
    %3120 = vmatprep.subr.bf16.mxu0 0
    %3121 = vmatpush1.bf16.msra.mxu0 %v2834
    %3122 = vmatprep.subr.bf16.mxu0 0
    %3123 = vmatpush2.bf16.msra.mxu0 %v2879
    %3124 = vmatprep.subr.bf16.mxu0 0
    %3125 = vmatpush2.bf16.msra.mxu0 %v2876
    %3126 = vmatprep.subr.bf16.mxu0 0
    %3127 = vmatpush2.bf16.msra.mxu0 %v2873
    %3128 = vmatprep.subr.bf16.mxu0 0
    %3129 = vmatpush2.bf16.msra.mxu0 %v2870
    %3130 = vmatprep.subr.bf16.mxu0 0
    %3131 = vmatpush2.bf16.msra.mxu0 %v2867
    %3132 = vmatprep.subr.bf16.mxu0 0
    %3133 = vmatpush2.bf16.msra.mxu0 %v2864
    %3134 = vmatprep.subr.bf16.mxu0 0
    %3135 = vmatpush2.bf16.msra.mxu0 %v2861
    %3136 = vmatprep.subr.bf16.mxu0 0
    %3137 = vmatpush2.bf16.msra.mxu0 %v2858
    %3138 = vmatprep.mubr.bf16.mxu0 %v2364
    %3139 = vmatmul.mubr.bf16.gmra.mxu0 %v2363
    %v3140 = vpop.f32.mrf.mxu0
    %v3141 = vadd.f32 %v2508, %v3140
    %v3142 = vpop.f32.mrf.mxu0
    %v3143 = vpop.f32.mrf.mxu0
    %v3144 = vpop.f32.mrf.mxu0
    %3145 = vdwg.mxu0
    %3146 = vmatprep.subr.bf16.mxu0 0
    %3147 = vmatpush1.bf16.msra.mxu0 %v2903
    %3148 = vmatprep.subr.bf16.mxu0 0
    %3149 = vmatpush1.bf16.msra.mxu0 %v2900
    %3150 = vmatprep.subr.bf16.mxu0 0
    %3151 = vmatpush1.bf16.msra.mxu0 %v2897
    %3152 = vmatprep.subr.bf16.mxu0 0
    %3153 = vmatpush1.bf16.msra.mxu0 %v2894
    %3154 = vmatprep.subr.bf16.mxu0 0
    %3155 = vmatpush1.bf16.msra.mxu0 %v2891
    %3156 = vmatprep.subr.bf16.mxu0 0
    %3157 = vmatpush1.bf16.msra.mxu0 %v2888
    %3158 = vmatprep.subr.bf16.mxu0 0
    %3159 = vmatpush1.bf16.msra.mxu0 %v2885
    %3160 = vmatprep.subr.bf16.mxu0 0
    %3161 = vmatpush1.bf16.msra.mxu0 %v2882
    %3162 = vmatprep.subr.bf16.mxu0 0
    %3163 = vmatpush2.bf16.msra.mxu0 %v2927
    %3164 = vmatprep.subr.bf16.mxu0 0
    %3165 = vmatpush2.bf16.msra.mxu0 %v2924
    %3166 = vmatprep.subr.bf16.mxu0 0
    %3167 = vmatpush2.bf16.msra.mxu0 %v2921
    %3168 = vmatprep.subr.bf16.mxu0 0
    %3169 = vmatpush2.bf16.msra.mxu0 %v2918
    %3170 = vmatprep.subr.bf16.mxu0 0
    %3171 = vmatpush2.bf16.msra.mxu0 %v2915
    %3172 = vmatprep.subr.bf16.mxu0 0
    %3173 = vmatpush2.bf16.msra.mxu0 %v2912
    %3174 = vmatprep.subr.bf16.mxu0 0
    %3175 = vmatpush2.bf16.msra.mxu0 %v2909
    %3176 = vmatprep.subr.bf16.mxu0 0
    %3177 = vmatpush2.bf16.msra.mxu0 %v2906
    %3178 = vmatprep.mubr.bf16.mxu0 %v2366
    %3179 = vmatmul.mubr.bf16.gmra.mxu0 %v2365
    %v3180 = vpop.f32.mrf.mxu0
    %v3181 = vadd.f32 %v3141, %v3180
    %v3182 = vpop.f32.mrf.mxu0
    %v3183 = vpop.f32.mrf.mxu0
    %v3184 = vpop.f32.mrf.mxu0
    %3185 = vdwg.mxu0
    %v3186 = vmax.f32 %v3100, 0.0
    %v3187 = vmax.f32 %v3102, 0.0
    %v3188 = vmax.f32 %v3181, 0.0
    %v3189 = vpack.c.bf16 %v3186, %v3186
    %v3190 = vpack.c.bf16 %v3187, %v3187
    %v3191 = vpack.c.bf16 %v3188, %v3188
    %v3192 = vld [vmem:[#allocation11] sm:$0xff]
    %v3193 = vld [vmem:[#allocation11 + $0x8] sm:$0xff]
    %v3194 = vld [vmem:[#allocation11 + $0x10] sm:$0xff]
    %v3195 = vld [vmem:[#allocation11 + $0x18] sm:$0xff]
    %v3196 = vld [vmem:[#allocation11 + $0x20] sm:$0xff]
    %v3197 = vld [vmem:[#allocation11 + $0x28] sm:$0xff]
    %v3198 = vld [vmem:[#allocation11 + $0x30] sm:$0xff]
    %v3199 = vld [vmem:[#allocation11 + $0x38] sm:$0xff]
    %v3200 = vld [vmem:[#allocation11 + $0x40] sm:$0xff]
    %v3201 = vld [vmem:[#allocation11 + $0x48] sm:$0xff]
    %v3202 = vld [vmem:[#allocation11 + $0x50] sm:$0xff]
    %v3203 = vld [vmem:[#allocation11 + $0x58] sm:$0xff]
    %v3204 = vld [vmem:[#allocation11 + $0x60] sm:$0xff]
    %v3205 = vld [vmem:[#allocation11 + $0x68] sm:$0xff]
    %v3206 = vld [vmem:[#allocation11 + $0x70] sm:$0xff]
    %v3207 = vld [vmem:[#allocation11 + $0x78] sm:$0xff]
    %v3208 = vld [vmem:[#allocation11 + $0x80] sm:$0xff]
    %v3209 = vld [vmem:[#allocation11 + $0x88] sm:$0xff]
    %v3210 = vld [vmem:[#allocation11 + $0x90] sm:$0xff]
    %v3211 = vld [vmem:[#allocation11 + $0x98] sm:$0xff]
    %v3212 = vld [vmem:[#allocation11 + $0xa0] sm:$0xff]
    %v3213 = vld [vmem:[#allocation11 + $0xa8] sm:$0xff]
    %v3214 = vld [vmem:[#allocation11 + $0xb0] sm:$0xff]
    %v3215 = vld [vmem:[#allocation11 + $0xb8] sm:$0xff]
    %v3216 = vld [vmem:[#allocation11 + $0xc0] sm:$0xff]
    %v3217 = vld [vmem:[#allocation11 + $0xc8] sm:$0xff]
    %v3218 = vld [vmem:[#allocation11 + $0xd0] sm:$0xff]
    %v3219 = vld [vmem:[#allocation11 + $0xd8] sm:$0xff]
    %v3220 = vld [vmem:[#allocation11 + $0xe0] sm:$0xff]
    %v3221 = vld [vmem:[#allocation11 + $0xe8] sm:$0xff]
    %v3222 = vld [vmem:[#allocation11 + $0xf0] sm:$0xff]
    %v3223 = vld [vmem:[#allocation11 + $0xf8] sm:$0xff]
    %v3224 = vld [vmem:[#allocation11 + $0x100] sm:$0xff]
    %v3225 = vld [vmem:[#allocation11 + $0x108] sm:$0xff]
    %v3226 = vld [vmem:[#allocation11 + $0x110] sm:$0xff]
    %v3227 = vld [vmem:[#allocation11 + $0x118] sm:$0xff]
    %v3228 = vld [vmem:[#allocation11 + $0x120] sm:$0xff]
    %v3229 = vld [vmem:[#allocation11 + $0x128] sm:$0xff]
    %v3230 = vld [vmem:[#allocation11 + $0x130] sm:$0xff]
    %v3231 = vld [vmem:[#allocation11 + $0x138] sm:$0xff]
    %v3232 = vld [vmem:[#allocation11 + $0x140] sm:$0xff]
    %v3233 = vld [vmem:[#allocation11 + $0x148] sm:$0xff]
    %v3234 = vld [vmem:[#allocation11 + $0x150] sm:$0xff]
    %v3235 = vld [vmem:[#allocation11 + $0x158] sm:$0xff]
    %v3236 = vld [vmem:[#allocation11 + $0x160] sm:$0xff]
    %v3237 = vld [vmem:[#allocation11 + $0x168] sm:$0xff]
    %v3238 = vld [vmem:[#allocation11 + $0x170] sm:$0xff]
    %v3239 = vld [vmem:[#allocation11 + $0x178] sm:$0xff]
    %v3240 = vld [vmem:[#allocation13] sm:$0x3]
    %v3242 = vlaneseq
    %v3243 = vshrl.u32 %v3242, 7
    %v3244 = vsub.s32 0, %v3243
    %v3245 = vrot.slane %v3240, %v3244
    %v3246 = vlaneseq
    %v3247 = vshrl.u32 %v3246, 7
    %v3248 = vsub.s32 1, %v3247
    %v3249 = vrot.slane %v3240, %v3248
    %v3300 = vunpack.c.l.b16 %v3192
    %v3301 = vunpack.c.h.b16 %v3192
    %v3302 = vunpack.c.l.b16 %v3193
    %v3303 = vunpack.c.h.b16 %v3193
    %v3304 = vunpack.c.l.b16 %v3194
    %v3305 = vunpack.c.h.b16 %v3194
    %v3306 = vunpack.c.l.b16 %v3195
    %v3307 = vunpack.c.h.b16 %v3195
    %v3308 = vunpack.c.l.b16 %v3196
    %v3309 = vunpack.c.h.b16 %v3196
    %v3310 = vunpack.c.l.b16 %v3197
    %v3311 = vunpack.c.h.b16 %v3197
    %v3312 = vunpack.c.l.b16 %v3198
    %v3313 = vunpack.c.h.b16 %v3198
    %v3314 = vunpack.c.l.b16 %v3199
    %v3315 = vunpack.c.h.b16 %v3199
    %v3316 = vunpack.c.l.b16 %v3200
    %v3317 = vunpack.c.h.b16 %v3200
    %v3318 = vunpack.c.l.b16 %v3201
    %v3319 = vunpack.c.h.b16 %v3201
    %v3320 = vunpack.c.l.b16 %v3202
    %v3321 = vunpack.c.h.b16 %v3202
    %v3322 = vunpack.c.l.b16 %v3203
    %v3323 = vunpack.c.h.b16 %v3203
    %v3324 = vunpack.c.l.b16 %v3204
    %v3325 = vunpack.c.h.b16 %v3204
    %v3326 = vunpack.c.l.b16 %v3205
    %v3327 = vunpack.c.h.b16 %v3205
    %v3328 = vunpack.c.l.b16 %v3206
    %v3329 = vunpack.c.h.b16 %v3206
    %v3330 = vunpack.c.l.b16 %v3207
    %v3331 = vunpack.c.h.b16 %v3207
    %v3332 = vunpack.c.l.b16 %v3208
    %v3333 = vunpack.c.h.b16 %v3208
    %v3334 = vunpack.c.l.b16 %v3209
    %v3335 = vunpack.c.h.b16 %v3209
    %v3336 = vunpack.c.l.b16 %v3210
    %v3337 = vunpack.c.h.b16 %v3210
    %v3338 = vunpack.c.l.b16 %v3211
    %v3339 = vunpack.c.h.b16 %v3211
    %v3340 = vunpack.c.l.b16 %v3212
    %v3341 = vunpack.c.h.b16 %v3212
    %v3342 = vunpack.c.l.b16 %v3213
    %v3343 = vunpack.c.h.b16 %v3213
    %v3344 = vunpack.c.l.b16 %v3214
    %v3345 = vunpack.c.h.b16 %v3214
    %v3346 = vunpack.c.l.b16 %v3215
    %v3347 = vunpack.c.h.b16 %v3215
    %v3348 = vunpack.c.l.b16 %v3216
    %v3349 = vunpack.c.h.b16 %v3216
    %v3350 = vunpack.c.l.b16 %v3217
    %v3351 = vunpack.c.h.b16 %v3217
    %v3352 = vunpack.c.l.b16 %v3218
    %v3353 = vunpack.c.h.b16 %v3218
    %v3354 = vunpack.c.l.b16 %v3219
    %v3355 = vunpack.c.h.b16 %v3219
    %v3356 = vunpack.c.l.b16 %v3220
    %v3357 = vunpack.c.h.b16 %v3220
    %v3358 = vunpack.c.l.b16 %v3221
    %v3359 = vunpack.c.h.b16 %v3221
    %v3360 = vunpack.c.l.b16 %v3222
    %v3361 = vunpack.c.h.b16 %v3222
    %v3362 = vunpack.c.l.b16 %v3223
    %v3363 = vunpack.c.h.b16 %v3223
    %v3364 = vunpack.c.l.b16 %v3224
    %v3365 = vunpack.c.h.b16 %v3224
    %v3366 = vunpack.c.l.b16 %v3225
    %v3367 = vunpack.c.h.b16 %v3225
    %v3368 = vunpack.c.l.b16 %v3226
    %v3369 = vunpack.c.h.b16 %v3226
    %v3370 = vunpack.c.l.b16 %v3227
    %v3371 = vunpack.c.h.b16 %v3227
    %v3372 = vunpack.c.l.b16 %v3228
    %v3373 = vunpack.c.h.b16 %v3228
    %v3374 = vunpack.c.l.b16 %v3229
    %v3375 = vunpack.c.h.b16 %v3229
    %v3376 = vunpack.c.l.b16 %v3230
    %v3377 = vunpack.c.h.b16 %v3230
    %v3378 = vunpack.c.l.b16 %v3231
    %v3379 = vunpack.c.h.b16 %v3231
    %v3380 = vunpack.c.l.b16 %v3232
    %v3381 = vunpack.c.h.b16 %v3232
    %v3382 = vunpack.c.l.b16 %v3233
    %v3383 = vunpack.c.h.b16 %v3233
    %v3384 = vunpack.c.l.b16 %v3234
    %v3385 = vunpack.c.h.b16 %v3234
    %v3386 = vunpack.c.l.b16 %v3235
    %v3387 = vunpack.c.h.b16 %v3235
    %v3388 = vunpack.c.l.b16 %v3236
    %v3389 = vunpack.c.h.b16 %v3236
    %v3390 = vunpack.c.l.b16 %v3237
    %v3391 = vunpack.c.h.b16 %v3237
    %v3392 = vunpack.c.l.b16 %v3238
    %v3393 = vunpack.c.h.b16 %v3238
    %v3394 = vunpack.c.l.b16 %v3239
    %v3395 = vunpack.c.h.b16 %v3239
    %v3396 = vpack.c.b16 %v3302, %v3300
    %v3397 = vpack.c.b16 %v3303, %v3301
    %v3398 = vpack.c.b16 %v3306, %v3304
    %v3399 = vpack.c.b16 %v3307, %v3305
    %v3400 = vpack.c.b16 %v3310, %v3308
    %v3401 = vpack.c.b16 %v3311, %v3309
    %v3402 = vpack.c.b16 %v3314, %v3312
    %v3403 = vpack.c.b16 %v3315, %v3313
    %v3404 = vpack.c.b16 %v3318, %v3316
    %v3405 = vpack.c.b16 %v3319, %v3317
    %v3406 = vpack.c.b16 %v3322, %v3320
    %v3407 = vpack.c.b16 %v3323, %v3321
    %v3408 = vpack.c.b16 %v3326, %v3324
    %v3409 = vpack.c.b16 %v3327, %v3325
    %v3410 = vpack.c.b16 %v3330, %v3328
    %v3411 = vpack.c.b16 %v3331, %v3329
    %v3412 = vpack.c.b16 %v3334, %v3332
    %v3413 = vpack.c.b16 %v3335, %v3333
    %v3414 = vpack.c.b16 %v3338, %v3336
    %v3415 = vpack.c.b16 %v3339, %v3337
    %v3416 = vpack.c.b16 %v3342, %v3340
    %v3417 = vpack.c.b16 %v3343, %v3341
    %v3418 = vpack.c.b16 %v3346, %v3344
    %v3419 = vpack.c.b16 %v3347, %v3345
    %v3420 = vpack.c.b16 %v3350, %v3348
    %v3421 = vpack.c.b16 %v3351, %v3349
    %v3422 = vpack.c.b16 %v3354, %v3352
    %v3423 = vpack.c.b16 %v3355, %v3353
    %v3424 = vpack.c.b16 %v3358, %v3356
    %v3425 = vpack.c.b16 %v3359, %v3357
    %v3426 = vpack.c.b16 %v3362, %v3360
    %v3427 = vpack.c.b16 %v3363, %v3361
    %v3428 = vpack.c.b16 %v3366, %v3364
    %v3429 = vpack.c.b16 %v3367, %v3365
    %v3430 = vpack.c.b16 %v3370, %v3368
    %v3431 = vpack.c.b16 %v3371, %v3369
    %v3432 = vpack.c.b16 %v3374, %v3372
    %v3433 = vpack.c.b16 %v3375, %v3373
    %v3434 = vpack.c.b16 %v3378, %v3376
    %v3435 = vpack.c.b16 %v3379, %v3377
    %v3436 = vpack.c.b16 %v3382, %v3380
    %v3437 = vpack.c.b16 %v3383, %v3381
    %v3438 = vpack.c.b16 %v3386, %v3384
    %v3439 = vpack.c.b16 %v3387, %v3385
    %v3440 = vpack.c.b16 %v3390, %v3388
    %v3441 = vpack.c.b16 %v3391, %v3389
    %v3442 = vpack.c.b16 %v3394, %v3392
    %v3443 = vpack.c.b16 %v3395, %v3393
    %3492 = vmatprep.subr.bf16.mxu0 %v3411
    %3493 = vmatpush1.bf16.msra.mxu0 %v3410
    %3494 = vmatprep.subr.bf16.mxu0 %v3409
    %3495 = vmatpush1.bf16.msra.mxu0 %v3408
    %3496 = vmatprep.subr.bf16.mxu0 %v3407
    %3497 = vmatpush1.bf16.msra.mxu0 %v3406
    %3498 = vmatprep.subr.bf16.mxu0 %v3405
    %3499 = vmatpush1.bf16.msra.mxu0 %v3404
    %3500 = vmatprep.subr.bf16.mxu0 %v3403
    %3501 = vmatpush1.bf16.msra.mxu0 %v3402
    %3502 = vmatprep.subr.bf16.mxu0 %v3401
    %3503 = vmatpush1.bf16.msra.mxu0 %v3400
    %3504 = vmatprep.subr.bf16.mxu0 %v3399
    %3505 = vmatpush1.bf16.msra.mxu0 %v3398
    %3506 = vmatprep.subr.bf16.mxu0 %v3397
    %3507 = vmatpush1.bf16.msra.mxu0 %v3396
    %3508 = vmatprep.subr.bf16.mxu0 %v3427
    %3509 = vmatpush2.bf16.msra.mxu0 %v3426
    %3510 = vmatprep.subr.bf16.mxu0 %v3425
    %3511 = vmatpush2.bf16.msra.mxu0 %v3424
    %3512 = vmatprep.subr.bf16.mxu0 %v3423
    %3513 = vmatpush2.bf16.msra.mxu0 %v3422
    %3514 = vmatprep.subr.bf16.mxu0 %v3421
    %3515 = vmatpush2.bf16.msra.mxu0 %v3420
    %3516 = vmatprep.subr.bf16.mxu0 %v3419
    %3517 = vmatpush2.bf16.msra.mxu0 %v3418
    %3518 = vmatprep.subr.bf16.mxu0 %v3417
    %3519 = vmatpush2.bf16.msra.mxu0 %v3416
    %3520 = vmatprep.subr.bf16.mxu0 %v3415
    %3521 = vmatpush2.bf16.msra.mxu0 %v3414
    %3522 = vmatprep.subr.bf16.mxu0 %v3413
    %3523 = vmatpush2.bf16.msra.mxu0 %v3412
    %3524 = vmatprep.mubr.bf16.mxu0 %v3190
    %3525 = vmatmul.mubr.bf16.gmra.mxu0 %v3189
    %v3526 = vpop.f32.mrf.mxu0
    %v3527 = vadd.f32 %v3245, %v3526
    %v3528 = vpop.f32.mrf.mxu0
    %v3529 = vadd.f32 %v3249, %v3528
    %v3530 = vpop.f32.mrf.mxu0
    %v3531 = vpop.f32.mrf.mxu0
    %3532 = vdwg.mxu0
    %3533 = vmatprep.subr.bf16.mxu0 %v3443
    %3534 = vmatpush1.bf16.msra.mxu0 %v3442
    %3535 = vmatprep.subr.bf16.mxu0 %v3441
    %3536 = vmatpush1.bf16.msra.mxu0 %v3440
    %3537 = vmatprep.subr.bf16.mxu0 %v3439
    %3538 = vmatpush1.bf16.msra.mxu0 %v3438
    %3539 = vmatprep.subr.bf16.mxu0 %v3437
    %3540 = vmatpush1.bf16.msra.mxu0 %v3436
    %3541 = vmatprep.subr.bf16.mxu0 %v3435
    %3542 = vmatpush1.bf16.msra.mxu0 %v3434
    %3543 = vmatprep.subr.bf16.mxu0 %v3433
    %3544 = vmatpush1.bf16.msra.mxu0 %v3432
    %3545 = vmatprep.subr.bf16.mxu0 %v3431
    %3546 = vmatpush1.bf16.msra.mxu0 %v3430
    %3547 = vmatprep.subr.bf16.mxu0 %v3429
    %3548 = vmatpush1.bf16.msra.mxu0 %v3428
    %3549 = vmatprep.subr.bf16.mxu0 0
    %3550 = vmatpush2.bf16.msra.mxu0 0
    %3551 = vmatprep.subr.bf16.mxu0 0
    %3552 = vmatpush2.bf16.msra.mxu0 0
    %3553 = vmatprep.subr.bf16.mxu0 0
    %3554 = vmatpush2.bf16.msra.mxu0 0
    %3555 = vmatprep.subr.bf16.mxu0 0
    %3556 = vmatpush2.bf16.msra.mxu0 0
    %3557 = vmatprep.subr.bf16.mxu0 0
    %3558 = vmatpush2.bf16.msra.mxu0 0
    %3559 = vmatprep.subr.bf16.mxu0 0
    %3560 = vmatpush2.bf16.msra.mxu0 0
    %3561 = vmatprep.subr.bf16.mxu0 0
    %3562 = vmatpush2.bf16.msra.mxu0 0
    %3563 = vmatprep.subr.bf16.mxu0 0
    %3564 = vmatpush2.bf16.msra.mxu0 0
    %3565 = vmatprep.mubr.bf16.mxu0 0
    %3566 = vmatmul.mubr.bf16.gmra.mxu0 %v3191
    %v3567 = vpop.f32.mrf.mxu0
    %v3568 = vadd.f32 %v3527, %v3567
    %v3569 = vpop.f32.mrf.mxu0
    %v3570 = vadd.f32 %v3529, %v3569
    %v3571 = vpop.f32.mrf.mxu0
    %v3572 = vpop.f32.mrf.mxu0
    %3573 = vdwg.mxu0
    %v3574 = vmax.f32 %v3568, 0.0
    %v3575 = vmax.f32 %v3570, 0.0
    %v3576 = vpack.c.bf16 %v3574, %v3574
    %v3577 = vpack.c.bf16 %v3575, %v3575
    %v3578 = vld [vmem:[#allocation14] sm:$0xff]
    %v3579 = vld [vmem:[#allocation14 + $0x8] sm:$0xff]
    %v3580 = vld [vmem:[#allocation14 + $0x10] sm:$0xff]
    %v3581 = vld [vmem:[#allocation14 + $0x18] sm:$0xff]
    %v3582 = vld [vmem:[#allocation14 + $0x20] sm:$0xff]
    %v3583 = vld [vmem:[#allocation14 + $0x28] sm:$0xff]
    %v3584 = vld [vmem:[#allocation14 + $0x30] sm:$0xff]
    %v3585 = vld [vmem:[#allocation14 + $0x38] sm:$0xff]
    %v3586 = vld [vmem:[#allocation14 + $0x40] sm:$0xff]
    %v3587 = vld [vmem:[#allocation14 + $0x48] sm:$0xff]
    %v3588 = vld [vmem:[#allocation14 + $0x50] sm:$0xff]
    %v3589 = vld [vmem:[#allocation14 + $0x58] sm:$0xff]
    %v3590 = vld [vmem:[#allocation14 + $0x60] sm:$0xff]
    %v3591 = vld [vmem:[#allocation14 + $0x68] sm:$0xff]
    %v3592 = vld [vmem:[#allocation14 + $0x70] sm:$0xff]
    %v3593 = vld [vmem:[#allocation14 + $0x78] sm:$0xff]
    %v3594 = vld [vmem:[#allocation14 + $0x80] sm:$0xff]
    %v3595 = vld [vmem:[#allocation14 + $0x88] sm:$0xff]
    %v3596 = vld [vmem:[#allocation14 + $0x90] sm:$0xff]
    %v3597 = vld [vmem:[#allocation14 + $0x98] sm:$0xff]
    %v3598 = vld [vmem:[#allocation14 + $0xa0] sm:$0xff]
    %v3599 = vld [vmem:[#allocation14 + $0xa8] sm:$0xff]
    %v3600 = vld [vmem:[#allocation14 + $0xb0] sm:$0xff]
    %v3601 = vld [vmem:[#allocation14 + $0xb8] sm:$0xff]
    %v3602 = vld [vmem:[#allocation14 + $0xc0] sm:$0xff]
    %v3603 = vld [vmem:[#allocation14 + $0xc8] sm:$0xff]
    %v3604 = vld [vmem:[#allocation14 + $0xd0] sm:$0xff]
    %v3605 = vld [vmem:[#allocation14 + $0xd8] sm:$0xff]
    %v3606 = vld [vmem:[#allocation14 + $0xe0] sm:$0xff]
    %v3607 = vld [vmem:[#allocation14 + $0xe8] sm:$0xff]
    %v3608 = vld [vmem:[#allocation14 + $0xf0] sm:$0xff]
    %v3609 = vld [vmem:[#allocation14 + $0xf8] sm:$0xff]
    %v3610 = vld [vmem:[#allocation16] sm:$0x3]
    %v3612 = vlaneseq
    %v3613 = vshrl.u32 %v3612, 7
    %v3614 = vsub.s32 0, %v3613
    %v3615 = vrot.slane %v3610, %v3614
    %v3616 = vlaneseq
    %v3617 = vshrl.u32 %v3616, 7
    %v3618 = vsub.s32 1, %v3617
    %v3619 = vrot.slane %v3610, %v3618
    %v3654 = vunpack.c.l.b16 %v3578
    %v3655 = vunpack.c.h.b16 %v3578
    %v3656 = vunpack.c.l.b16 %v3579
    %v3657 = vunpack.c.h.b16 %v3579
    %v3658 = vunpack.c.l.b16 %v3580
    %v3659 = vunpack.c.h.b16 %v3580
    %v3660 = vunpack.c.l.b16 %v3581
    %v3661 = vunpack.c.h.b16 %v3581
    %v3662 = vunpack.c.l.b16 %v3582
    %v3663 = vunpack.c.h.b16 %v3582
    %v3664 = vunpack.c.l.b16 %v3583
    %v3665 = vunpack.c.h.b16 %v3583
    %v3666 = vunpack.c.l.b16 %v3584
    %v3667 = vunpack.c.h.b16 %v3584
    %v3668 = vunpack.c.l.b16 %v3585
    %v3669 = vunpack.c.h.b16 %v3585
    %v3670 = vunpack.c.l.b16 %v3586
    %v3671 = vunpack.c.h.b16 %v3586
    %v3672 = vunpack.c.l.b16 %v3587
    %v3673 = vunpack.c.h.b16 %v3587
    %v3674 = vunpack.c.l.b16 %v3588
    %v3675 = vunpack.c.h.b16 %v3588
    %v3676 = vunpack.c.l.b16 %v3589
    %v3677 = vunpack.c.h.b16 %v3589
    %v3678 = vunpack.c.l.b16 %v3590
    %v3679 = vunpack.c.h.b16 %v3590
    %v3680 = vunpack.c.l.b16 %v3591
    %v3681 = vunpack.c.h.b16 %v3591
    %v3682 = vunpack.c.l.b16 %v3592
    %v3683 = vunpack.c.h.b16 %v3592
    %v3684 = vunpack.c.l.b16 %v3593
    %v3685 = vunpack.c.h.b16 %v3593
    %v3686 = vunpack.c.l.b16 %v3594
    %v3687 = vunpack.c.h.b16 %v3594
    %v3688 = vunpack.c.l.b16 %v3595
    %v3689 = vunpack.c.h.b16 %v3595
    %v3690 = vunpack.c.l.b16 %v3596
    %v3691 = vunpack.c.h.b16 %v3596
    %v3692 = vunpack.c.l.b16 %v3597
    %v3693 = vunpack.c.h.b16 %v3597
    %v3694 = vunpack.c.l.b16 %v3598
    %v3695 = vunpack.c.h.b16 %v3598
    %v3696 = vunpack.c.l.b16 %v3599
    %v3697 = vunpack.c.h.b16 %v3599
    %v3698 = vunpack.c.l.b16 %v3600
    %v3699 = vunpack.c.h.b16 %v3600
    %v3700 = vunpack.c.l.b16 %v3601
    %v3701 = vunpack.c.h.b16 %v3601
    %v3702 = vunpack.c.l.b16 %v3602
    %v3703 = vunpack.c.h.b16 %v3602
    %v3704 = vunpack.c.l.b16 %v3603
    %v3705 = vunpack.c.h.b16 %v3603
    %v3706 = vunpack.c.l.b16 %v3604
    %v3707 = vunpack.c.h.b16 %v3604
    %v3708 = vunpack.c.l.b16 %v3605
    %v3709 = vunpack.c.h.b16 %v3605
    %v3710 = vunpack.c.l.b16 %v3606
    %v3711 = vunpack.c.h.b16 %v3606
    %v3712 = vunpack.c.l.b16 %v3607
    %v3713 = vunpack.c.h.b16 %v3607
    %v3714 = vunpack.c.l.b16 %v3608
    %v3715 = vunpack.c.h.b16 %v3608
    %v3716 = vunpack.c.l.b16 %v3609
    %v3717 = vunpack.c.h.b16 %v3609
    %v3718 = vpack.c.b16 %v3656, %v3654
    %v3719 = vpack.c.b16 %v3657, %v3655
    %v3720 = vpack.c.b16 %v3660, %v3658
    %v3721 = vpack.c.b16 %v3661, %v3659
    %v3722 = vpack.c.b16 %v3664, %v3662
    %v3723 = vpack.c.b16 %v3665, %v3663
    %v3724 = vpack.c.b16 %v3668, %v3666
    %v3725 = vpack.c.b16 %v3669, %v3667
    %v3726 = vpack.c.b16 %v3672, %v3670
    %v3727 = vpack.c.b16 %v3673, %v3671
    %v3728 = vpack.c.b16 %v3676, %v3674
    %v3729 = vpack.c.b16 %v3677, %v3675
    %v3730 = vpack.c.b16 %v3680, %v3678
    %v3731 = vpack.c.b16 %v3681, %v3679
    %v3732 = vpack.c.b16 %v3684, %v3682
    %v3733 = vpack.c.b16 %v3685, %v3683
    %v3734 = vpack.c.b16 %v3688, %v3686
    %v3735 = vpack.c.b16 %v3689, %v3687
    %v3736 = vpack.c.b16 %v3692, %v3690
    %v3737 = vpack.c.b16 %v3693, %v3691
    %v3738 = vpack.c.b16 %v3696, %v3694
    %v3739 = vpack.c.b16 %v3697, %v3695
    %v3740 = vpack.c.b16 %v3700, %v3698
    %v3741 = vpack.c.b16 %v3701, %v3699
    %v3742 = vpack.c.b16 %v3704, %v3702
    %v3743 = vpack.c.b16 %v3705, %v3703
    %v3744 = vpack.c.b16 %v3708, %v3706
    %v3745 = vpack.c.b16 %v3709, %v3707
    %v3746 = vpack.c.b16 %v3712, %v3710
    %v3747 = vpack.c.b16 %v3713, %v3711
    %v3748 = vpack.c.b16 %v3716, %v3714
    %v3749 = vpack.c.b16 %v3717, %v3715
    %3782 = vmatprep.subr.bf16.mxu0 %v3733
    %3783 = vmatpush1.bf16.msra.mxu0 %v3732
    %3784 = vmatprep.subr.bf16.mxu0 %v3731
    %3785 = vmatpush1.bf16.msra.mxu0 %v3730
    %3786 = vmatprep.subr.bf16.mxu0 %v3729
    %3787 = vmatpush1.bf16.msra.mxu0 %v3728
    %3788 = vmatprep.subr.bf16.mxu0 %v3727
    %3789 = vmatpush1.bf16.msra.mxu0 %v3726
    %3790 = vmatprep.subr.bf16.mxu0 %v3725
    %3791 = vmatpush1.bf16.msra.mxu0 %v3724
    %3792 = vmatprep.subr.bf16.mxu0 %v3723
    %3793 = vmatpush1.bf16.msra.mxu0 %v3722
    %3794 = vmatprep.subr.bf16.mxu0 %v3721
    %3795 = vmatpush1.bf16.msra.mxu0 %v3720
    %3796 = vmatprep.subr.bf16.mxu0 %v3719
    %3797 = vmatpush1.bf16.msra.mxu0 %v3718
    %3798 = vmatprep.subr.bf16.mxu0 %v3749
    %3799 = vmatpush2.bf16.msra.mxu0 %v3748
    %3800 = vmatprep.subr.bf16.mxu0 %v3747
    %3801 = vmatpush2.bf16.msra.mxu0 %v3746
    %3802 = vmatprep.subr.bf16.mxu0 %v3745
    %3803 = vmatpush2.bf16.msra.mxu0 %v3744
    %3804 = vmatprep.subr.bf16.mxu0 %v3743
    %3805 = vmatpush2.bf16.msra.mxu0 %v3742
    %3806 = vmatprep.subr.bf16.mxu0 %v3741
    %3807 = vmatpush2.bf16.msra.mxu0 %v3740
    %3808 = vmatprep.subr.bf16.mxu0 %v3739
    %3809 = vmatpush2.bf16.msra.mxu0 %v3738
    %3810 = vmatprep.subr.bf16.mxu0 %v3737
    %3811 = vmatpush2.bf16.msra.mxu0 %v3736
    %3812 = vmatprep.subr.bf16.mxu0 %v3735
    %3813 = vmatpush2.bf16.msra.mxu0 %v3734
    %3814 = vmatprep.mubr.bf16.mxu0 %v3577
    %3815 = vmatmul.mubr.bf16.gmra.mxu0 %v3576
    %v3816 = vpop.f32.mrf.mxu0
    %v3817 = vadd.f32 %v3615, %v3816
    %v3818 = vpop.f32.mrf.mxu0
    %v3819 = vadd.f32 %v3619, %v3818
    %v3820 = vpop.f32.mrf.mxu0
    %v3821 = vpop.f32.mrf.mxu0
    %3822 = vdwg.mxu0
    %v3823 = vmax.f32 %v3817, 0.0
    %v3824 = vmax.f32 %v3819, 0.0
    %v3825 = vpack.c.bf16 %v3823, %v3823
    %v3826 = vpack.c.bf16 %v3824, %v3824
    %v3827 = vld [vmem:[%s9] sm:$0xf]
    %v3828 = vld [vmem:[%s9 + $0x4] sm:$0xf]
    %v3829 = vld [vmem:[%s9 + $0x8] sm:$0xf]
    %v3830 = vld [vmem:[%s9 + $0xc] sm:$0xf]
    %v3831 = vld [vmem:[%s9 + $0x10] sm:$0xf]
    %v3832 = vld [vmem:[%s9 + $0x14] sm:$0xf]
    %v3833 = vld [vmem:[%s9 + $0x18] sm:$0xf]
    %v3834 = vld [vmem:[%s9 + $0x1c] sm:$0xf]
    %v3835 = vld [vmem:[%s9 + $0x20] sm:$0xf]
    %v3836 = vld [vmem:[%s9 + $0x24] sm:$0xf]
    %v3837 = vld [vmem:[%s9 + $0x28] sm:$0xf]
    %v3838 = vld [vmem:[%s9 + $0x2c] sm:$0xf]
    %v3839 = vld [vmem:[%s9 + $0x30] sm:$0xf]
    %v3840 = vld [vmem:[%s9 + $0x34] sm:$0xf]
    %v3841 = vld [vmem:[%s9 + $0x38] sm:$0xf]
    %v3842 = vld [vmem:[%s9 + $0x3c] sm:$0xf]
    %v3843 = vld [vmem:[%s9 + $0x40] sm:$0xf]
    %v3844 = vld [vmem:[%s9 + $0x44] sm:$0xf]
    %v3845 = vld [vmem:[%s9 + $0x48] sm:$0xf]
    %v3846 = vld [vmem:[%s9 + $0x4c] sm:$0xf]
    %v3847 = vld [vmem:[%s9 + $0x50] sm:$0xf]
    %v3848 = vld [vmem:[%s9 + $0x54] sm:$0xf]
    %v3849 = vld [vmem:[%s9 + $0x58] sm:$0xf]
    %v3850 = vld [vmem:[%s9 + $0x5c] sm:$0xf]
    %v3851 = vld [vmem:[%s9 + $0x60] sm:$0xf]
    %v3852 = vld [vmem:[%s9 + $0x64] sm:$0xf]
    %v3853 = vld [vmem:[%s9 + $0x68] sm:$0xf]
    %v3854 = vld [vmem:[%s9 + $0x6c] sm:$0xf]
    %v3855 = vld [vmem:[%s9 + $0x70] sm:$0xf]
    %v3856 = vld [vmem:[%s9 + $0x74] sm:$0xf]
    %v3857 = vld [vmem:[%s9 + $0x78] sm:$0xf]
    %v3858 = vld [vmem:[%s9 + $0x7c] sm:$0xf]
    %v3859 = vld [vmem:[#allocation17] sm:$0x1]
    %v3861 = vlaneseq
    %v3862 = vshrl.u32 %v3861, 7
    %v3863 = vsub.s32 0, %v3862
    %v3864 = vrot.slane %v3859, %v3863
    %v3898 = vunpack.c.l.b16 %v3827
    %v3899 = vunpack.c.l.b16 %v3828
    %v3900 = vunpack.c.l.b16 %v3829
    %v3901 = vunpack.c.l.b16 %v3830
    %v3902 = vunpack.c.l.b16 %v3831
    %v3903 = vunpack.c.l.b16 %v3832
    %v3904 = vunpack.c.l.b16 %v3833
    %v3905 = vunpack.c.l.b16 %v3834
    %v3906 = vunpack.c.l.b16 %v3835
    %v3907 = vunpack.c.l.b16 %v3836
    %v3908 = vunpack.c.l.b16 %v3837
    %v3909 = vunpack.c.l.b16 %v3838
    %v3910 = vunpack.c.l.b16 %v3839
    %v3911 = vunpack.c.l.b16 %v3840
    %v3912 = vunpack.c.l.b16 %v3841
    %v3913 = vunpack.c.l.b16 %v3842
    %v3914 = vunpack.c.l.b16 %v3843
    %v3915 = vunpack.c.l.b16 %v3844
    %v3916 = vunpack.c.l.b16 %v3845
    %v3917 = vunpack.c.l.b16 %v3846
    %v3918 = vunpack.c.l.b16 %v3847
    %v3919 = vunpack.c.l.b16 %v3848
    %v3920 = vunpack.c.l.b16 %v3849
    %v3921 = vunpack.c.l.b16 %v3850
    %v3922 = vunpack.c.l.b16 %v3851
    %v3923 = vunpack.c.l.b16 %v3852
    %v3924 = vunpack.c.l.b16 %v3853
    %v3925 = vunpack.c.l.b16 %v3854
    %v3926 = vunpack.c.l.b16 %v3855
    %v3927 = vunpack.c.l.b16 %v3856
    %v3928 = vunpack.c.l.b16 %v3857
    %v3929 = vunpack.c.l.b16 %v3858
    %v3930 = vpack.c.b16 %v3899, %v3898
    %v3931 = vpack.c.b16 %v3901, %v3900
    %v3932 = vpack.c.b16 %v3903, %v3902
    %v3933 = vpack.c.b16 %v3905, %v3904
    %v3934 = vpack.c.b16 %v3907, %v3906
    %v3935 = vpack.c.b16 %v3909, %v3908
    %v3936 = vpack.c.b16 %v3911, %v3910
    %v3937 = vpack.c.b16 %v3913, %v3912
    %v3938 = vpack.c.b16 %v3915, %v3914
    %v3939 = vpack.c.b16 %v3917, %v3916
    %v3940 = vpack.c.b16 %v3919, %v3918
    %v3941 = vpack.c.b16 %v3921, %v3920
    %v3942 = vpack.c.b16 %v3923, %v3922
    %v3943 = vpack.c.b16 %v3925, %v3924
    %v3944 = vpack.c.b16 %v3927, %v3926
    %v3945 = vpack.c.b16 %v3929, %v3928
    %3962 = vmatprep.subr.bf16.mxu0 0
    %3963 = vmatpush1.bf16.msra.mxu0 %v3937
    %3964 = vmatprep.subr.bf16.mxu0 0
    %3965 = vmatpush1.bf16.msra.mxu0 %v3936
    %3966 = vmatprep.subr.bf16.mxu0 0
    %3967 = vmatpush1.bf16.msra.mxu0 %v3935
    %3968 = vmatprep.subr.bf16.mxu0 0
    %3969 = vmatpush1.bf16.msra.mxu0 %v3934
    %3970 = vmatprep.subr.bf16.mxu0 0
    %3971 = vmatpush1.bf16.msra.mxu0 %v3933
    %3972 = vmatprep.subr.bf16.mxu0 0
    %3973 = vmatpush1.bf16.msra.mxu0 %v3932
    %3974 = vmatprep.subr.bf16.mxu0 0
    %3975 = vmatpush1.bf16.msra.mxu0 %v3931
    %3976 = vmatprep.subr.bf16.mxu0 0
    %3977 = vmatpush1.bf16.msra.mxu0 %v3930
    %3978 = vmatprep.subr.bf16.mxu0 0
    %3979 = vmatpush2.bf16.msra.mxu0 %v3945
    %3980 = vmatprep.subr.bf16.mxu0 0
    %3981 = vmatpush2.bf16.msra.mxu0 %v3944
    %3982 = vmatprep.subr.bf16.mxu0 0
    %3983 = vmatpush2.bf16.msra.mxu0 %v3943
    %3984 = vmatprep.subr.bf16.mxu0 0
    %3985 = vmatpush2.bf16.msra.mxu0 %v3942
    %3986 = vmatprep.subr.bf16.mxu0 0
    %3987 = vmatpush2.bf16.msra.mxu0 %v3941
    %3988 = vmatprep.subr.bf16.mxu0 0
    %3989 = vmatpush2.bf16.msra.mxu0 %v3940
    %3990 = vmatprep.subr.bf16.mxu0 0
    %3991 = vmatpush2.bf16.msra.mxu0 %v3939
    %3992 = vmatprep.subr.bf16.mxu0 0
    %3993 = vmatpush2.bf16.msra.mxu0 %v3938
    %3994 = vmatprep.mubr.bf16.mxu0 %v3826
    %3995 = vmatmul.mubr.bf16.gmra.mxu0 %v3825
    %v3996 = vpop.f32.mrf.mxu0
    %v3997 = vadd.f32 %v3864, %v3996
    %v3998 = vpop.f32.mrf.mxu0
    %v3999 = vpop.f32.mrf.mxu0
    %v4000 = vpop.f32.mrf.mxu0
    %4001 = vdwg.mxu0
    %v4002 = vmax.f32 %v3997, 0.0
    %v4003 = vpack.c.bf16 %v4002, %v4002
    %v4004 = vld [vmem:[%s11] sm:$0xf]
    %v4005 = vld [vmem:[%s11 + $0x4] sm:$0xf]
    %v4006 = vld [vmem:[%s11 + $0x8] sm:$0xf]
    %v4007 = vld [vmem:[%s11 + $0xc] sm:$0xf]
    %v4008 = vld [vmem:[%s11 + $0x10] sm:$0xf]
    %v4009 = vld [vmem:[%s11 + $0x14] sm:$0xf]
    %v4010 = vld [vmem:[%s11 + $0x18] sm:$0xf]
    %v4011 = vld [vmem:[%s11 + $0x1c] sm:$0xf]
    %v4012 = vld [vmem:[#allocation19] sm:$0x1]
    %v4014 = vlaneseq
    %v4015 = vshrl.u32 %v4014, 7
    %v4016 = vsub.s32 0, %v4015
    %v4017 = vrot.slane %v4012, %v4016
    %v4027 = vunpack.c.l.b16 %v4004
    %v4028 = vunpack.c.l.b16 %v4005
    %v4029 = vunpack.c.l.b16 %v4006
    %v4030 = vunpack.c.l.b16 %v4007
    %v4031 = vunpack.c.l.b16 %v4008
    %v4032 = vunpack.c.l.b16 %v4009
    %v4033 = vunpack.c.l.b16 %v4010
    %v4034 = vunpack.c.l.b16 %v4011
    %v4035 = vpack.c.b16 %v4028, %v4027
    %v4036 = vpack.c.b16 %v4030, %v4029
    %v4037 = vpack.c.b16 %v4032, %v4031
    %v4038 = vpack.c.b16 %v4034, %v4033
    %vm4043 = vcmask 523264
    %v4045 = vsel %vm4043, %v4003, 0
    %4047 = vmatprep.subr.bf16.mxu0 0
    %4048 = vmatpush1.bf16.msra.mxu0 0
    %4049 = vmatprep.subr.bf16.mxu0 0
    %4050 = vmatpush1.bf16.msra.mxu0 0
    %4051 = vmatprep.subr.bf16.mxu0 0
    %4052 = vmatpush1.bf16.msra.mxu0 0
    %4053 = vmatprep.subr.bf16.mxu0 0
    %4054 = vmatpush1.bf16.msra.mxu0 0
    %4055 = vmatprep.subr.bf16.mxu0 0
    %4056 = vmatpush1.bf16.msra.mxu0 %v4038
    %4057 = vmatprep.subr.bf16.mxu0 0
    %4058 = vmatpush1.bf16.msra.mxu0 %v4037
    %4059 = vmatprep.subr.bf16.mxu0 0
    %4060 = vmatpush1.bf16.msra.mxu0 %v4036
    %4061 = vmatprep.subr.bf16.mxu0 0
    %4062 = vmatpush1.bf16.msra.mxu0 %v4035
    %4063 = vmatprep.subr.bf16.mxu0 0
    %4064 = vmatpush2.bf16.msra.mxu0 0
    %4065 = vmatprep.subr.bf16.mxu0 0
    %4066 = vmatpush2.bf16.msra.mxu0 0
    %4067 = vmatprep.subr.bf16.mxu0 0
    %4068 = vmatpush2.bf16.msra.mxu0 0
    %4069 = vmatprep.subr.bf16.mxu0 0
    %4070 = vmatpush2.bf16.msra.mxu0 0
    %4071 = vmatprep.subr.bf16.mxu0 0
    %4072 = vmatpush2.bf16.msra.mxu0 0
    %4073 = vmatprep.subr.bf16.mxu0 0
    %4074 = vmatpush2.bf16.msra.mxu0 0
    %4075 = vmatprep.subr.bf16.mxu0 0
    %4076 = vmatpush2.bf16.msra.mxu0 0
    %4077 = vmatprep.subr.bf16.mxu0 0
    %4078 = vmatpush2.bf16.msra.mxu0 0
    %4079 = vmatprep.mubr.bf16.mxu0 0
    %4080 = vmatmul.mubr.bf16.gmra.mxu0 %v4045
    %v4081 = vpop.f32.mrf.mxu0
    %v4082 = vadd.f32 %v4017, %v4081
    %v4083 = vpop.f32.mrf.mxu0
    %v4084 = vpop.f32.mrf.mxu0
    %v4085 = vpop.f32.mrf.mxu0
    %4086 = vdwg.mxu0
    %vm4087 = vcmask 64512
    %4088 = vst.msk [vmem:[#allocation20] sm:$0xff] %vm4087, %v4082
    // Predicated region
    $region98: #{tpu_custom_call.1} parent=1 // pred_check
      _
    $region99: #{tpu_custom_call.1} parent=1 // pred_check_branch
      %4090 = sbr.rel (0) target = $region101
    $region100: #{tpu_custom_call.1} parent=1 // pred_region
      %s4092 = ssub.s32 128, 128
      %4093 = vsyncadd [#allocation4], %s4092
      %s4095 = sshll.u32 [#allocation20], 4
      %s4096 = int_to_ptr.vmem [resolvable:$true] %s4095
      %4098 = dma.vmem_to_hbm [thread:$0]  %s4096, 128, %s13, [#allocation4]
    $region101: #{tpu_custom_call.1} parent=1 // pred_fallthru
      _
    // Predicated region
    $region102: #{tpu_custom_call.1} parent=1 // pred_check
      _
    $region103: #{tpu_custom_call.1} parent=1 // pred_check_branch
      %4100 = sbr.rel (0) target = $region105
    $region104: #{tpu_custom_call.1} parent=1 // pred_region
      %4101 = dma.done [#allocation4], 128
    $region105: #{tpu_custom_call.1} parent=1 // pred_fallthru
      _
    %4102 = vsyncpa [#allocation3], 1
    %4103 = vsyncpa [#allocation6], 1
    %4104 = vsyncpa [#allocation9], 1
    %4105 = vsyncpa [#allocation12], 1
    %4106 = vsyncpa [#allocation15], 1
    %4107 = vsyncpa [#allocation18], 1
    %4108 = vsyncpa [#allocation4], 1

</llo_original>
